<compile_context>
chip_gen: v7x
topology: tpu7x:2x2x1
jax: 0.10.0
libtpu: 0.0.40
codegen_flags: <defaults>
</compile_context>

<pallas_src>
import functools
import math

import jax
import jax.numpy as jnp
from jax.experimental import pallas as pl
from jax.experimental.pallas import tpu as pltpu


def _round_up(n, m):
    return ((n + m - 1) // m) * m


def _mha_kernel(*refs, n_heads, ts_valid, ts_padded, has_mask, approx_recip):
    """Fused 1x1-conv projections + multi-head attention + output projection.

    refs (inputs first, output last):
      [mask (1, Tt_tile, Ts_p) int8]           -- only when has_mask
      x    (1, Tt_tile, C_p)                   -- query-side tile (compute dtype)
      c    (1, Ts_p,    C_p)                   -- key/value side (compute dtype)
      wq/wk/wv (H, C_p, kc_p), bq/bk/bv (H, 1, kc_p)   -- head-major; scale folded in wq/bq
      wo   (H, kc_p, Co_p),    bo (1, Co_p)
      out  (1, Tt_tile, Co_p)  float32
    """
    if has_mask:
        (mask_ref, x_ref, c_ref,
         wq_ref, bq_ref, wk_ref, bk_ref, wv_ref, bv_ref,
         wo_ref, bo_ref, o_ref) = refs
    else:
        mask_ref = None
        (x_ref, c_ref,
         wq_ref, bq_ref, wk_ref, bk_ref, wv_ref, bv_ref,
         wo_ref, bo_ref, o_ref) = refs

    x = x_ref[0]                       # (tile_t, C_p)   compute dtype
    c = c_ref[0]                       # (Ts_p,  C_p)
    cdt = x.dtype

    # --- additive attention bias, hoisted out of the head loop -------------
    bias = None
    if has_mask:
        # matches torch masked_fill(mask == 0, -1e4): fully-masked rows give a
        # uniform distribution over real keys (documented reference behavior).
        bias = jnp.where(mask_ref[0] == 0, -10000.0, 0.0).astype(jnp.float32)
    if ts_padded > ts_valid:
        # padded key columns must get ~ -inf (not -1e4) so they never compete
        # with real (possibly masked) keys.
        col = jax.lax.broadcasted_iota(jnp.int32, (1, ts_padded), 1)
        pad_bias = jnp.where(col < ts_valid, 0.0, -1e30).astype(jnp.float32)
        bias = pad_bias if bias is None else bias + pad_bias

    tile_t = x_ref.shape[1]
    co_p = o_ref.shape[2]
    acc = jnp.zeros((tile_t, co_p), jnp.float32)

    for h in range(n_heads):
        # 1x1-conv projections for head h; leading-axis weight slices are free.
        q_h = jnp.dot(x, wq_ref[h], preferred_element_type=jnp.float32) + bq_ref[h]
        k_h = jnp.dot(c, wk_ref[h], preferred_element_type=jnp.float32) + bk_ref[h]
        v_h = jnp.dot(c, wv_ref[h], preferred_element_type=jnp.float32) + bv_ref[h]

        # scores = q @ k^T without materializing k^T (contract kc on both sides).
        s = jax.lax.dot_general(
            q_h.astype(cdt), k_h.astype(cdt),
            (((1,), (1,)), ((), ())),
            preferred_element_type=jnp.float32)             # (tile_t, Ts_p)
        if bias is not None:
            s = s + bias

        # numerically-stable softmax over keys (f32)
        m = jnp.max(s, axis=-1, keepdims=True)
        e = jnp.exp(s - m)
        p = e * pl.reciprocal(jnp.sum(e, axis=-1, keepdims=True),
                              approx=approx_recip)

        o_h = jnp.dot(p.astype(cdt), v_h.astype(cdt),
                      preferred_element_type=jnp.float32)   # (tile_t, kc_p)

        # distribute conv_o over head slices of wo: no lane-axis concat needed.
        acc = acc + jnp.dot(o_h.astype(cdt), wo_ref[h],
                            preferred_element_type=jnp.float32)

    o_ref[0] = (acc + bo_ref[...]).astype(o_ref.dtype)


def multi_head_attention(x, c, params, *, n_heads, attn_mask=None,
                         compute_dtype=jnp.float32, q_tile=128):
    """PyTorch-layout wrapper.

    x : [B, C, T_t], c : [B, C, T_s]  (float32);  returns [B, out_C, T_t].
    compute_dtype=jnp.bfloat16 runs all matmuls in bf16 with f32 accumulation
    (recommended on v6e/v7x); float32 keeps exact reference semantics.
    """
    B, C, Tt = x.shape
    Bc, Cc, Ts = c.shape
    assert Bc == B and Cc == C, "x and c must share batch/channel dims"
    assert C % n_heads == 0, "channels must be divisible by n_heads"
    kc = C // n_heads
    Co = params["wo"].shape[1]

    # padded sizes: lane-dense last dims (x128), sublane-aligned rows (x8)
    C_p = _round_up(C, 128)
    kc_p = _round_up(kc, 128)
    Co_p = _round_up(Co, 128)
    Ts_p = _round_up(Ts, 128)
    if Tt <= q_tile:
        tile_t = _round_up(Tt, 8)
        Tt_p = tile_t
    else:
        tile_t = q_tile
        Tt_p = _round_up(Tt, q_tile)
    n_qt = Tt_p // tile_t

    # NCL -> (B, T, C), zero-pad (exact), cast matmul operands to compute_dtype.
    xt = jnp.pad(jnp.transpose(x, (0, 2, 1)),
                 ((0, 0), (0, Tt_p - Tt), (0, C_p - C))).astype(compute_dtype)
    ct = jnp.pad(jnp.transpose(c, (0, 2, 1)),
                 ((0, 0), (0, Ts_p - Ts), (0, C_p - C))).astype(compute_dtype)

    # Head-major weights (H, C, kc); fold 1/sqrt(kc) into the q projection.
    scale = 1.0 / math.sqrt(kc)

    def _prep_in_proj(w, b, fold_scale):
        w3 = w.reshape(C, n_heads, kc).transpose(1, 0, 2)    # (H, C, kc)
        b3 = b.reshape(1, n_heads, kc).transpose(1, 0, 2)    # (H, 1, kc)
        if fold_scale:
            w3 = w3 * scale
            b3 = b3 * scale
        w3 = jnp.pad(w3, ((0, 0), (0, C_p - C), (0, kc_p - kc)))
        b3 = jnp.pad(b3, ((0, 0), (0, 0), (0, kc_p - kc)))
        return w3.astype(compute_dtype), b3.astype(jnp.float32)

    wq3, bq3 = _prep_in_proj(params["wq"], params["bq"], True)
    wk3, bk3 = _prep_in_proj(params["wk"], params["bk"], False)
    wv3, bv3 = _prep_in_proj(params["wv"], params["bv"], False)

    wo3 = jnp.pad(params["wo"].reshape(n_heads, kc, Co),
                  ((0, 0), (0, kc_p - kc), (0, Co_p - Co))).astype(compute_dtype)
    bo2 = jnp.pad(params["bo"], ((0, 0), (0, Co_p - Co))).astype(jnp.float32)

    has_mask = attn_mask is not None
    inputs, in_specs = [], []
    if has_mask:
        m = jnp.asarray(attn_mask)
        if m.ndim == 4:                 # (B|1, 1, Tt|1, Ts|1): heads share the mask
            m = m[:, 0]
        m = jnp.broadcast_to(m, (B, Tt, Ts))
        m = (m != 0).astype(jnp.int8)   # int8, not dense f32
        # pad with "keep"; padded key columns are killed by the in-kernel pad bias
        m = jnp.pad(m, ((0, 0), (0, Tt_p - Tt), (0, Ts_p - Ts)), constant_values=1)
        inputs.append(m)
        in_specs.append(pl.BlockSpec((1, tile_t, Ts_p), lambda b, t: (b, t, 0)))

    inputs += [xt, ct, wq3, bq3, wk3, bk3, wv3, bv3, wo3, bo2]
    # NOTE: the weight/bias specs are grid-invariant; they could additionally be
    # single-buffered (pipeline_mode=pl.Buffered(1)) to halve their VMEM
    # footprint on v7x -- left at the default for cross-version portability.
    in_specs += [
        pl.BlockSpec((1, tile_t, C_p), lambda b, t: (b, t, 0)),       # x tile
        pl.BlockSpec((1, Ts_p, C_p), lambda b, t: (b, 0, 0)),         # key/value side
        pl.BlockSpec((n_heads, C_p, kc_p), lambda b, t: (0, 0, 0)),   # wq (head-major)
        pl.BlockSpec((n_heads, 1, kc_p), lambda b, t: (0, 0, 0)),     # bq
        pl.BlockSpec((n_heads, C_p, kc_p), lambda b, t: (0, 0, 0)),   # wk
        pl.BlockSpec((n_heads, 1, kc_p), lambda b, t: (0, 0, 0)),     # bk
        pl.BlockSpec((n_heads, C_p, kc_p), lambda b, t: (0, 0, 0)),   # wv
        pl.BlockSpec((n_heads, 1, kc_p), lambda b, t: (0, 0, 0)),     # bv
        pl.BlockSpec((n_heads, kc_p, Co_p), lambda b, t: (0, 0, 0)),  # wo (head-major)
        pl.BlockSpec((1, Co_p), lambda b, t: (0, 0)),                 # bo
    ]

    # VMEM budget from the actual block sizes (x2 for double buffering) plus
    # in-kernel intermediates, clamped so it is valid on v5e/v6e/v7x.
    isz = jnp.dtype(compute_dtype).itemsize
    blk = (tile_t * C_p * isz + Ts_p * C_p * isz
           + (tile_t * Ts_p if has_mask else 0)
           + 3 * n_heads * C_p * kc_p * isz + 3 * n_heads * kc_p * 4
           + n_heads * kc_p * Co_p * isz + Co_p * 4
           + tile_t * Co_p * 4)
    interm = ((tile_t + 2 * Ts_p) * kc_p * 4
              + 3 * tile_t * Ts_p * 4
              + tile_t * Co_p * 4)
    vmem_limit = int(min(max(2 * blk + 2 * interm + (4 << 20), 32 << 20), 48 << 20))

    kernel = functools.partial(
        _mha_kernel, n_heads=n_heads, ts_valid=Ts, ts_padded=Ts_p,
        has_mask=has_mask,
        approx_recip=(jnp.dtype(compute_dtype) == jnp.dtype(jnp.bfloat16)))

    out_p = pl.pallas_call(
        kernel,
        out_shape=jax.ShapeDtypeStruct((B, Tt_p, Co_p), jnp.float32),
        grid_spec=pltpu.PrefetchScalarGridSpec(
            num_scalar_prefetch=0,
            grid=(B, n_qt),
            in_specs=in_specs,
            out_specs=pl.BlockSpec((1, tile_t, Co_p), lambda b, t: (b, t, 0)),
        ),
        compiler_params=pltpu.CompilerParams(
            dimension_semantics=("parallel", "parallel"),
            vmem_limit_bytes=vmem_limit),
    )(*inputs)

    # unpad + back to PyTorch layout [B, out_C, T_t]
    return jnp.transpose(out_p[:, :Tt, :Co], (0, 2, 1))


def init_params(key, channels, out_channels):
    """Deterministic parameter init mirroring the module's __init__.

    Conv1d(k=1) weight (C_out, C_in, 1) with xavier_uniform is stored here
    already transposed as (C_in, C_out) so the kernel can do x @ W.
    Conv1d bias uses PyTorch's default U(-1/sqrt(fan_in), 1/sqrt(fan_in)).
    """
    keys = jax.random.split(key, 8)

    def xavier(k, cin, cout):
        bound = math.sqrt(6.0 / (cin + cout))
        return jax.random.uniform(k, (cin, cout), jnp.float32, -bound, bound)

    def bias(k, cin, cout):
        bound = 1.0 / math.sqrt(cin)
        return jax.random.uniform(k, (1, cout), jnp.float32, -bound, bound)

    return {
        "wq": xavier(keys[0], channels, channels), "bq": bias(keys[1], channels, channels),
        "wk": xavier(keys[2], channels, channels), "bk": bias(keys[3], channels, channels),
        "wv": xavier(keys[4], channels, channels), "bv": bias(keys[5], channels, channels),
        "wo": xavier(keys[6], channels, out_channels), "bo": bias(keys[7], channels, out_channels),
    }


def reference_mha(x, c, params, *, n_heads, attn_mask=None):
    """Pure-JAX reference mirroring the PyTorch forward (default config)."""
    B, C, Tt = x.shape
    Ts = c.shape[2]
    kc = C // n_heads
    xt = jnp.transpose(x, (0, 2, 1))
    ct = jnp.transpose(c, (0, 2, 1))
    q = xt @ params["wq"] + params["bq"]
    k = ct @ params["wk"] + params["bk"]
    v = ct @ params["wv"] + params["bv"]
    qh = q.reshape(B, Tt, n_heads, kc).transpose(0, 2, 1, 3)
    kh = k.reshape(B, Ts, n_heads, kc).transpose(0, 2, 1, 3)
    vh = v.reshape(B, Ts, n_heads, kc).transpose(0, 2, 1, 3)
    scores = jnp.einsum("bhtd,bhsd->bhts", qh / math.sqrt(kc), kh)
    if attn_mask is not None:
        m = jnp.broadcast_to(jnp.asarray(attn_mask).astype(jnp.float32)[:, None],
                             scores.shape)
        scores = jnp.where(m == 0, -10000.0, scores)
    p = jax.nn.softmax(scores, axis=-1)
    o = jnp.einsum("bhts,bhsd->bhtd", p, vh)
    o = o.transpose(0, 2, 1, 3).reshape(B, Tt, C)
    o = o @ params["wo"] + params["bo"]
    return jnp.transpose(o, (0, 2, 1))


if __name__ == "__main__":
    key = jax.random.PRNGKey(0)
    B, C, out_C, H = 2, 32, 32, 4
    Tt, Ts = 16, 24

    k_x, k_c, k_p = jax.random.split(key, 3)
    x = jax.random.normal(k_x, (B, C, Tt), jnp.float32)
    c = jax.random.normal(k_c, (B, C, Ts), jnp.float32)
    params = init_params(k_p, C, out_C)

    # 1) no-mask path (mask input is skipped entirely), f32 exact semantics
    out = jax.block_until_ready(multi_head_attention(x, c, params, n_heads=H))
    ref = reference_mha(x, c, params, n_heads=H)
    assert out.shape == (B, out_C, Tt)
    assert jnp.allclose(out, ref, atol=1e-4, rtol=1e-4), \
        float(jnp.max(jnp.abs(out - ref)))

    # 2) masked path (key-length mask, passed as an int8 mask to the kernel)
    lengths = jnp.array([Ts, 17])
    attn_mask = (jnp.arange(Ts)[None, None, :] < lengths[:, None, None]).astype(jnp.int32)
    attn_mask = jnp.broadcast_to(attn_mask, (B, Tt, Ts))
    out_m = jax.block_until_ready(
        multi_head_attention(x, c, params, n_heads=H, attn_mask=attn_mask))
    ref_m = reference_mha(x, c, params, n_heads=H, attn_mask=attn_mask)
    assert jnp.allclose(out_m, ref_m, atol=1e-4, rtol=1e-4), \
        float(jnp.max(jnp.abs(out_m - ref_m)))

    # 3) bf16 fast path (v6e/v7x MXU; f32 accumulation, EUP approx reciprocal);
    #    compared loosely against the f32 reference.
    out_bf = jax.block_until_ready(
        multi_head_attention(x, c, params, n_heads=H, compute_dtype=jnp.bfloat16))
    err_bf = float(jnp.max(jnp.abs(out_bf - ref)))
    assert err_bf < 0.2, err_bf

    print("KERNEL_OK")
</pallas_src>

<mosaic_0001>
module attributes {stable_mosaic.version = 11 : i64} {
  func.func @_mha_kernel(%arg0: i32, %arg1: i32, %arg2: memref<1x16x128xf32, #tpu.memory_space<vmem>>, %arg3: memref<1x128x128xf32, #tpu.memory_space<vmem>>, %arg4: memref<4x128x128xf32, #tpu.memory_space<vmem>>, %arg5: memref<4x1x128xf32, #tpu.memory_space<vmem>>, %arg6: memref<4x128x128xf32, #tpu.memory_space<vmem>>, %arg7: memref<4x1x128xf32, #tpu.memory_space<vmem>>, %arg8: memref<4x128x128xf32, #tpu.memory_space<vmem>>, %arg9: memref<4x1x128xf32, #tpu.memory_space<vmem>>, %arg10: memref<4x128x128xf32, #tpu.memory_space<vmem>>, %arg11: memref<1x128xf32, #tpu.memory_space<vmem>>, %arg12: memref<1x16x128xf32, #tpu.memory_space<vmem>>) attributes {dimension_semantics = [#tpu.dimension_semantics<parallel>, #tpu.dimension_semantics<parallel>], iteration_bounds = array<i64: 2, 1>, scalar_prefetch = 0 : i64, scratch_operands = 0 : i64, tpu.core_type = #tpu.core_type<tc>, window_params = [{transform_indices = @transform_0, window_bounds = array<i64: 1, 16, 128>}, {transform_indices = @transform_1, window_bounds = array<i64: 1, 128, 128>}, {pipeline_mode = #tpu.pipeline_mode<synchronous>, transform_indices = @transform_2, window_bounds = array<i64: 4, 128, 128>}, {pipeline_mode = #tpu.pipeline_mode<synchronous>, transform_indices = @transform_3, window_bounds = array<i64: 4, 1, 128>}, {pipeline_mode = #tpu.pipeline_mode<synchronous>, transform_indices = @transform_4, window_bounds = array<i64: 4, 128, 128>}, {pipeline_mode = #tpu.pipeline_mode<synchronous>, transform_indices = @transform_5, window_bounds = array<i64: 4, 1, 128>}, {pipeline_mode = #tpu.pipeline_mode<synchronous>, transform_indices = @transform_6, window_bounds = array<i64: 4, 128, 128>}, {pipeline_mode = #tpu.pipeline_mode<synchronous>, transform_indices = @transform_7, window_bounds = array<i64: 4, 1, 128>}, {pipeline_mode = #tpu.pipeline_mode<synchronous>, transform_indices = @transform_8, window_bounds = array<i64: 4, 128, 128>}, {pipeline_mode = #tpu.pipeline_mode<synchronous>, transform_indices = @transform_9, window_bounds = array<i64: 1, 128>}, {transform_indices = @transform_10, window_bounds = array<i64: 1, 16, 128>}]} {
    %c0 = arith.constant 0 : index
    %c0_0 = arith.constant 0 : index
    %c0_1 = arith.constant 0 : index
    %0 = vector.load %arg2[%c0, %c0_0, %c0_1] : memref<1x16x128xf32, #tpu.memory_space<vmem>>, vector<1x16x128xf32>
    %1 = vector.shape_cast %0 : vector<1x16x128xf32> to vector<16x128xf32>
    %c0_2 = arith.constant 0 : index
    %c0_3 = arith.constant 0 : index
    %c0_4 = arith.constant 0 : index
    %2 = vector.load %arg3[%c0_2, %c0_3, %c0_4] : memref<1x128x128xf32, #tpu.memory_space<vmem>>, vector<1x128x128xf32>
    %3 = vector.shape_cast %2 : vector<1x128x128xf32> to vector<128x128xf32>
    %4 = tpu.iota {dimensions = array<i32: 1>} : vector<1x128xi32>
    %c24_i32 = arith.constant 24 : i32
    %5 = vector.broadcast %c24_i32 : i32 to vector<1x128xi32>
    %6 = arith.cmpi slt, %4, %5 : vector<1x128xi32>
    %cst = arith.constant 0.000000e+00 : f32
    %cst_5 = arith.constant -1.000000e+30 : f32
    %7 = vector.broadcast %cst : f32 to vector<1x128xf32>
    %8 = vector.broadcast %cst_5 : f32 to vector<1x128xf32>
    %9 = arith.select %6, %7, %8 : vector<1x128xi1>, vector<1x128xf32>
    %cst_6 = arith.constant 0.000000e+00 : f32
    %10 = vector.broadcast %cst_6 : f32 to vector<16x128xf32>
    %c0_7 = arith.constant 0 : index
    %c0_8 = arith.constant 0 : index
    %c0_9 = arith.constant 0 : index
    %11 = vector.load %arg4[%c0_7, %c0_8, %c0_9] : memref<4x128x128xf32, #tpu.memory_space<vmem>>, vector<1x128x128xf32>
    %12 = vector.shape_cast %11 : vector<1x128x128xf32> to vector<128x128xf32>
    %cst_10 = arith.constant dense<0.000000e+00> : vector<16x128xf32>
    %13 = tpu.matmul %1, %12, %cst_10 {dimension_numbers = #tpu.dot_dimension_numbers<[1], [0], [0], [1], [0, 0, 1, 1], [], []>} : vector<16x128xf32>, vector<128x128xf32>, vector<16x128xf32> -> vector<16x128xf32>
    %c0_11 = arith.constant 0 : index
    %c0_12 = arith.constant 0 : index
    %c0_13 = arith.constant 0 : index
    %14 = vector.load %arg5[%c0_11, %c0_12, %c0_13] : memref<4x1x128xf32, #tpu.memory_space<vmem>>, vector<1x1x128xf32>
    %15 = vector.shape_cast %14 : vector<1x1x128xf32> to vector<1x128xf32>
    %16 = vector.broadcast %15 : vector<1x128xf32> to vector<16x128xf32>
    %17 = arith.addf %13, %16 : vector<16x128xf32>
    %c0_14 = arith.constant 0 : index
    %c0_15 = arith.constant 0 : index
    %c0_16 = arith.constant 0 : index
    %18 = vector.load %arg6[%c0_14, %c0_15, %c0_16] : memref<4x128x128xf32, #tpu.memory_space<vmem>>, vector<1x128x128xf32>
    %19 = vector.shape_cast %18 : vector<1x128x128xf32> to vector<128x128xf32>
    %cst_17 = arith.constant dense<0.000000e+00> : vector<128x128xf32>
    %20 = tpu.matmul %3, %19, %cst_17 {dimension_numbers = #tpu.dot_dimension_numbers<[1], [0], [0], [1], [0, 0, 1, 1], [], []>} : vector<128x128xf32>, vector<128x128xf32>, vector<128x128xf32> -> vector<128x128xf32>
    %c0_18 = arith.constant 0 : index
    %c0_19 = arith.constant 0 : index
    %c0_20 = arith.constant 0 : index
    %21 = vector.load %arg7[%c0_18, %c0_19, %c0_20] : memref<4x1x128xf32, #tpu.memory_space<vmem>>, vector<1x1x128xf32>
    %22 = vector.shape_cast %21 : vector<1x1x128xf32> to vector<1x128xf32>
    %23 = vector.broadcast %22 : vector<1x128xf32> to vector<128x128xf32>
    %24 = arith.addf %20, %23 : vector<128x128xf32>
    %c0_21 = arith.constant 0 : index
    %c0_22 = arith.constant 0 : index
    %c0_23 = arith.constant 0 : index
    %25 = vector.load %arg8[%c0_21, %c0_22, %c0_23] : memref<4x128x128xf32, #tpu.memory_space<vmem>>, vector<1x128x128xf32>
    %26 = vector.shape_cast %25 : vector<1x128x128xf32> to vector<128x128xf32>
    %cst_24 = arith.constant dense<0.000000e+00> : vector<128x128xf32>
    %27 = tpu.matmul %3, %26, %cst_24 {dimension_numbers = #tpu.dot_dimension_numbers<[1], [0], [0], [1], [0, 0, 1, 1], [], []>} : vector<128x128xf32>, vector<128x128xf32>, vector<128x128xf32> -> vector<128x128xf32>
    %c0_25 = arith.constant 0 : index
    %c0_26 = arith.constant 0 : index
    %c0_27 = arith.constant 0 : index
    %28 = vector.load %arg9[%c0_25, %c0_26, %c0_27] : memref<4x1x128xf32, #tpu.memory_space<vmem>>, vector<1x1x128xf32>
    %29 = vector.shape_cast %28 : vector<1x1x128xf32> to vector<1x128xf32>
    %30 = vector.broadcast %29 : vector<1x128xf32> to vector<128x128xf32>
    %31 = arith.addf %27, %30 : vector<128x128xf32>
    %cst_28 = arith.constant dense<0.000000e+00> : vector<16x128xf32>
    %32 = tpu.matmul %17, %24, %cst_28 {dimension_numbers = #tpu.dot_dimension_numbers<[1], [1], [0], [0], [0, 0, 1, 0], [], []>} : vector<16x128xf32>, vector<128x128xf32>, vector<16x128xf32> -> vector<16x128xf32>
    %33 = vector.broadcast %9 : vector<1x128xf32> to vector<16x128xf32>
    %34 = arith.addf %32, %33 : vector<16x128xf32>
    %cst_29 = arith.constant dense<0xFF800000> : vector<16xf32>
    %35 = vector.multi_reduction <maximumf>, %34, %cst_29 [1] : vector<16x128xf32> to vector<16xf32>
    %36 = vector.shape_cast %35 : vector<16xf32> to vector<16x1xf32>
    %37 = vector.broadcast %36 : vector<16x1xf32> to vector<16x128xf32>
    %38 = arith.subf %34, %37 : vector<16x128xf32>
    %39 = math.exp %38 : vector<16x128xf32>
    %cst_30 = arith.constant dense<0.000000e+00> : vector<16xf32>
    %40 = vector.multi_reduction <add>, %39, %cst_30 [1] : vector<16x128xf32> to vector<16xf32>
    %41 = vector.shape_cast %40 : vector<16xf32> to vector<16x1xf32>
    %42 = tpu.reciprocal %41 : vector<16x1xf32> -> vector<16x1xf32>
    %43 = vector.broadcast %42 : vector<16x1xf32> to vector<16x128xf32>
    %44 = arith.mulf %39, %43 : vector<16x128xf32>
    %cst_31 = arith.constant dense<0.000000e+00> : vector<16x128xf32>
    %45 = tpu.matmul %44, %31, %cst_31 {dimension_numbers = #tpu.dot_dimension_numbers<[1], [0], [0], [1], [0, 0, 1, 1], [], []>} : vector<16x128xf32>, vector<128x128xf32>, vector<16x128xf32> -> vector<16x128xf32>
    %c0_32 = arith.constant 0 : index
    %c0_33 = arith.constant 0 : index
    %c0_34 = arith.constant 0 : index
    %46 = vector.load %arg10[%c0_32, %c0_33, %c0_34] : memref<4x128x128xf32, #tpu.memory_space<vmem>>, vector<1x128x128xf32>
    %47 = vector.shape_cast %46 : vector<1x128x128xf32> to vector<128x128xf32>
    %cst_35 = arith.constant dense<0.000000e+00> : vector<16x128xf32>
    %48 = tpu.matmul %45, %47, %cst_35 {dimension_numbers = #tpu.dot_dimension_numbers<[1], [0], [0], [1], [0, 0, 1, 1], [], []>} : vector<16x128xf32>, vector<128x128xf32>, vector<16x128xf32> -> vector<16x128xf32>
    %49 = arith.addf %10, %48 : vector<16x128xf32>
    %c1 = arith.constant 1 : index
    %c0_36 = arith.constant 0 : index
    %c0_37 = arith.constant 0 : index
    %50 = vector.load %arg4[%c1, %c0_36, %c0_37] : memref<4x128x128xf32, #tpu.memory_space<vmem>>, vector<1x128x128xf32>
    %51 = vector.shape_cast %50 : vector<1x128x128xf32> to vector<128x128xf32>
    %cst_38 = arith.constant dense<0.000000e+00> : vector<16x128xf32>
    %52 = tpu.matmul %1, %51, %cst_38 {dimension_numbers = #tpu.dot_dimension_numbers<[1], [0], [0], [1], [0, 0, 1, 1], [], []>} : vector<16x128xf32>, vector<128x128xf32>, vector<16x128xf32> -> vector<16x128xf32>
    %c1_39 = arith.constant 1 : index
    %c0_40 = arith.constant 0 : index
    %c0_41 = arith.constant 0 : index
    %53 = vector.load %arg5[%c1_39, %c0_40, %c0_41] : memref<4x1x128xf32, #tpu.memory_space<vmem>>, vector<1x1x128xf32>
    %54 = vector.shape_cast %53 : vector<1x1x128xf32> to vector<1x128xf32>
    %55 = vector.broadcast %54 : vector<1x128xf32> to vector<16x128xf32>
    %56 = arith.addf %52, %55 : vector<16x128xf32>
    %c1_42 = arith.constant 1 : index
    %c0_43 = arith.constant 0 : index
    %c0_44 = arith.constant 0 : index
    %57 = vector.load %arg6[%c1_42, %c0_43, %c0_44] : memref<4x128x128xf32, #tpu.memory_space<vmem>>, vector<1x128x128xf32>
    %58 = vector.shape_cast %57 : vector<1x128x128xf32> to vector<128x128xf32>
    %cst_45 = arith.constant dense<0.000000e+00> : vector<128x128xf32>
    %59 = tpu.matmul %3, %58, %cst_45 {dimension_numbers = #tpu.dot_dimension_numbers<[1], [0], [0], [1], [0, 0, 1, 1], [], []>} : vector<128x128xf32>, vector<128x128xf32>, vector<128x128xf32> -> vector<128x128xf32>
    %c1_46 = arith.constant 1 : index
    %c0_47 = arith.constant 0 : index
    %c0_48 = arith.constant 0 : index
    %60 = vector.load %arg7[%c1_46, %c0_47, %c0_48] : memref<4x1x128xf32, #tpu.memory_space<vmem>>, vector<1x1x128xf32>
    %61 = vector.shape_cast %60 : vector<1x1x128xf32> to vector<1x128xf32>
    %62 = vector.broadcast %61 : vector<1x128xf32> to vector<128x128xf32>
    %63 = arith.addf %59, %62 : vector<128x128xf32>
    %c1_49 = arith.constant 1 : index
    %c0_50 = arith.constant 0 : index
    %c0_51 = arith.constant 0 : index
    %64 = vector.load %arg8[%c1_49, %c0_50, %c0_51] : memref<4x128x128xf32, #tpu.memory_space<vmem>>, vector<1x128x128xf32>
    %65 = vector.shape_cast %64 : vector<1x128x128xf32> to vector<128x128xf32>
    %cst_52 = arith.constant dense<0.000000e+00> : vector<128x128xf32>
    %66 = tpu.matmul %3, %65, %cst_52 {dimension_numbers = #tpu.dot_dimension_numbers<[1], [0], [0], [1], [0, 0, 1, 1], [], []>} : vector<128x128xf32>, vector<128x128xf32>, vector<128x128xf32> -> vector<128x128xf32>
    %c1_53 = arith.constant 1 : index
    %c0_54 = arith.constant 0 : index
    %c0_55 = arith.constant 0 : index
    %67 = vector.load %arg9[%c1_53, %c0_54, %c0_55] : memref<4x1x128xf32, #tpu.memory_space<vmem>>, vector<1x1x128xf32>
    %68 = vector.shape_cast %67 : vector<1x1x128xf32> to vector<1x128xf32>
    %69 = vector.broadcast %68 : vector<1x128xf32> to vector<128x128xf32>
    %70 = arith.addf %66, %69 : vector<128x128xf32>
    %cst_56 = arith.constant dense<0.000000e+00> : vector<16x128xf32>
    %71 = tpu.matmul %56, %63, %cst_56 {dimension_numbers = #tpu.dot_dimension_numbers<[1], [1], [0], [0], [0, 0, 1, 0], [], []>} : vector<16x128xf32>, vector<128x128xf32>, vector<16x128xf32> -> vector<16x128xf32>
    %72 = vector.broadcast %9 : vector<1x128xf32> to vector<16x128xf32>
    %73 = arith.addf %71, %72 : vector<16x128xf32>
    %cst_57 = arith.constant dense<0xFF800000> : vector<16xf32>
    %74 = vector.multi_reduction <maximumf>, %73, %cst_57 [1] : vector<16x128xf32> to vector<16xf32>
    %75 = vector.shape_cast %74 : vector<16xf32> to vector<16x1xf32>
    %76 = vector.broadcast %75 : vector<16x1xf32> to vector<16x128xf32>
    %77 = arith.subf %73, %76 : vector<16x128xf32>
    %78 = math.exp %77 : vector<16x128xf32>
    %cst_58 = arith.constant dense<0.000000e+00> : vector<16xf32>
    %79 = vector.multi_reduction <add>, %78, %cst_58 [1] : vector<16x128xf32> to vector<16xf32>
    %80 = vector.shape_cast %79 : vector<16xf32> to vector<16x1xf32>
    %81 = tpu.reciprocal %80 : vector<16x1xf32> -> vector<16x1xf32>
    %82 = vector.broadcast %81 : vector<16x1xf32> to vector<16x128xf32>
    %83 = arith.mulf %78, %82 : vector<16x128xf32>
    %cst_59 = arith.constant dense<0.000000e+00> : vector<16x128xf32>
    %84 = tpu.matmul %83, %70, %cst_59 {dimension_numbers = #tpu.dot_dimension_numbers<[1], [0], [0], [1], [0, 0, 1, 1], [], []>} : vector<16x128xf32>, vector<128x128xf32>, vector<16x128xf32> -> vector<16x128xf32>
    %c1_60 = arith.constant 1 : index
    %c0_61 = arith.constant 0 : index
    %c0_62 = arith.constant 0 : index
    %85 = vector.load %arg10[%c1_60, %c0_61, %c0_62] : memref<4x128x128xf32, #tpu.memory_space<vmem>>, vector<1x128x128xf32>
    %86 = vector.shape_cast %85 : vector<1x128x128xf32> to vector<128x128xf32>
    %cst_63 = arith.constant dense<0.000000e+00> : vector<16x128xf32>
    %87 = tpu.matmul %84, %86, %cst_63 {dimension_numbers = #tpu.dot_dimension_numbers<[1], [0], [0], [1], [0, 0, 1, 1], [], []>} : vector<16x128xf32>, vector<128x128xf32>, vector<16x128xf32> -> vector<16x128xf32>
    %88 = arith.addf %49, %87 : vector<16x128xf32>
    %c2 = arith.constant 2 : index
    %c0_64 = arith.constant 0 : index
    %c0_65 = arith.constant 0 : index
    %89 = vector.load %arg4[%c2, %c0_64, %c0_65] : memref<4x128x128xf32, #tpu.memory_space<vmem>>, vector<1x128x128xf32>
    %90 = vector.shape_cast %89 : vector<1x128x128xf32> to vector<128x128xf32>
    %cst_66 = arith.constant dense<0.000000e+00> : vector<16x128xf32>
    %91 = tpu.matmul %1, %90, %cst_66 {dimension_numbers = #tpu.dot_dimension_numbers<[1], [0], [0], [1], [0, 0, 1, 1], [], []>} : vector<16x128xf32>, vector<128x128xf32>, vector<16x128xf32> -> vector<16x128xf32>
    %c2_67 = arith.constant 2 : index
    %c0_68 = arith.constant 0 : index
    %c0_69 = arith.constant 0 : index
    %92 = vector.load %arg5[%c2_67, %c0_68, %c0_69] : memref<4x1x128xf32, #tpu.memory_space<vmem>>, vector<1x1x128xf32>
    %93 = vector.shape_cast %92 : vector<1x1x128xf32> to vector<1x128xf32>
    %94 = vector.broadcast %93 : vector<1x128xf32> to vector<16x128xf32>
    %95 = arith.addf %91, %94 : vector<16x128xf32>
    %c2_70 = arith.constant 2 : index
    %c0_71 = arith.constant 0 : index
    %c0_72 = arith.constant 0 : index
    %96 = vector.load %arg6[%c2_70, %c0_71, %c0_72] : memref<4x128x128xf32, #tpu.memory_space<vmem>>, vector<1x128x128xf32>
    %97 = vector.shape_cast %96 : vector<1x128x128xf32> to vector<128x128xf32>
    %cst_73 = arith.constant dense<0.000000e+00> : vector<128x128xf32>
    %98 = tpu.matmul %3, %97, %cst_73 {dimension_numbers = #tpu.dot_dimension_numbers<[1], [0], [0], [1], [0, 0, 1, 1], [], []>} : vector<128x128xf32>, vector<128x128xf32>, vector<128x128xf32> -> vector<128x128xf32>
    %c2_74 = arith.constant 2 : index
    %c0_75 = arith.constant 0 : index
    %c0_76 = arith.constant 0 : index
    %99 = vector.load %arg7[%c2_74, %c0_75, %c0_76] : memref<4x1x128xf32, #tpu.memory_space<vmem>>, vector<1x1x128xf32>
    %100 = vector.shape_cast %99 : vector<1x1x128xf32> to vector<1x128xf32>
    %101 = vector.broadcast %100 : vector<1x128xf32> to vector<128x128xf32>
    %102 = arith.addf %98, %101 : vector<128x128xf32>
    %c2_77 = arith.constant 2 : index
    %c0_78 = arith.constant 0 : index
    %c0_79 = arith.constant 0 : index
    %103 = vector.load %arg8[%c2_77, %c0_78, %c0_79] : memref<4x128x128xf32, #tpu.memory_space<vmem>>, vector<1x128x128xf32>
    %104 = vector.shape_cast %103 : vector<1x128x128xf32> to vector<128x128xf32>
    %cst_80 = arith.constant dense<0.000000e+00> : vector<128x128xf32>
    %105 = tpu.matmul %3, %104, %cst_80 {dimension_numbers = #tpu.dot_dimension_numbers<[1], [0], [0], [1], [0, 0, 1, 1], [], []>} : vector<128x128xf32>, vector<128x128xf32>, vector<128x128xf32> -> vector<128x128xf32>
    %c2_81 = arith.constant 2 : index
    %c0_82 = arith.constant 0 : index
    %c0_83 = arith.constant 0 : index
    %106 = vector.load %arg9[%c2_81, %c0_82, %c0_83] : memref<4x1x128xf32, #tpu.memory_space<vmem>>, vector<1x1x128xf32>
    %107 = vector.shape_cast %106 : vector<1x1x128xf32> to vector<1x128xf32>
    %108 = vector.broadcast %107 : vector<1x128xf32> to vector<128x128xf32>
    %109 = arith.addf %105, %108 : vector<128x128xf32>
    %cst_84 = arith.constant dense<0.000000e+00> : vector<16x128xf32>
    %110 = tpu.matmul %95, %102, %cst_84 {dimension_numbers = #tpu.dot_dimension_numbers<[1], [1], [0], [0], [0, 0, 1, 0], [], []>} : vector<16x128xf32>, vector<128x128xf32>, vector<16x128xf32> -> vector<16x128xf32>
    %111 = vector.broadcast %9 : vector<1x128xf32> to vector<16x128xf32>
    %112 = arith.addf %110, %111 : vector<16x128xf32>
    %cst_85 = arith.constant dense<0xFF800000> : vector<16xf32>
    %113 = vector.multi_reduction <maximumf>, %112, %cst_85 [1] : vector<16x128xf32> to vector<16xf32>
    %114 = vector.shape_cast %113 : vector<16xf32> to vector<16x1xf32>
    %115 = vector.broadcast %114 : vector<16x1xf32> to vector<16x128xf32>
    %116 = arith.subf %112, %115 : vector<16x128xf32>
    %117 = math.exp %116 : vector<16x128xf32>
    %cst_86 = arith.constant dense<0.000000e+00> : vector<16xf32>
    %118 = vector.multi_reduction <add>, %117, %cst_86 [1] : vector<16x128xf32> to vector<16xf32>
    %119 = vector.shape_cast %118 : vector<16xf32> to vector<16x1xf32>
    %120 = tpu.reciprocal %119 : vector<16x1xf32> -> vector<16x1xf32>
    %121 = vector.broadcast %120 : vector<16x1xf32> to vector<16x128xf32>
    %122 = arith.mulf %117, %121 : vector<16x128xf32>
    %cst_87 = arith.constant dense<0.000000e+00> : vector<16x128xf32>
    %123 = tpu.matmul %122, %109, %cst_87 {dimension_numbers = #tpu.dot_dimension_numbers<[1], [0], [0], [1], [0, 0, 1, 1], [], []>} : vector<16x128xf32>, vector<128x128xf32>, vector<16x128xf32> -> vector<16x128xf32>
    %c2_88 = arith.constant 2 : index
    %c0_89 = arith.constant 0 : index
    %c0_90 = arith.constant 0 : index
    %124 = vector.load %arg10[%c2_88, %c0_89, %c0_90] : memref<4x128x128xf32, #tpu.memory_space<vmem>>, vector<1x128x128xf32>
    %125 = vector.shape_cast %124 : vector<1x128x128xf32> to vector<128x128xf32>
    %cst_91 = arith.constant dense<0.000000e+00> : vector<16x128xf32>
    %126 = tpu.matmul %123, %125, %cst_91 {dimension_numbers = #tpu.dot_dimension_numbers<[1], [0], [0], [1], [0, 0, 1, 1], [], []>} : vector<16x128xf32>, vector<128x128xf32>, vector<16x128xf32> -> vector<16x128xf32>
    %127 = arith.addf %88, %126 : vector<16x128xf32>
    %c3 = arith.constant 3 : index
    %c0_92 = arith.constant 0 : index
    %c0_93 = arith.constant 0 : index
    %128 = vector.load %arg4[%c3, %c0_92, %c0_93] : memref<4x128x128xf32, #tpu.memory_space<vmem>>, vector<1x128x128xf32>
    %129 = vector.shape_cast %128 : vector<1x128x128xf32> to vector<128x128xf32>
    %cst_94 = arith.constant dense<0.000000e+00> : vector<16x128xf32>
    %130 = tpu.matmul %1, %129, %cst_94 {dimension_numbers = #tpu.dot_dimension_numbers<[1], [0], [0], [1], [0, 0, 1, 1], [], []>} : vector<16x128xf32>, vector<128x128xf32>, vector<16x128xf32> -> vector<16x128xf32>
    %c3_95 = arith.constant 3 : index
    %c0_96 = arith.constant 0 : index
    %c0_97 = arith.constant 0 : index
    %131 = vector.load %arg5[%c3_95, %c0_96, %c0_97] : memref<4x1x128xf32, #tpu.memory_space<vmem>>, vector<1x1x128xf32>
    %132 = vector.shape_cast %131 : vector<1x1x128xf32> to vector<1x128xf32>
    %133 = vector.broadcast %132 : vector<1x128xf32> to vector<16x128xf32>
    %134 = arith.addf %130, %133 : vector<16x128xf32>
    %c3_98 = arith.constant 3 : index
    %c0_99 = arith.constant 0 : index
    %c0_100 = arith.constant 0 : index
    %135 = vector.load %arg6[%c3_98, %c0_99, %c0_100] : memref<4x128x128xf32, #tpu.memory_space<vmem>>, vector<1x128x128xf32>
    %136 = vector.shape_cast %135 : vector<1x128x128xf32> to vector<128x128xf32>
    %cst_101 = arith.constant dense<0.000000e+00> : vector<128x128xf32>
    %137 = tpu.matmul %3, %136, %cst_101 {dimension_numbers = #tpu.dot_dimension_numbers<[1], [0], [0], [1], [0, 0, 1, 1], [], []>} : vector<128x128xf32>, vector<128x128xf32>, vector<128x128xf32> -> vector<128x128xf32>
    %c3_102 = arith.constant 3 : index
    %c0_103 = arith.constant 0 : index
    %c0_104 = arith.constant 0 : index
    %138 = vector.load %arg7[%c3_102, %c0_103, %c0_104] : memref<4x1x128xf32, #tpu.memory_space<vmem>>, vector<1x1x128xf32>
    %139 = vector.shape_cast %138 : vector<1x1x128xf32> to vector<1x128xf32>
    %140 = vector.broadcast %139 : vector<1x128xf32> to vector<128x128xf32>
    %141 = arith.addf %137, %140 : vector<128x128xf32>
    %c3_105 = arith.constant 3 : index
    %c0_106 = arith.constant 0 : index
    %c0_107 = arith.constant 0 : index
    %142 = vector.load %arg8[%c3_105, %c0_106, %c0_107] : memref<4x128x128xf32, #tpu.memory_space<vmem>>, vector<1x128x128xf32>
    %143 = vector.shape_cast %142 : vector<1x128x128xf32> to vector<128x128xf32>
    %cst_108 = arith.constant dense<0.000000e+00> : vector<128x128xf32>
    %144 = tpu.matmul %3, %143, %cst_108 {dimension_numbers = #tpu.dot_dimension_numbers<[1], [0], [0], [1], [0, 0, 1, 1], [], []>} : vector<128x128xf32>, vector<128x128xf32>, vector<128x128xf32> -> vector<128x128xf32>
    %c3_109 = arith.constant 3 : index
    %c0_110 = arith.constant 0 : index
    %c0_111 = arith.constant 0 : index
    %145 = vector.load %arg9[%c3_109, %c0_110, %c0_111] : memref<4x1x128xf32, #tpu.memory_space<vmem>>, vector<1x1x128xf32>
    %146 = vector.shape_cast %145 : vector<1x1x128xf32> to vector<1x128xf32>
    %147 = vector.broadcast %146 : vector<1x128xf32> to vector<128x128xf32>
    %148 = arith.addf %144, %147 : vector<128x128xf32>
    %cst_112 = arith.constant dense<0.000000e+00> : vector<16x128xf32>
    %149 = tpu.matmul %134, %141, %cst_112 {dimension_numbers = #tpu.dot_dimension_numbers<[1], [1], [0], [0], [0, 0, 1, 0], [], []>} : vector<16x128xf32>, vector<128x128xf32>, vector<16x128xf32> -> vector<16x128xf32>
    %150 = vector.broadcast %9 : vector<1x128xf32> to vector<16x128xf32>
    %151 = arith.addf %149, %150 : vector<16x128xf32>
    %cst_113 = arith.constant dense<0xFF800000> : vector<16xf32>
    %152 = vector.multi_reduction <maximumf>, %151, %cst_113 [1] : vector<16x128xf32> to vector<16xf32>
    %153 = vector.shape_cast %152 : vector<16xf32> to vector<16x1xf32>
    %154 = vector.broadcast %153 : vector<16x1xf32> to vector<16x128xf32>
    %155 = arith.subf %151, %154 : vector<16x128xf32>
    %156 = math.exp %155 : vector<16x128xf32>
    %cst_114 = arith.constant dense<0.000000e+00> : vector<16xf32>
    %157 = vector.multi_reduction <add>, %156, %cst_114 [1] : vector<16x128xf32> to vector<16xf32>
    %158 = vector.shape_cast %157 : vector<16xf32> to vector<16x1xf32>
    %159 = tpu.reciprocal %158 : vector<16x1xf32> -> vector<16x1xf32>
    %160 = vector.broadcast %159 : vector<16x1xf32> to vector<16x128xf32>
    %161 = arith.mulf %156, %160 : vector<16x128xf32>
    %cst_115 = arith.constant dense<0.000000e+00> : vector<16x128xf32>
    %162 = tpu.matmul %161, %148, %cst_115 {dimension_numbers = #tpu.dot_dimension_numbers<[1], [0], [0], [1], [0, 0, 1, 1], [], []>} : vector<16x128xf32>, vector<128x128xf32>, vector<16x128xf32> -> vector<16x128xf32>
    %c3_116 = arith.constant 3 : index
    %c0_117 = arith.constant 0 : index
    %c0_118 = arith.constant 0 : index
    %163 = vector.load %arg10[%c3_116, %c0_117, %c0_118] : memref<4x128x128xf32, #tpu.memory_space<vmem>>, vector<1x128x128xf32>
    %164 = vector.shape_cast %163 : vector<1x128x128xf32> to vector<128x128xf32>
    %cst_119 = arith.constant dense<0.000000e+00> : vector<16x128xf32>
    %165 = tpu.matmul %162, %164, %cst_119 {dimension_numbers = #tpu.dot_dimension_numbers<[1], [0], [0], [1], [0, 0, 1, 1], [], []>} : vector<16x128xf32>, vector<128x128xf32>, vector<16x128xf32> -> vector<16x128xf32>
    %166 = arith.addf %127, %165 : vector<16x128xf32>
    %c0_120 = arith.constant 0 : index
    %c0_121 = arith.constant 0 : index
    %167 = vector.load %arg11[%c0_120, %c0_121] : memref<1x128xf32, #tpu.memory_space<vmem>>, vector<1x128xf32>
    %168 = vector.broadcast %167 : vector<1x128xf32> to vector<16x128xf32>
    %169 = arith.addf %166, %168 : vector<16x128xf32>
    %c0_122 = arith.constant 0 : index
    %c0_123 = arith.constant 0 : index
    %c0_124 = arith.constant 0 : index
    %170 = vector.load %arg12[%c0_122, %c0_123, %c0_124] : memref<1x16x128xf32, #tpu.memory_space<vmem>>, vector<1x16x128xf32>
    %171 = vector.shape_cast %170 : vector<1x16x128xf32> to vector<16x128xf32>
    %172 = vector.shape_cast %169 : vector<16x128xf32> to vector<1x16x128xf32>
    tpu.vector_store %arg12[%c0_122, %c0_123, %c0_124], %172 {strides = array<i32>} : memref<1x16x128xf32, #tpu.memory_space<vmem>>, vector<1x16x128xf32>,
    return
  }
  func.func @transform_0(%arg0: i32, %arg1: i32) -> (i32, i32, i32) {
    %c0_i32 = arith.constant 0 : i32
    %c0_i32_0 = arith.constant 0 : i32
    return %arg0, %arg1, %c0_i32 : i32, i32, i32
  }
  func.func @transform_1(%arg0: i32, %arg1: i32) -> (i32, i32, i32) {
    %c0_i32 = arith.constant 0 : i32
    %c0_i32_0 = arith.constant 0 : i32
    %c0_i32_1 = arith.constant 0 : i32
    return %arg0, %c0_i32, %c0_i32_0 : i32, i32, i32
  }
  func.func @transform_2(%arg0: i32, %arg1: i32) -> (i32, i32, i32) {
    %c0_i32 = arith.constant 0 : i32
    %c0_i32_0 = arith.constant 0 : i32
    %c0_i32_1 = arith.constant 0 : i32
    %c0_i32_2 = arith.constant 0 : i32
    return %c0_i32, %c0_i32_0, %c0_i32_1 : i32, i32, i32
  }
  func.func @transform_3(%arg0: i32, %arg1: i32) -> (i32, i32, i32) {
    %c0_i32 = arith.constant 0 : i32
    %c0_i32_0 = arith.constant 0 : i32
    %c0_i32_1 = arith.constant 0 : i32
    %c0_i32_2 = arith.constant 0 : i32
    return %c0_i32, %c0_i32_0, %c0_i32_1 : i32, i32, i32
  }
  func.func @transform_4(%arg0: i32, %arg1: i32) -> (i32, i32, i32) {
    %c0_i32 = arith.constant 0 : i32
    %c0_i32_0 = arith.constant 0 : i32
    %c0_i32_1 = arith.constant 0 : i32
    %c0_i32_2 = arith.constant 0 : i32
    return %c0_i32, %c0_i32_0, %c0_i32_1 : i32, i32, i32
  }
  func.func @transform_5(%arg0: i32, %arg1: i32) -> (i32, i32, i32) {
    %c0_i32 = arith.constant 0 : i32
    %c0_i32_0 = arith.constant 0 : i32
    %c0_i32_1 = arith.constant 0 : i32
    %c0_i32_2 = arith.constant 0 : i32
    return %c0_i32, %c0_i32_0, %c0_i32_1 : i32, i32, i32
  }
  func.func @transform_6(%arg0: i32, %arg1: i32) -> (i32, i32, i32) {
    %c0_i32 = arith.constant 0 : i32
    %c0_i32_0 = arith.constant 0 : i32
    %c0_i32_1 = arith.constant 0 : i32
    %c0_i32_2 = arith.constant 0 : i32
    return %c0_i32, %c0_i32_0, %c0_i32_1 : i32, i32, i32
  }
  func.func @transform_7(%arg0: i32, %arg1: i32) -> (i32, i32, i32) {
    %c0_i32 = arith.constant 0 : i32
    %c0_i32_0 = arith.constant 0 : i32
    %c0_i32_1 = arith.constant 0 : i32
    %c0_i32_2 = arith.constant 0 : i32
    return %c0_i32, %c0_i32_0, %c0_i32_1 : i32, i32, i32
  }
  func.func @transform_8(%arg0: i32, %arg1: i32) -> (i32, i32, i32) {
    %c0_i32 = arith.constant 0 : i32
    %c0_i32_0 = arith.constant 0 : i32
    %c0_i32_1 = arith.constant 0 : i32
    %c0_i32_2 = arith.constant 0 : i32
    return %c0_i32, %c0_i32_0, %c0_i32_1 : i32, i32, i32
  }
  func.func @transform_9(%arg0: i32, %arg1: i32) -> (i32, i32) {
    %c0_i32 = arith.constant 0 : i32
    %c0_i32_0 = arith.constant 0 : i32
    %c0_i32_1 = arith.constant 0 : i32
    return %c0_i32, %c0_i32_0 : i32, i32
  }
  func.func @transform_10(%arg0: i32, %arg1: i32) -> (i32, i32, i32) {
    %c0_i32 = arith.constant 0 : i32
    %c0_i32_0 = arith.constant 0 : i32
    return %arg0, %arg1, %c0_i32 : i32, i32, i32
  }
}

</mosaic_0001>

<llo_original>
// kernel: tpu_custom_call.1
$region0: #{tpu_custom_call.1}
  #allocation0 [shape = 'u32[]', space=smem, size = 0x4, offset = 0x4, fixed_abs, tag = 'smem constant byte address 0x4 - core index']
  #allocation1 [shape = 'u32[144,128]{1,0:T(1,128)}', space=vmem, size = 0x12000, scoped, tag = 'internal scratch']
  %s0 = inlined_call_operand.hbm [shape: f32[2,16,128], index: 0, kind: input, shape index: {}]
  %s1 = inlined_call_operand.hbm [shape: f32[2,128,128], index: 1, kind: input, shape index: {}]
  %s2 = inlined_call_operand.hbm [shape: f32[4,128,128], index: 2, kind: input, shape index: {}]
  %s3 = inlined_call_operand.vmem [shape: f32[4,1,128], index: 3, kind: input, shape index: {}]
  %s4 = inlined_call_operand.hbm [shape: f32[4,128,128], index: 4, kind: input, shape index: {}]
  %s5 = inlined_call_operand.vmem [shape: f32[4,1,128], index: 5, kind: input, shape index: {}]
  %s6 = inlined_call_operand.hbm [shape: f32[4,128,128], index: 6, kind: input, shape index: {}]
  %s7 = inlined_call_operand.vmem [shape: f32[4,1,128], index: 7, kind: input, shape index: {}]
  %s8 = inlined_call_operand.hbm [shape: f32[4,128,128], index: 8, kind: input, shape index: {}]
  %s9 = inlined_call_operand.vmem [shape: f32[1,128], index: 9, kind: input, shape index: {}]
  %s10 = inlined_call_operand.hbm [shape: f32[2,16,128], index: 10, kind: output, shape index: {}]
  %s11 = sld [smem:[#allocation0]]
  $region97: #{tpu_custom_call.1} parent=0
    _
  %s13 = ssub.s32 1, %s11
  %s14 = scalar_select 0, %s13, %s11
  $region1: #{tpu_custom_call.1} parent=0
    #allocation2 [shape = 'u8[16384]{0}', space=vmem, size = 0x4000, scoped, tag = 'input window, operand 0']
    #allocation3 [shape = 's32[2]{0}', space=sflag, size = 0x8, scoped, tag = 'scoped memory for tpu_custom_call.1']
    #allocation4 [shape = 's32[2]{0}', space=sflag, size = 0x8, scoped, tag = 'scoped memory for tpu_custom_call.1']
    #allocation5 [shape = 'u8[131072]{0}', space=vmem, size = 0x20000, scoped, tag = 'input window, operand 1']
    #allocation6 [shape = 's32[2]{0}', space=sflag, size = 0x8, scoped, tag = 'scoped memory for tpu_custom_call.1']
    #allocation7 [shape = 'u8[262144]{0}', space=vmem, size = 0x40000, scoped, tag = 'input window, operand 2, single buffered']
    #allocation8 [shape = 'u8[262144]{0}', space=vmem, size = 0x40000, scoped, tag = 'input window, operand 4, single buffered']
    #allocation9 [shape = 's32[1]{0}', space=sflag, size = 0x4, scoped, tag = 'scoped memory for tpu_custom_call.1']
    #allocation10 [shape = 'u8[262144]{0}', space=vmem, size = 0x40000, scoped, tag = 'input window, operand 6, single buffered']
    #allocation11 [shape = 'u8[262144]{0}', space=vmem, size = 0x40000, scoped, tag = 'input window, operand 8, single buffered']
    #allocation12 [shape = 's32[1]{0}', space=sflag, size = 0x4, scoped, tag = 'scoped memory for tpu_custom_call.1']
    #allocation13 [shape = 'u8[16384]{0}', space=vmem, size = 0x4000, scoped, tag = 'output window, operand 0']
    %15 = vsyncpa [#allocation3], 0
    %s16 = scalar_lea.sflag [#allocation3], 1
    %17 = vsyncpa %s16, 0
    %18 = vsyncpa [#allocation6], 0
    %s19 = scalar_lea.sflag [#allocation6], 1
    %20 = vsyncpa %s19, 0
    %21 = vsyncpa [#allocation9], 0
    %22 = vsyncpa [#allocation12], 0
    %23 = vsyncpa [#allocation4], 0
    %s24 = scalar_lea.sflag [#allocation4], 1
    %25 = vsyncpa %s24, 0
    loop: start=0, step=1, limit=4
    $region2: #{tpu_custom_call.1} parent=1 // loop_pre_header
      _
    $region3: #{tpu_custom_call.1} parent=1 // loop_header
      %s27 = sphi 0, %s31
      %p28 = scmp.ge.s32.totalorder %s27, 4
      %s34 = sphi 0, %s46
      %s35 = sphi 0, %s42
      %s36 = sphi 0, %s34
      %s37 = sphi 0, %s35
      %s38 = sphi 0, %s36
      %s39 = sphi 0, %s37
      %s51 = sphi 0, %s53
      %s54 = sphi 0, %s51
      %s55 = sphi 0, %s54
      %s71 = sphi 0, %s55
      %s77 = sphi 0, %s79
      %s80 = sphi 0, %s77
      %s81 = sphi 0, %s80
      %s97 = sphi 0, %s81
      %s101 = sphi 0, %s101
      %s103 = sphi 0, %s101
      %s104 = sphi 0, %s103
      %s118 = sphi 0, %s104
      %s122 = sphi 0, %s122
      %s124 = sphi 0, %s122
      %s125 = sphi 0, %s124
      %s139 = sphi 0, %s125
      %s143 = sphi 0, %s143
      %s145 = sphi 0, %s143
      %s146 = sphi 0, %s145
      %s160 = sphi 0, %s146
      %s164 = sphi 0, %s164
      %s166 = sphi 0, %s164
      %s167 = sphi 0, %s166
      %s181 = sphi 0, %s167
      %s185 = sphi 0, %s185
      %s187 = sphi 0, %s185
      %s188 = sphi 0, %s187
      %s202 = sphi 0, %s188
      %s206 = sphi 0, %s206
      %s208 = sphi 0, %s206
      %s209 = sphi 0, %s208
      %s223 = sphi 0, %s209
      %s227 = sphi 0, %s227
      %s229 = sphi 0, %s227
      %s230 = sphi 0, %s229
      %s244 = sphi 0, %s230
      %s248 = sphi 0, %s248
      %s250 = sphi 0, %s248
      %s251 = sphi 0, %s250
      %s265 = sphi 0, %s251
      %s273 = sphi 0, %s275
      %s276 = sphi 0, %s273
      %s277 = sphi 0, %s276
      %s293 = sphi 0, %s277
    $region4: #{tpu_custom_call.1} parent=1 // loop_header_branch
      %30 = sbr.rel (%p28) target = $region8
    $region5: #{tpu_custom_call.1} parent=1 // loop_body
      %s32 = ssub.s32 %s27, 1
      %s33 = ssub.s32 %s27, 2
      %s40 = sadd.s32 1, %s35
      %p41 = scmp.ge.s32.totalorder %s40, 1
      %s42 = scalar_select %p41, 0, %s40
      %s43 = sadd.s32 1, %s34
      %s44 = scalar_select %p41, %s43, %s34
      %p45 = scmp.ge.s32.totalorder %s44, 2
      %s46 = scalar_select %p45, 0, %s44
      %s47 = ssub.s32 %s34, %s46
      %s48 = ssub.s32 %s35, %s42
      %s49 = sor.u32 %s47, %s48
      %p50 = scmp.eq.s32.totalorder %s49, 0
      %s52 = sadd.s32 %s51, 1
      %s53 = scalar_select %p50, %s51, %s52
      %p56 = pneg %p50
      %p57 = scmp.eq.s32.totalorder %s27, 1
      %p58 = por %p56, %p57
      %p59 = scmp.ne.s32.totalorder %s51, %s54
      %p60 = scmp.eq.s32.totalorder %s27, 0
      %p61 = por %p59, %p60
      %p62 = scmp.ne.s32.totalorder %s51, %s54
      %p63 = scmp.eq.s32.totalorder %s32, 1
      %p64 = por %p62, %p63
      %p65 = scmp.ne.s32.totalorder %s54, %s55
      %p66 = scmp.eq.s32.totalorder %s32, 0
      %p67 = por %p65, %p66
      %p68 = scmp.ne.s32.totalorder %s54, %s55
      %p69 = scmp.eq.s32.totalorder %s33, 1
      %p70 = por %p68, %p69
      %p72 = scmp.ne.s32.totalorder %s55, %s71
      %p73 = scmp.eq.s32.totalorder %s33, 0
      %p74 = por %p72, %p73
      %s75 = ssub.s32 %s34, %s46
      %p76 = scmp.eq.s32.totalorder %s75, 0
      %s78 = sadd.s32 %s77, 1
      %s79 = scalar_select %p76, %s77, %s78
      %p82 = pneg %p76
      %p83 = scmp.eq.s32.totalorder %s27, 1
      %p84 = por %p82, %p83
      %p85 = scmp.ne.s32.totalorder %s77, %s80
      %p86 = scmp.eq.s32.totalorder %s27, 0
      %p87 = por %p85, %p86
      %p88 = scmp.ne.s32.totalorder %s77, %s80
      %p89 = scmp.eq.s32.totalorder %s32, 1
      %p90 = por %p88, %p89
      %p91 = scmp.ne.s32.totalorder %s80, %s81
      %p92 = scmp.eq.s32.totalorder %s32, 0
      %p93 = por %p91, %p92
      %p94 = scmp.ne.s32.totalorder %s80, %s81
      %p95 = scmp.eq.s32.totalorder %s33, 1
      %p96 = por %p94, %p95
      %p98 = scmp.ne.s32.totalorder %s81, %s97
      %p99 = scmp.eq.s32.totalorder %s33, 0
      %p100 = por %p98, %p99
      %s102 = sadd.s32 %s101, 1
      %p105 = scmp.eq.s32.totalorder %s27, 1
      %p106 = scmp.ne.s32.totalorder %s101, %s103
      %p107 = scmp.eq.s32.totalorder %s27, 0
      %p108 = por %p106, %p107
      %p109 = scmp.ne.s32.totalorder %s101, %s103
      %p110 = scmp.eq.s32.totalorder %s32, 1
      %p111 = por %p109, %p110
      %p112 = scmp.ne.s32.totalorder %s103, %s104
      %p113 = scmp.eq.s32.totalorder %s32, 0
      %p114 = por %p112, %p113
      %p115 = scmp.ne.s32.totalorder %s103, %s104
      %p116 = scmp.eq.s32.totalorder %s33, 1
      %p117 = por %p115, %p116
      %p119 = scmp.ne.s32.totalorder %s104, %s118
      %p120 = scmp.eq.s32.totalorder %s33, 0
      %p121 = por %p119, %p120
      %s123 = sadd.s32 %s122, 1
      %p126 = scmp.eq.s32.totalorder %s27, 1
      %p127 = scmp.ne.s32.totalorder %s122, %s124
      %p128 = scmp.eq.s32.totalorder %s27, 0
      %p129 = por %p127, %p128
      %p130 = scmp.ne.s32.totalorder %s122, %s124
      %p131 = scmp.eq.s32.totalorder %s32, 1
      %p132 = por %p130, %p131
      %p133 = scmp.ne.s32.totalorder %s124, %s125
      %p134 = scmp.eq.s32.totalorder %s32, 0
      %p135 = por %p133, %p134
      %p136 = scmp.ne.s32.totalorder %s124, %s125
      %p137 = scmp.eq.s32.totalorder %s33, 1
      %p138 = por %p136, %p137
      %p140 = scmp.ne.s32.totalorder %s125, %s139
      %p141 = scmp.eq.s32.totalorder %s33, 0
      %p142 = por %p140, %p141
      %s144 = sadd.s32 %s143, 1
      %p147 = scmp.eq.s32.totalorder %s27, 1
      %p148 = scmp.ne.s32.totalorder %s143, %s145
      %p149 = scmp.eq.s32.totalorder %s27, 0
      %p150 = por %p148, %p149
      %p151 = scmp.ne.s32.totalorder %s143, %s145
      %p152 = scmp.eq.s32.totalorder %s32, 1
      %p153 = por %p151, %p152
      %p154 = scmp.ne.s32.totalorder %s145, %s146
      %p155 = scmp.eq.s32.totalorder %s32, 0
      %p156 = por %p154, %p155
      %p157 = scmp.ne.s32.totalorder %s145, %s146
      %p158 = scmp.eq.s32.totalorder %s33, 1
      %p159 = por %p157, %p158
      %p161 = scmp.ne.s32.totalorder %s146, %s160
      %p162 = scmp.eq.s32.totalorder %s33, 0
      %p163 = por %p161, %p162
      %s165 = sadd.s32 %s164, 1
      %p168 = scmp.eq.s32.totalorder %s27, 1
      %p169 = scmp.ne.s32.totalorder %s164, %s166
      %p170 = scmp.eq.s32.totalorder %s27, 0
      %p171 = por %p169, %p170
      %p172 = scmp.ne.s32.totalorder %s164, %s166
      %p173 = scmp.eq.s32.totalorder %s32, 1
      %p174 = por %p172, %p173
      %p175 = scmp.ne.s32.totalorder %s166, %s167
      %p176 = scmp.eq.s32.totalorder %s32, 0
      %p177 = por %p175, %p176
      %p178 = scmp.ne.s32.totalorder %s166, %s167
      %p179 = scmp.eq.s32.totalorder %s33, 1
      %p180 = por %p178, %p179
      %p182 = scmp.ne.s32.totalorder %s167, %s181
      %p183 = scmp.eq.s32.totalorder %s33, 0
      %p184 = por %p182, %p183
      %s186 = sadd.s32 %s185, 1
      %p189 = scmp.eq.s32.totalorder %s27, 1
      %p190 = scmp.ne.s32.totalorder %s185, %s187
      %p191 = scmp.eq.s32.totalorder %s27, 0
      %p192 = por %p190, %p191
      %p193 = scmp.ne.s32.totalorder %s185, %s187
      %p194 = scmp.eq.s32.totalorder %s32, 1
      %p195 = por %p193, %p194
      %p196 = scmp.ne.s32.totalorder %s187, %s188
      %p197 = scmp.eq.s32.totalorder %s32, 0
      %p198 = por %p196, %p197
      %p199 = scmp.ne.s32.totalorder %s187, %s188
      %p200 = scmp.eq.s32.totalorder %s33, 1
      %p201 = por %p199, %p200
      %p203 = scmp.ne.s32.totalorder %s188, %s202
      %p204 = scmp.eq.s32.totalorder %s33, 0
      %p205 = por %p203, %p204
      %s207 = sadd.s32 %s206, 1
      %p210 = scmp.eq.s32.totalorder %s27, 1
      %p211 = scmp.ne.s32.totalorder %s206, %s208
      %p212 = scmp.eq.s32.totalorder %s27, 0
      %p213 = por %p211, %p212
      %p214 = scmp.ne.s32.totalorder %s206, %s208
      %p215 = scmp.eq.s32.totalorder %s32, 1
      %p216 = por %p214, %p215
      %p217 = scmp.ne.s32.totalorder %s208, %s209
      %p218 = scmp.eq.s32.totalorder %s32, 0
      %p219 = por %p217, %p218
      %p220 = scmp.ne.s32.totalorder %s208, %s209
      %p221 = scmp.eq.s32.totalorder %s33, 1
      %p222 = por %p220, %p221
      %p224 = scmp.ne.s32.totalorder %s209, %s223
      %p225 = scmp.eq.s32.totalorder %s33, 0
      %p226 = por %p224, %p225
      %s228 = sadd.s32 %s227, 1
      %p231 = scmp.eq.s32.totalorder %s27, 1
      %p232 = scmp.ne.s32.totalorder %s227, %s229
      %p233 = scmp.eq.s32.totalorder %s27, 0
      %p234 = por %p232, %p233
      %p235 = scmp.ne.s32.totalorder %s227, %s229
      %p236 = scmp.eq.s32.totalorder %s32, 1
      %p237 = por %p235, %p236
      %p238 = scmp.ne.s32.totalorder %s229, %s230
      %p239 = scmp.eq.s32.totalorder %s32, 0
      %p240 = por %p238, %p239
      %p241 = scmp.ne.s32.totalorder %s229, %s230
      %p242 = scmp.eq.s32.totalorder %s33, 1
      %p243 = por %p241, %p242
      %p245 = scmp.ne.s32.totalorder %s230, %s244
      %p246 = scmp.eq.s32.totalorder %s33, 0
      %p247 = por %p245, %p246
      %s249 = sadd.s32 %s248, 1
      %p252 = scmp.eq.s32.totalorder %s27, 1
      %p253 = scmp.ne.s32.totalorder %s248, %s250
      %p254 = scmp.eq.s32.totalorder %s27, 0
      %p255 = por %p253, %p254
      %p256 = scmp.ne.s32.totalorder %s248, %s250
      %p257 = scmp.eq.s32.totalorder %s32, 1
      %p258 = por %p256, %p257
      %p259 = scmp.ne.s32.totalorder %s250, %s251
      %p260 = scmp.eq.s32.totalorder %s32, 0
      %p261 = por %p259, %p260
      %p262 = scmp.ne.s32.totalorder %s250, %s251
      %p263 = scmp.eq.s32.totalorder %s33, 1
      %p264 = por %p262, %p263
      %p266 = scmp.ne.s32.totalorder %s251, %s265
      %p267 = scmp.eq.s32.totalorder %s33, 0
      %p268 = por %p266, %p267
      %s269 = ssub.s32 %s34, %s46
      %s270 = ssub.s32 %s35, %s42
      %s271 = sor.u32 %s269, %s270
      %p272 = scmp.eq.s32.totalorder %s271, 0
      %s274 = sadd.s32 %s273, 1
      %s275 = scalar_select %p272, %s273, %s274
      %p278 = pneg %p272
      %p279 = scmp.eq.s32.totalorder %s27, 1
      %p280 = por %p278, %p279
      %p281 = scmp.ne.s32.totalorder %s273, %s276
      %p282 = scmp.eq.s32.totalorder %s27, 0
      %p283 = por %p281, %p282
      %p284 = scmp.ne.s32.totalorder %s273, %s276
      %p285 = scmp.eq.s32.totalorder %s32, 1
      %p286 = por %p284, %p285
      %p287 = scmp.ne.s32.totalorder %s276, %s277
      %p288 = scmp.eq.s32.totalorder %s32, 0
      %p289 = por %p287, %p288
      %p290 = scmp.ne.s32.totalorder %s276, %s277
      %p291 = scmp.eq.s32.totalorder %s33, 1
      %p292 = por %p290, %p291
      %p294 = scmp.ne.s32.totalorder %s277, %s293
      %p295 = scmp.eq.s32.totalorder %s33, 0
      %p296 = por %p294, %p295
      %p297 = scmp.le.s32.totalorder 1, %s27
      %p298 = scmp.lt.s32.totalorder %s27, 3
      %p299 = pnand %p297, %p298
      %p300 = pneg %p299
      // Predicated region
      $region9: #{tpu_custom_call.1} parent=5 // pred_check
        _
      $region10: #{tpu_custom_call.1} parent=5 // pred_check_branch
        %302 = sbr.rel (%p299) target = $region12
      $region11: #{tpu_custom_call.1} parent=5 // pred_region
        %s303 = ssub.s32 %s27, 1
        // Predicated region
        $region13: #{tpu_custom_call.1} parent=11 // pred_check
          %p304 = pneg %p114
        $region14: #{tpu_custom_call.1} parent=11 // pred_check_branch
          %306 = sbr.rel (%p304) target = $region16
        $region15: #{tpu_custom_call.1} parent=11 // pred_region
          %s308 = ssub.s32 8192, 8192
          %309 = vsyncadd [#allocation6], %s308
          %s310 = sshll.u32 [#allocation7], 4
          %s311 = int_to_ptr.vmem [resolvable:$true] %s310
          %316 = dma.hbm_to_vmem [thread:$0]  %s2, 8192, %s311, [#allocation6], 128, 128, 8
        $region16: #{tpu_custom_call.1} parent=11 // pred_fallthru
          _
        // Predicated region
        $region17: #{tpu_custom_call.1} parent=11 // pred_check
          %p317 = pneg %p135
        $region18: #{tpu_custom_call.1} parent=11 // pred_check_branch
          %319 = sbr.rel (%p317) target = $region20
        $region19: #{tpu_custom_call.1} parent=11 // pred_region
          _
        $region20: #{tpu_custom_call.1} parent=11 // pred_fallthru
          _
        // Predicated region
        $region21: #{tpu_custom_call.1} parent=11 // pred_check
          %p320 = pneg %p156
        $region22: #{tpu_custom_call.1} parent=11 // pred_check_branch
          %322 = sbr.rel (%p320) target = $region24
        $region23: #{tpu_custom_call.1} parent=11 // pred_region
          %s324 = ssub.s32 8192, 8192
          %325 = vsyncadd [#allocation9], %s324
          %s326 = sshll.u32 [#allocation8], 4
          %s327 = int_to_ptr.vmem [resolvable:$true] %s326
          %332 = dma.hbm_to_vmem [thread:$0]  %s4, 8192, %s327, [#allocation9], 128, 128, 8
        $region24: #{tpu_custom_call.1} parent=11 // pred_fallthru
          _
        // Predicated region
        $region25: #{tpu_custom_call.1} parent=11 // pred_check
          %p333 = pneg %p177
        $region26: #{tpu_custom_call.1} parent=11 // pred_check_branch
          %335 = sbr.rel (%p333) target = $region28
        $region27: #{tpu_custom_call.1} parent=11 // pred_region
          _
        $region28: #{tpu_custom_call.1} parent=11 // pred_fallthru
          _
        // Predicated region
        $region29: #{tpu_custom_call.1} parent=11 // pred_check
          %p336 = pneg %p198
        $region30: #{tpu_custom_call.1} parent=11 // pred_check_branch
          %338 = sbr.rel (%p336) target = $region32
        $region31: #{tpu_custom_call.1} parent=11 // pred_region
          %s340 = ssub.s32 8192, 8192
          %341 = vsyncadd [#allocation9], %s340
          %s342 = sshll.u32 [#allocation10], 4
          %s343 = int_to_ptr.vmem [resolvable:$true] %s342
          %348 = dma.hbm_to_vmem [thread:$0]  %s6, 8192, %s343, [#allocation9], 128, 128, 8
        $region32: #{tpu_custom_call.1} parent=11 // pred_fallthru
          _
        // Predicated region
        $region33: #{tpu_custom_call.1} parent=11 // pred_check
          %p349 = pneg %p219
        $region34: #{tpu_custom_call.1} parent=11 // pred_check_branch
          %351 = sbr.rel (%p349) target = $region36
        $region35: #{tpu_custom_call.1} parent=11 // pred_region
          _
        $region36: #{tpu_custom_call.1} parent=11 // pred_fallthru
          _
        // Predicated region
        $region37: #{tpu_custom_call.1} parent=11 // pred_check
          %p352 = pneg %p240
        $region38: #{tpu_custom_call.1} parent=11 // pred_check_branch
          %354 = sbr.rel (%p352) target = $region40
        $region39: #{tpu_custom_call.1} parent=11 // pred_region
          %s356 = ssub.s32 8192, 8192
          %357 = vsyncadd [#allocation12], %s356
          %s358 = sshll.u32 [#allocation11], 4
          %s359 = int_to_ptr.vmem [resolvable:$true] %s358
          %364 = dma.hbm_to_vmem [thread:$0]  %s8, 8192, %s359, [#allocation12], 128, 128, 8
        $region40: #{tpu_custom_call.1} parent=11 // pred_fallthru
          _
        // Predicated region
        $region41: #{tpu_custom_call.1} parent=11 // pred_check
          %p365 = pneg %p261
        $region42: #{tpu_custom_call.1} parent=11 // pred_check_branch
          %367 = sbr.rel (%p365) target = $region44
        $region43: #{tpu_custom_call.1} parent=11 // pred_region
          _
        $region44: #{tpu_custom_call.1} parent=11 // pred_fallthru
          _
      $region12: #{tpu_custom_call.1} parent=5 // pred_fallthru
        _
      %p368 = scmp.lt.s32.totalorder %s27, 2
      // Predicated region
      $region45: #{tpu_custom_call.1} parent=5 // pred_check
        %p369 = pneg %p368
      $region46: #{tpu_custom_call.1} parent=5 // pred_check_branch
        %371 = sbr.rel (%p369) target = $region48
      $region47: #{tpu_custom_call.1} parent=5 // pred_region
        // Predicated region
        $region49: #{tpu_custom_call.1} parent=47 // pred_check
          %p372 = pneg %p61
        $region50: #{tpu_custom_call.1} parent=47 // pred_check_branch
          %374 = sbr.rel (%p372) target = $region52
        $region51: #{tpu_custom_call.1} parent=47 // pred_region
          %s375 = sand.u32 %s51, 1
          %s376 = scalar_lea.sflag [#allocation3], %s375
          %s377 = sand.u32 %s51, 1
          %s378 = smul.addr %s377, 16
          %s379 = scalar_lea.vmem [#allocation2], %s378
          %s380 = smul.u32 2, %s35
          %s382 = ssub.s32 256, 256
          %383 = vsyncadd %s376, %s382
          %s384 = smul.addr %s34, 2
          %s385 = sadd.s32 %s380, %s384
          %s386 = smul.addr %s385, 128
          %s387 = scalar_lea.hbm %s0, %s386
          %s388 = sshll.u32 %s379, 4
          %s389 = int_to_ptr.vmem [resolvable:$true] %s388
          %394 = dma.hbm_to_vmem [thread:$0]  %s387, 256, %s389, %s376, 128, 128, 8
        $region52: #{tpu_custom_call.1} parent=47 // pred_fallthru
          _
        // Predicated region
        $region53: #{tpu_custom_call.1} parent=47 // pred_check
          %p395 = pneg %p87
        $region54: #{tpu_custom_call.1} parent=47 // pred_check_branch
          %397 = sbr.rel (%p395) target = $region56
        $region55: #{tpu_custom_call.1} parent=47 // pred_region
          %s398 = sand.u32 %s27, 1
          %s399 = scalar_lea.sflag [#allocation6], %s398
          %s400 = sand.u32 %s77, 1
          %s401 = smul.addr %s400, 128
          %s402 = scalar_lea.vmem [#allocation5], %s401
          %s404 = ssub.s32 2048, 2048
          %405 = vsyncadd %s399, %s404
          %s406 = smul.addr %s34, 16
          %s407 = smul.addr %s406, 128
          %s408 = scalar_lea.hbm %s1, %s407
          %s409 = sshll.u32 %s402, 4
          %s410 = int_to_ptr.vmem [resolvable:$true] %s409
          %415 = dma.hbm_to_vmem [thread:$0]  %s408, 2048, %s410, %s399, 128, 128, 8
        $region56: #{tpu_custom_call.1} parent=47 // pred_fallthru
          _
      $region48: #{tpu_custom_call.1} parent=5 // pred_fallthru
        _
      %p416 = scmp.le.s32.totalorder 1, %s27
      %p417 = scmp.lt.s32.totalorder %s27, 3
      %p418 = pnand %p416, %p417
      %p419 = pneg %p418
      // Predicated region
      $region57: #{tpu_custom_call.1} parent=5 // pred_check
        _
      $region58: #{tpu_custom_call.1} parent=5 // pred_check_branch
        %421 = sbr.rel (%p418) target = $region60
      $region59: #{tpu_custom_call.1} parent=5 // pred_region
        %s422 = ssub.s32 %s27, 1
        %s423 = sand.u32 %s54, 1
        %s424 = scalar_lea.sflag [#allocation3], %s423
        %s425 = sand.u32 %s54, 1
        %s426 = smul.addr %s425, 16
        %s427 = scalar_lea.vmem [#allocation2], %s426
        // Predicated region
        $region61: #{tpu_custom_call.1} parent=59 // pred_check
          %p428 = pneg %p67
        $region62: #{tpu_custom_call.1} parent=59 // pred_check_branch
          %430 = sbr.rel (%p428) target = $region64
        $region63: #{tpu_custom_call.1} parent=59 // pred_region
          %431 = dma.done %s424, 256
        $region64: #{tpu_custom_call.1} parent=59 // pred_fallthru
          _
        %s432 = sand.u32 %s32, 1
        %s433 = scalar_lea.sflag [#allocation6], %s432
        %s434 = sand.u32 %s80, 1
        %s435 = smul.addr %s434, 128
        %s436 = scalar_lea.vmem [#allocation5], %s435
        // Predicated region
        $region65: #{tpu_custom_call.1} parent=59 // pred_check
          %p437 = pneg %p93
        $region66: #{tpu_custom_call.1} parent=59 // pred_check_branch
          %439 = sbr.rel (%p437) target = $region68
        $region67: #{tpu_custom_call.1} parent=59 // pred_region
          %440 = dma.done %s433, 2048
        $region68: #{tpu_custom_call.1} parent=59 // pred_fallthru
          _
        // Predicated region
        $region69: #{tpu_custom_call.1} parent=59 // pred_check
          %p441 = pneg %p114
        $region70: #{tpu_custom_call.1} parent=59 // pred_check_branch
          %443 = sbr.rel (%p441) target = $region72
        $region71: #{tpu_custom_call.1} parent=59 // pred_region
          %444 = dma.done [#allocation6], 8192
        $region72: #{tpu_custom_call.1} parent=59 // pred_fallthru
          _
        // Predicated region
        $region73: #{tpu_custom_call.1} parent=59 // pred_check
          %p445 = pneg %p156
        $region74: #{tpu_custom_call.1} parent=59 // pred_check_branch
          %447 = sbr.rel (%p445) target = $region76
        $region75: #{tpu_custom_call.1} parent=59 // pred_region
          %448 = dma.done [#allocation9], 8192
        $region76: #{tpu_custom_call.1} parent=59 // pred_fallthru
          _
        // Predicated region
        $region77: #{tpu_custom_call.1} parent=59 // pred_check
          %p449 = pneg %p198
        $region78: #{tpu_custom_call.1} parent=59 // pred_check_branch
          %451 = sbr.rel (%p449) target = $region80
        $region79: #{tpu_custom_call.1} parent=59 // pred_region
          %452 = dma.done [#allocation9], 8192
        $region80: #{tpu_custom_call.1} parent=59 // pred_fallthru
          _
        // Predicated region
        $region81: #{tpu_custom_call.1} parent=59 // pred_check
          %p453 = pneg %p240
        $region82: #{tpu_custom_call.1} parent=59 // pred_check_branch
          %455 = sbr.rel (%p453) target = $region84
        $region83: #{tpu_custom_call.1} parent=59 // pred_region
          %456 = dma.done [#allocation12], 8192
        $region84: #{tpu_custom_call.1} parent=59 // pred_fallthru
          _
        %s457 = sand.u32 %s54, 1
        %s458 = scalar_lea.sflag [#allocation3], %s457
        %s459 = sand.u32 %s54, 1
        %s460 = smul.addr %s459, 16
        %s461 = scalar_lea.vmem [#allocation2], %s460
        %p462 = pneg %p67
        %p463 = pneg %p64
        %s464 = sand.u32 %s32, 1
        %s465 = scalar_lea.sflag [#allocation6], %s464
        %s466 = sand.u32 %s80, 1
        %s467 = smul.addr %s466, 128
        %s468 = scalar_lea.vmem [#allocation5], %s467
        %p469 = pneg %p93
        %p470 = pneg %p90
        %p471 = pneg %p114
        %p472 = pneg %p111
        %p473 = pneg %p135
        %p474 = pneg %p132
        %p475 = pneg %p156
        %p476 = pneg %p153
        %p477 = pneg %p177
        %p478 = pneg %p174
        %p479 = pneg %p198
        %p480 = pneg %p195
        %p481 = pneg %p219
        %p482 = pneg %p216
        %p483 = pneg %p240
        %p484 = pneg %p237
        %p485 = pneg %p261
        %p486 = pneg %p258
        %p487 = pneg %p289
        %p488 = pneg %p286
        %s489 = sand.u32 %s276, 1
        %s490 = scalar_lea.sflag [#allocation4], %s489
        %s491 = sand.u32 %s276, 1
        %s492 = smul.addr %s491, 16
        %s493 = scalar_lea.vmem [#allocation13], %s492
        %s494 = smul.u32 2, %s37
        %s495 = smul.u32 2, %s37
        %v496 = vld [vmem:[%s427] sm:$0xff]
        %v497 = vld [vmem:[%s427 + $0x8] sm:$0xff]
        %v498 = vld [vmem:[%s436] sm:$0xff]
        %v499 = vld [vmem:[%s436 + $0x8] sm:$0xff]
        %v500 = vld [vmem:[%s436 + $0x10] sm:$0xff]
        %v501 = vld [vmem:[%s436 + $0x18] sm:$0xff]
        %v502 = vld [vmem:[%s436 + $0x20] sm:$0xff]
        %v503 = vld [vmem:[%s436 + $0x28] sm:$0xff]
        %v504 = vld [vmem:[%s436 + $0x30] sm:$0xff]
        %v505 = vld [vmem:[%s436 + $0x38] sm:$0xff]
        %v506 = vld [vmem:[%s436 + $0x40] sm:$0xff]
        %v507 = vld [vmem:[%s436 + $0x48] sm:$0xff]
        %v508 = vld [vmem:[%s436 + $0x50] sm:$0xff]
        %v509 = vld [vmem:[%s436 + $0x58] sm:$0xff]
        %v510 = vld [vmem:[%s436 + $0x60] sm:$0xff]
        %v511 = vld [vmem:[%s436 + $0x68] sm:$0xff]
        %v512 = vld [vmem:[%s436 + $0x70] sm:$0xff]
        %v513 = vld [vmem:[%s436 + $0x78] sm:$0xff]
        %v514 = vlaneseq
        %v515 = vand.u32 %v514, 127
        %vm516 = vcmp.lt.s32.totalorder %v515, 24
        %v517 = vsel %vm516, 0.0, -1e+30
        %v518 = vld [vmem:[#allocation7] sm:$0xff]
        %v519 = vld [vmem:[#allocation7 + $0x8] sm:$0xff]
        %v520 = vld [vmem:[#allocation7 + $0x10] sm:$0xff]
        %v521 = vld [vmem:[#allocation7 + $0x18] sm:$0xff]
        %v522 = vld [vmem:[#allocation7 + $0x20] sm:$0xff]
        %v523 = vld [vmem:[#allocation7 + $0x28] sm:$0xff]
        %v524 = vld [vmem:[#allocation7 + $0x30] sm:$0xff]
        %v525 = vld [vmem:[#allocation7 + $0x38] sm:$0xff]
        %v526 = vld [vmem:[#allocation7 + $0x40] sm:$0xff]
        %v527 = vld [vmem:[#allocation7 + $0x48] sm:$0xff]
        %v528 = vld [vmem:[#allocation7 + $0x50] sm:$0xff]
        %v529 = vld [vmem:[#allocation7 + $0x58] sm:$0xff]
        %v530 = vld [vmem:[#allocation7 + $0x60] sm:$0xff]
        %v531 = vld [vmem:[#allocation7 + $0x68] sm:$0xff]
        %v532 = vld [vmem:[#allocation7 + $0x70] sm:$0xff]
        %v533 = vld [vmem:[#allocation7 + $0x78] sm:$0xff]
        %v534 = vld [vmem:[%s3] sm:$0x1]
        %v536 = vlaneseq
        %v537 = vshrl.u32 %v536, 7
        %v538 = vsub.s32 0, %v537
        %v539 = vrot.slane %v534, %v538
        %541 = vmatprep.subr.mxu0 0.0
        %542 = vmatpush1.msra.mxu0 %v518
        %543 = vmatprep.subr.mxu0 0.0
        %544 = vmatpush1.msra.mxu0 %v519
        %545 = vmatprep.subr.mxu0 0.0
        %546 = vmatpush1.msra.mxu0 %v520
        %547 = vmatprep.subr.mxu0 0.0
        %548 = vmatpush1.msra.mxu0 %v521
        %549 = vmatprep.subr.mxu0 0.0
        %550 = vmatpush1.msra.mxu0 %v522
        %551 = vmatprep.subr.mxu0 0.0
        %552 = vmatpush1.msra.mxu0 %v523
        %553 = vmatprep.subr.mxu0 0.0
        %554 = vmatpush1.msra.mxu0 %v524
        %555 = vmatprep.subr.mxu0 0.0
        %556 = vmatpush1.msra.mxu0 %v525
        %557 = vmatprep.subr.mxu0 0.0
        %558 = vmatpush1.msra.mxu0 %v526
        %559 = vmatprep.subr.mxu0 0.0
        %560 = vmatpush1.msra.mxu0 %v527
        %561 = vmatprep.subr.mxu0 0.0
        %562 = vmatpush1.msra.mxu0 %v528
        %563 = vmatprep.subr.mxu0 0.0
        %564 = vmatpush1.msra.mxu0 %v529
        %565 = vmatprep.subr.mxu0 0.0
        %566 = vmatpush1.msra.mxu0 %v530
        %567 = vmatprep.subr.mxu0 0.0
        %568 = vmatpush1.msra.mxu0 %v531
        %569 = vmatprep.subr.mxu0 0.0
        %570 = vmatpush1.msra.mxu0 %v532
        %571 = vmatprep.subr.mxu0 0.0
        %572 = vmatpush1.msra.mxu0 %v533
        %573 = vmatprep.subr.mxu0 0.0
        %574 = vmatpush1.msra.mxu0 0.0
        %575 = vmatprep.subr.mxu0 0.0
        %576 = vmatpush1.msra.mxu0 0.0
        %577 = vmatprep.subr.mxu0 0.0
        %578 = vmatpush1.msra.mxu0 0.0
        %579 = vmatprep.subr.mxu0 0.0
        %580 = vmatpush1.msra.mxu0 0.0
        %581 = vmatprep.subr.mxu0 0.0
        %582 = vmatpush1.msra.mxu0 0.0
        %583 = vmatprep.subr.mxu0 0.0
        %584 = vmatpush1.msra.mxu0 0.0
        %585 = vmatprep.subr.mxu0 0.0
        %586 = vmatpush1.msra.mxu0 0.0
        %587 = vmatprep.subr.mxu0 0.0
        %588 = vmatpush1.msra.mxu0 0.0
        %589 = vmatprep.subr.mxu0 0.0
        %590 = vmatpush1.msra.mxu0 0.0
        %591 = vmatprep.subr.mxu0 0.0
        %592 = vmatpush1.msra.mxu0 0.0
        %593 = vmatprep.subr.mxu0 0.0
        %594 = vmatpush1.msra.mxu0 0.0
        %595 = vmatprep.subr.mxu0 0.0
        %596 = vmatpush1.msra.mxu0 0.0
        %597 = vmatprep.subr.mxu0 0.0
        %598 = vmatpush1.msra.mxu0 0.0
        %599 = vmatprep.subr.mxu0 0.0
        %600 = vmatpush1.msra.mxu0 0.0
        %601 = vmatprep.subr.mxu0 0.0
        %602 = vmatpush1.msra.mxu0 0.0
        %603 = vmatprep.subr.mxu0 0.0
        %604 = vmatpush1.msra.mxu0 0.0
        %605 = vmatprep.mubr.f32.mxu0 0.0
        %606 = vmatmul.mubr.f32.gmra.mrb[0].mxu0 %v496
        %v607 = vpop.f32.mrb[0].mxu0
        %v608 = vadd.f32 %v539, %v607
        %v609 = vpop.f32.mrb[0].mxu0
        %610 = vmatprep.mubr.f32.mxu0 0.0
        %611 = vmatmul.mubr.f32.gmra.mrb[0].mxu0 %v497
        %v612 = vpop.f32.mrb[0].mxu0
        %v613 = vadd.f32 %v539, %v612
        %v614 = vpop.f32.mrb[0].mxu0
        %615 = vdwg.mxu0
        %v616 = vld [vmem:[#allocation8] sm:$0xff]
        %v617 = vld [vmem:[#allocation8 + $0x8] sm:$0xff]
        %v618 = vld [vmem:[#allocation8 + $0x10] sm:$0xff]
        %v619 = vld [vmem:[#allocation8 + $0x18] sm:$0xff]
        %v620 = vld [vmem:[#allocation8 + $0x20] sm:$0xff]
        %v621 = vld [vmem:[#allocation8 + $0x28] sm:$0xff]
        %v622 = vld [vmem:[#allocation8 + $0x30] sm:$0xff]
        %v623 = vld [vmem:[#allocation8 + $0x38] sm:$0xff]
        %v624 = vld [vmem:[#allocation8 + $0x40] sm:$0xff]
        %v625 = vld [vmem:[#allocation8 + $0x48] sm:$0xff]
        %v626 = vld [vmem:[#allocation8 + $0x50] sm:$0xff]
        %v627 = vld [vmem:[#allocation8 + $0x58] sm:$0xff]
        %v628 = vld [vmem:[#allocation8 + $0x60] sm:$0xff]
        %v629 = vld [vmem:[#allocation8 + $0x68] sm:$0xff]
        %v630 = vld [vmem:[#allocation8 + $0x70] sm:$0xff]
        %v631 = vld [vmem:[#allocation8 + $0x78] sm:$0xff]
        %v632 = vld [vmem:[%s5] sm:$0x1]
        %v634 = vlaneseq
        %v635 = vshrl.u32 %v634, 7
        %v636 = vsub.s32 0, %v635
        %v637 = vrot.slane %v632, %v636
        %639 = vmatprep.subr.mxu0 0.0
        %640 = vmatpush1.msra.mxu0 %v616
        %641 = vmatprep.subr.mxu0 0.0
        %642 = vmatpush1.msra.mxu0 %v617
        %643 = vmatprep.subr.mxu0 0.0
        %644 = vmatpush1.msra.mxu0 %v618
        %645 = vmatprep.subr.mxu0 0.0
        %646 = vmatpush1.msra.mxu0 %v619
        %647 = vmatprep.subr.mxu0 0.0
        %648 = vmatpush1.msra.mxu0 %v620
        %649 = vmatprep.subr.mxu0 0.0
        %650 = vmatpush1.msra.mxu0 %v621
        %651 = vmatprep.subr.mxu0 0.0
        %652 = vmatpush1.msra.mxu0 %v622
        %653 = vmatprep.subr.mxu0 0.0
        %654 = vmatpush1.msra.mxu0 %v623
        %655 = vmatprep.subr.mxu0 0.0
        %656 = vmatpush1.msra.mxu0 %v624
        %657 = vmatprep.subr.mxu0 0.0
        %658 = vmatpush1.msra.mxu0 %v625
        %659 = vmatprep.subr.mxu0 0.0
        %660 = vmatpush1.msra.mxu0 %v626
        %661 = vmatprep.subr.mxu0 0.0
        %662 = vmatpush1.msra.mxu0 %v627
        %663 = vmatprep.subr.mxu0 0.0
        %664 = vmatpush1.msra.mxu0 %v628
        %665 = vmatprep.subr.mxu0 0.0
        %666 = vmatpush1.msra.mxu0 %v629
        %667 = vmatprep.subr.mxu0 0.0
        %668 = vmatpush1.msra.mxu0 %v630
        %669 = vmatprep.subr.mxu0 0.0
        %670 = vmatpush1.msra.mxu0 %v631
        %671 = vmatprep.subr.mxu0 0.0
        %672 = vmatpush1.msra.mxu0 0.0
        %673 = vmatprep.subr.mxu0 0.0
        %674 = vmatpush1.msra.mxu0 0.0
        %675 = vmatprep.subr.mxu0 0.0
        %676 = vmatpush1.msra.mxu0 0.0
        %677 = vmatprep.subr.mxu0 0.0
        %678 = vmatpush1.msra.mxu0 0.0
        %679 = vmatprep.subr.mxu0 0.0
        %680 = vmatpush1.msra.mxu0 0.0
        %681 = vmatprep.subr.mxu0 0.0
        %682 = vmatpush1.msra.mxu0 0.0
        %683 = vmatprep.subr.mxu0 0.0
        %684 = vmatpush1.msra.mxu0 0.0
        %685 = vmatprep.subr.mxu0 0.0
        %686 = vmatpush1.msra.mxu0 0.0
        %687 = vmatprep.subr.mxu0 0.0
        %688 = vmatpush1.msra.mxu0 0.0
        %689 = vmatprep.subr.mxu0 0.0
        %690 = vmatpush1.msra.mxu0 0.0
        %691 = vmatprep.subr.mxu0 0.0
        %692 = vmatpush1.msra.mxu0 0.0
        %693 = vmatprep.subr.mxu0 0.0
        %694 = vmatpush1.msra.mxu0 0.0
        %695 = vmatprep.subr.mxu0 0.0
        %696 = vmatpush1.msra.mxu0 0.0
        %697 = vmatprep.subr.mxu0 0.0
        %698 = vmatpush1.msra.mxu0 0.0
        %699 = vmatprep.subr.mxu0 0.0
        %700 = vmatpush1.msra.mxu0 0.0
        %701 = vmatprep.subr.mxu0 0.0
        %702 = vmatpush1.msra.mxu0 0.0
        %703 = vmatprep.mubr.f32.mxu0 0.0
        %704 = vmatmul.mubr.f32.gmra.mrb[0].mxu0 %v498
        %v705 = vpop.f32.mrb[0].mxu0
        %v706 = vadd.f32 %v637, %v705
        %v707 = vpop.f32.mrb[0].mxu0
        %708 = vmatprep.mubr.f32.mxu0 0.0
        %709 = vmatmul.mubr.f32.gmra.mrb[0].mxu0 %v499
        %v710 = vpop.f32.mrb[0].mxu0
        %v711 = vadd.f32 %v637, %v710
        %v712 = vpop.f32.mrb[0].mxu0
        %713 = vmatprep.mubr.f32.mxu0 0.0
        %714 = vmatmul.mubr.f32.gmra.mrb[0].mxu0 %v500
        %v715 = vpop.f32.mrb[0].mxu0
        %v716 = vadd.f32 %v637, %v715
        %v717 = vpop.f32.mrb[0].mxu0
        %718 = vmatprep.mubr.f32.mxu0 0.0
        %719 = vmatmul.mubr.f32.gmra.mrb[0].mxu0 %v501
        %v720 = vpop.f32.mrb[0].mxu0
        %v721 = vadd.f32 %v637, %v720
        %v722 = vpop.f32.mrb[0].mxu0
        %723 = vmatprep.mubr.f32.mxu0 0.0
        %724 = vmatmul.mubr.f32.gmra.mrb[0].mxu0 %v502
        %v725 = vpop.f32.mrb[0].mxu0
        %v726 = vadd.f32 %v637, %v725
        %v727 = vpop.f32.mrb[0].mxu0
        %728 = vmatprep.mubr.f32.mxu0 0.0
        %729 = vmatmul.mubr.f32.gmra.mrb[0].mxu0 %v503
        %v730 = vpop.f32.mrb[0].mxu0
        %v731 = vadd.f32 %v637, %v730
        %v732 = vpop.f32.mrb[0].mxu0
        %733 = vmatprep.mubr.f32.mxu0 0.0
        %734 = vmatmul.mubr.f32.gmra.mrb[0].mxu0 %v504
        %v735 = vpop.f32.mrb[0].mxu0
        %v736 = vadd.f32 %v637, %v735
        %v737 = vpop.f32.mrb[0].mxu0
        %738 = vmatprep.mubr.f32.mxu0 0.0
        %739 = vmatmul.mubr.f32.gmra.mrb[0].mxu0 %v505
        %v740 = vpop.f32.mrb[0].mxu0
        %v741 = vadd.f32 %v637, %v740
        %v742 = vpop.f32.mrb[0].mxu0
        %743 = vmatprep.mubr.f32.mxu0 0.0
        %744 = vmatmul.mubr.f32.gmra.mrb[0].mxu0 %v506
        %v745 = vpop.f32.mrb[0].mxu0
        %v746 = vadd.f32 %v637, %v745
        %v747 = vpop.f32.mrb[0].mxu0
        %748 = vmatprep.mubr.f32.mxu0 0.0
        %749 = vmatmul.mubr.f32.gmra.mrb[0].mxu0 %v507
        %v750 = vpop.f32.mrb[0].mxu0
        %v751 = vadd.f32 %v637, %v750
        %v752 = vpop.f32.mrb[0].mxu0
        %753 = vmatprep.mubr.f32.mxu0 0.0
        %754 = vmatmul.mubr.f32.gmra.mrb[0].mxu0 %v508
        %v755 = vpop.f32.mrb[0].mxu0
        %v756 = vadd.f32 %v637, %v755
        %v757 = vpop.f32.mrb[0].mxu0
        %758 = vmatprep.mubr.f32.mxu0 0.0
        %759 = vmatmul.mubr.f32.gmra.mrb[0].mxu0 %v509
        %v760 = vpop.f32.mrb[0].mxu0
        %v761 = vadd.f32 %v637, %v760
        %v762 = vpop.f32.mrb[0].mxu0
        %763 = vmatprep.mubr.f32.mxu0 0.0
        %764 = vmatmul.mubr.f32.gmra.mrb[0].mxu0 %v510
        %v765 = vpop.f32.mrb[0].mxu0
        %v766 = vadd.f32 %v637, %v765
        %v767 = vpop.f32.mrb[0].mxu0
        %768 = vmatprep.mubr.f32.mxu0 0.0
        %769 = vmatmul.mubr.f32.gmra.mrb[0].mxu0 %v511
        %v770 = vpop.f32.mrb[0].mxu0
        %v771 = vadd.f32 %v637, %v770
        %v772 = vpop.f32.mrb[0].mxu0
        %773 = vmatprep.mubr.f32.mxu0 0.0
        %774 = vmatmul.mubr.f32.gmra.mrb[0].mxu0 %v512
        %v775 = vpop.f32.mrb[0].mxu0
        %v776 = vadd.f32 %v637, %v775
        %v777 = vpop.f32.mrb[0].mxu0
        %778 = vmatprep.mubr.f32.mxu0 0.0
        %779 = vmatmul.mubr.f32.gmra.mrb[0].mxu0 %v513
        %v780 = vpop.f32.mrb[0].mxu0
        %v781 = vadd.f32 %v637, %v780
        %v782 = vpop.f32.mrb[0].mxu0
        %783 = vdwg.mxu0
        %v784 = vld [vmem:[#allocation10] sm:$0xff]
        %v785 = vld [vmem:[#allocation10 + $0x8] sm:$0xff]
        %v786 = vld [vmem:[#allocation10 + $0x10] sm:$0xff]
        %v787 = vld [vmem:[#allocation10 + $0x18] sm:$0xff]
        %v788 = vld [vmem:[#allocation10 + $0x20] sm:$0xff]
        %v789 = vld [vmem:[#allocation10 + $0x28] sm:$0xff]
        %v790 = vld [vmem:[#allocation10 + $0x30] sm:$0xff]
        %v791 = vld [vmem:[#allocation10 + $0x38] sm:$0xff]
        %v792 = vld [vmem:[#allocation10 + $0x40] sm:$0xff]
        %v793 = vld [vmem:[#allocation10 + $0x48] sm:$0xff]
        %v794 = vld [vmem:[#allocation10 + $0x50] sm:$0xff]
        %v795 = vld [vmem:[#allocation10 + $0x58] sm:$0xff]
        %v796 = vld [vmem:[#allocation10 + $0x60] sm:$0xff]
        %v797 = vld [vmem:[#allocation10 + $0x68] sm:$0xff]
        %v798 = vld [vmem:[#allocation10 + $0x70] sm:$0xff]
        %v799 = vld [vmem:[#allocation10 + $0x78] sm:$0xff]
        %v800 = vld [vmem:[%s7] sm:$0x1]
        %v802 = vlaneseq
        %v803 = vshrl.u32 %v802, 7
        %v804 = vsub.s32 0, %v803
        %v805 = vrot.slane %v800, %v804
        %807 = vmatprep.subr.mxu0 0.0
        %808 = vmatpush1.msra.mxu0 %v784
        %809 = vmatprep.subr.mxu0 0.0
        %810 = vmatpush1.msra.mxu0 %v785
        %811 = vmatprep.subr.mxu0 0.0
        %812 = vmatpush1.msra.mxu0 %v786
        %813 = vmatprep.subr.mxu0 0.0
        %814 = vmatpush1.msra.mxu0 %v787
        %815 = vmatprep.subr.mxu0 0.0
        %816 = vmatpush1.msra.mxu0 %v788
        %817 = vmatprep.subr.mxu0 0.0
        %818 = vmatpush1.msra.mxu0 %v789
        %819 = vmatprep.subr.mxu0 0.0
        %820 = vmatpush1.msra.mxu0 %v790
        %821 = vmatprep.subr.mxu0 0.0
        %822 = vmatpush1.msra.mxu0 %v791
        %823 = vmatprep.subr.mxu0 0.0
        %824 = vmatpush1.msra.mxu0 %v792
        %825 = vmatprep.subr.mxu0 0.0
        %826 = vmatpush1.msra.mxu0 %v793
        %827 = vmatprep.subr.mxu0 0.0
        %828 = vmatpush1.msra.mxu0 %v794
        %829 = vmatprep.subr.mxu0 0.0
        %830 = vmatpush1.msra.mxu0 %v795
        %831 = vmatprep.subr.mxu0 0.0
        %832 = vmatpush1.msra.mxu0 %v796
        %833 = vmatprep.subr.mxu0 0.0
        %834 = vmatpush1.msra.mxu0 %v797
        %835 = vmatprep.subr.mxu0 0.0
        %836 = vmatpush1.msra.mxu0 %v798
        %837 = vmatprep.subr.mxu0 0.0
        %838 = vmatpush1.msra.mxu0 %v799
        %839 = vmatprep.subr.mxu0 0.0
        %840 = vmatpush1.msra.mxu0 0.0
        %841 = vmatprep.subr.mxu0 0.0
        %842 = vmatpush1.msra.mxu0 0.0
        %843 = vmatprep.subr.mxu0 0.0
        %844 = vmatpush1.msra.mxu0 0.0
        %845 = vmatprep.subr.mxu0 0.0
        %846 = vmatpush1.msra.mxu0 0.0
        %847 = vmatprep.subr.mxu0 0.0
        %848 = vmatpush1.msra.mxu0 0.0
        %849 = vmatprep.subr.mxu0 0.0
        %850 = vmatpush1.msra.mxu0 0.0
        %851 = vmatprep.subr.mxu0 0.0
        %852 = vmatpush1.msra.mxu0 0.0
        %853 = vmatprep.subr.mxu0 0.0
        %854 = vmatpush1.msra.mxu0 0.0
        %855 = vmatprep.subr.mxu0 0.0
        %856 = vmatpush1.msra.mxu0 0.0
        %857 = vmatprep.subr.mxu0 0.0
        %858 = vmatpush1.msra.mxu0 0.0
        %859 = vmatprep.subr.mxu0 0.0
        %860 = vmatpush1.msra.mxu0 0.0
        %861 = vmatprep.subr.mxu0 0.0
        %862 = vmatpush1.msra.mxu0 0.0
        %863 = vmatprep.subr.mxu0 0.0
        %864 = vmatpush1.msra.mxu0 0.0
        %865 = vmatprep.subr.mxu0 0.0
        %866 = vmatpush1.msra.mxu0 0.0
        %867 = vmatprep.subr.mxu0 0.0
        %868 = vmatpush1.msra.mxu0 0.0
        %869 = vmatprep.subr.mxu0 0.0
        %870 = vmatpush1.msra.mxu0 0.0
        %871 = vmatprep.mubr.f32.mxu0 0.0
        %872 = vmatmul.mubr.f32.gmra.mrb[0].mxu0 %v498
        %v873 = vpop.f32.mrb[0].mxu0
        %v874 = vadd.f32 %v805, %v873
        %v875 = vpop.f32.mrb[0].mxu0
        %876 = vmatprep.mubr.f32.mxu0 0.0
        %877 = vmatmul.mubr.f32.gmra.mrb[0].mxu0 %v499
        %v878 = vpop.f32.mrb[0].mxu0
        %v879 = vadd.f32 %v805, %v878
        %v880 = vpop.f32.mrb[0].mxu0
        %881 = vmatprep.mubr.f32.mxu0 0.0
        %882 = vmatmul.mubr.f32.gmra.mrb[0].mxu0 %v500
        %v883 = vpop.f32.mrb[0].mxu0
        %v884 = vadd.f32 %v805, %v883
        %v885 = vpop.f32.mrb[0].mxu0
        %886 = vmatprep.mubr.f32.mxu0 0.0
        %887 = vmatmul.mubr.f32.gmra.mrb[0].mxu0 %v501
        %v888 = vpop.f32.mrb[0].mxu0
        %v889 = vadd.f32 %v805, %v888
        %v890 = vpop.f32.mrb[0].mxu0
        %891 = vmatprep.mubr.f32.mxu0 0.0
        %892 = vmatmul.mubr.f32.gmra.mrb[0].mxu0 %v502
        %v893 = vpop.f32.mrb[0].mxu0
        %v894 = vadd.f32 %v805, %v893
        %v895 = vpop.f32.mrb[0].mxu0
        %896 = vmatprep.mubr.f32.mxu0 0.0
        %897 = vmatmul.mubr.f32.gmra.mrb[0].mxu0 %v503
        %v898 = vpop.f32.mrb[0].mxu0
        %v899 = vadd.f32 %v805, %v898
        %v900 = vpop.f32.mrb[0].mxu0
        %901 = vmatprep.mubr.f32.mxu0 0.0
        %902 = vmatmul.mubr.f32.gmra.mrb[0].mxu0 %v504
        %v903 = vpop.f32.mrb[0].mxu0
        %v904 = vadd.f32 %v805, %v903
        %v905 = vpop.f32.mrb[0].mxu0
        %906 = vmatprep.mubr.f32.mxu0 0.0
        %907 = vmatmul.mubr.f32.gmra.mrb[0].mxu0 %v505
        %v908 = vpop.f32.mrb[0].mxu0
        %v909 = vadd.f32 %v805, %v908
        %v910 = vpop.f32.mrb[0].mxu0
        %911 = vmatprep.mubr.f32.mxu0 0.0
        %912 = vmatmul.mubr.f32.gmra.mrb[0].mxu0 %v506
        %v913 = vpop.f32.mrb[0].mxu0
        %v914 = vadd.f32 %v805, %v913
        %v915 = vpop.f32.mrb[0].mxu0
        %916 = vmatprep.mubr.f32.mxu0 0.0
        %917 = vmatmul.mubr.f32.gmra.mrb[0].mxu0 %v507
        %v918 = vpop.f32.mrb[0].mxu0
        %v919 = vadd.f32 %v805, %v918
        %v920 = vpop.f32.mrb[0].mxu0
        %921 = vmatprep.mubr.f32.mxu0 0.0
        %922 = vmatmul.mubr.f32.gmra.mrb[0].mxu0 %v508
        %v923 = vpop.f32.mrb[0].mxu0
        %v924 = vadd.f32 %v805, %v923
        %v925 = vpop.f32.mrb[0].mxu0
        %926 = vmatprep.mubr.f32.mxu0 0.0
        %927 = vmatmul.mubr.f32.gmra.mrb[0].mxu0 %v509
        %v928 = vpop.f32.mrb[0].mxu0
        %v929 = vadd.f32 %v805, %v928
        %v930 = vpop.f32.mrb[0].mxu0
        %931 = vmatprep.mubr.f32.mxu0 0.0
        %932 = vmatmul.mubr.f32.gmra.mrb[0].mxu0 %v510
        %v933 = vpop.f32.mrb[0].mxu0
        %v934 = vadd.f32 %v805, %v933
        %v935 = vpop.f32.mrb[0].mxu0
        %936 = vmatprep.mubr.f32.mxu0 0.0
        %937 = vmatmul.mubr.f32.gmra.mrb[0].mxu0 %v511
        %v938 = vpop.f32.mrb[0].mxu0
        %v939 = vadd.f32 %v805, %v938
        %v940 = vpop.f32.mrb[0].mxu0
        %941 = vmatprep.mubr.f32.mxu0 0.0
        %942 = vmatmul.mubr.f32.gmra.mrb[0].mxu0 %v512
        %v943 = vpop.f32.mrb[0].mxu0
        %v944 = vadd.f32 %v805, %v943
        %v945 = vpop.f32.mrb[0].mxu0
        %946 = vmatprep.mubr.f32.mxu0 0.0
        %947 = vmatmul.mubr.f32.gmra.mrb[0].mxu0 %v513
        %v948 = vpop.f32.mrb[0].mxu0
        %v949 = vadd.f32 %v805, %v948
        %v950 = vpop.f32.mrb[0].mxu0
        %951 = vdwg.mxu0
        %952 = vmatprep.subr.mxu0 0.0
        %953 = vmatpush1.xpose.msra.mxu0 %v706
        %954 = vmatprep.subr.mxu0 0.0
        %955 = vmatpush1.xpose.msra.mxu0 %v711
        %956 = vmatprep.subr.mxu0 0.0
        %957 = vmatpush1.xpose.msra.mxu0 %v716
        %958 = vmatprep.subr.mxu0 0.0
        %959 = vmatpush1.xpose.msra.mxu0 %v721
        %960 = vmatprep.subr.mxu0 0.0
        %961 = vmatpush1.xpose.msra.mxu0 %v726
        %962 = vmatprep.subr.mxu0 0.0
        %963 = vmatpush1.xpose.msra.mxu0 %v731
        %964 = vmatprep.subr.mxu0 0.0
        %965 = vmatpush1.xpose.msra.mxu0 %v736
        %966 = vmatprep.subr.mxu0 0.0
        %967 = vmatpush1.xpose.msra.mxu0 %v741
        %968 = vmatprep.subr.mxu0 0.0
        %969 = vmatpush1.xpose.msra.mxu0 %v746
        %970 = vmatprep.subr.mxu0 0.0
        %971 = vmatpush1.xpose.msra.mxu0 %v751
        %972 = vmatprep.subr.mxu0 0.0
        %973 = vmatpush1.xpose.msra.mxu0 %v756
        %974 = vmatprep.subr.mxu0 0.0
        %975 = vmatpush1.xpose.msra.mxu0 %v761
        %976 = vmatprep.subr.mxu0 0.0
        %977 = vmatpush1.xpose.msra.mxu0 %v766
        %978 = vmatprep.subr.mxu0 0.0
        %979 = vmatpush1.xpose.msra.mxu0 %v771
        %980 = vmatprep.subr.mxu0 0.0
        %981 = vmatpush1.xpose.msra.mxu0 %v776
        %982 = vmatprep.subr.mxu0 0.0
        %983 = vmatpush1.xpose.msra.mxu0 %v781
        %984 = vmatprep.subr.mxu0 0.0
        %985 = vmatpush1.xpose.msra.mxu0 0.0
        %986 = vmatprep.subr.mxu0 0.0
        %987 = vmatpush1.xpose.msra.mxu0 0.0
        %988 = vmatprep.subr.mxu0 0.0
        %989 = vmatpush1.xpose.msra.mxu0 0.0
        %990 = vmatprep.subr.mxu0 0.0
        %991 = vmatpush1.xpose.msra.mxu0 0.0
        %992 = vmatprep.subr.mxu0 0.0
        %993 = vmatpush1.xpose.msra.mxu0 0.0
        %994 = vmatprep.subr.mxu0 0.0
        %995 = vmatpush1.xpose.msra.mxu0 0.0
        %996 = vmatprep.subr.mxu0 0.0
        %997 = vmatpush1.xpose.msra.mxu0 0.0
        %998 = vmatprep.subr.mxu0 0.0
        %999 = vmatpush1.xpose.msra.mxu0 0.0
        %1000 = vmatprep.subr.mxu0 0.0
        %1001 = vmatpush1.xpose.msra.mxu0 0.0
        %1002 = vmatprep.subr.mxu0 0.0
        %1003 = vmatpush1.xpose.msra.mxu0 0.0
        %1004 = vmatprep.subr.mxu0 0.0
        %1005 = vmatpush1.xpose.msra.mxu0 0.0
        %1006 = vmatprep.subr.mxu0 0.0
        %1007 = vmatpush1.xpose.msra.mxu0 0.0
        %1008 = vmatprep.subr.mxu0 0.0
        %1009 = vmatpush1.xpose.msra.mxu0 0.0
        %1010 = vmatprep.subr.mxu0 0.0
        %1011 = vmatpush1.xpose.msra.mxu0 0.0
        %1012 = vmatprep.subr.mxu0 0.0
        %1013 = vmatpush1.xpose.msra.mxu0 0.0
        %1014 = vmatprep.subr.mxu0 0.0
        %1015 = vmatpush1.xpose.msra.mxu0 0.0
        %1016 = vmatprep.mubr.f32.mxu0 0.0
        %1017 = vmatmul.mubr.f32.gmra.mrb[0].mxu0 %v608
        %v1018 = vpop.f32.mrb[0].mxu0
        %v1019 = vadd.f32 %v517, %v1018
        %v1020 = vpop.f32.mrb[0].mxu0
        %1021 = vmatprep.mubr.f32.mxu0 0.0
        %1022 = vmatmul.mubr.f32.gmra.mrb[0].mxu0 %v613
        %v1023 = vpop.f32.mrb[0].mxu0
        %v1024 = vadd.f32 %v517, %v1023
        %v1025 = vpop.f32.mrb[0].mxu0
        %1026 = vdwg.mxu0
        %1027 = vmax.xlane.f32.xlu0 %v1019
        %v1028 = vpop.xlane.xlu0 %1027
        %1029 = vmax.xlane.f32.xlu0 %v1024
        %v1030 = vpop.xlane.xlu0 %1029
        %v1031 = vsub.f32 %v1019, %v1028
        %v1032 = vsub.f32 %v1024, %v1030
        %v1033 = vmul.f32 %v1031, 1.442695
        %v1034 = vpow.pop %v1033
        %v1035 = vmul.f32 %v1032, 1.442695
        %v1036 = vpow.pop %v1035
        %1037 = vadd.xlane.f32.xlu0 %v1034
        %v1038 = vpop.xlane.xlu0 %1037
        %1039 = vadd.xlane.f32.xlu0 %v1036
        %v1040 = vpop.xlane.xlu0 %1039
        %v1041 = vrcp.pop %v1038
        %v1042 = vrcp.pop %v1040
        %v1043 = vmul.f32 %v1034, %v1041
        %v1044 = vmul.f32 %v1036, %v1042
        %1045 = vmatprep.subr.mxu0 0.0
        %1046 = vmatpush1.msra.mxu0 %v874
        %1047 = vmatprep.subr.mxu0 0.0
        %1048 = vmatpush1.msra.mxu0 %v879
        %1049 = vmatprep.subr.mxu0 0.0
        %1050 = vmatpush1.msra.mxu0 %v884
        %1051 = vmatprep.subr.mxu0 0.0
        %1052 = vmatpush1.msra.mxu0 %v889
        %1053 = vmatprep.subr.mxu0 0.0
        %1054 = vmatpush1.msra.mxu0 %v894
        %1055 = vmatprep.subr.mxu0 0.0
        %1056 = vmatpush1.msra.mxu0 %v899
        %1057 = vmatprep.subr.mxu0 0.0
        %1058 = vmatpush1.msra.mxu0 %v904
        %1059 = vmatprep.subr.mxu0 0.0
        %1060 = vmatpush1.msra.mxu0 %v909
        %1061 = vmatprep.subr.mxu0 0.0
        %1062 = vmatpush1.msra.mxu0 %v914
        %1063 = vmatprep.subr.mxu0 0.0
        %1064 = vmatpush1.msra.mxu0 %v919
        %1065 = vmatprep.subr.mxu0 0.0
        %1066 = vmatpush1.msra.mxu0 %v924
        %1067 = vmatprep.subr.mxu0 0.0
        %1068 = vmatpush1.msra.mxu0 %v929
        %1069 = vmatprep.subr.mxu0 0.0
        %1070 = vmatpush1.msra.mxu0 %v934
        %1071 = vmatprep.subr.mxu0 0.0
        %1072 = vmatpush1.msra.mxu0 %v939
        %1073 = vmatprep.subr.mxu0 0.0
        %1074 = vmatpush1.msra.mxu0 %v944
        %1075 = vmatprep.subr.mxu0 0.0
        %1076 = vmatpush1.msra.mxu0 %v949
        %1077 = vmatprep.subr.mxu0 0.0
        %1078 = vmatpush1.msra.mxu0 0.0
        %1079 = vmatprep.subr.mxu0 0.0
        %1080 = vmatpush1.msra.mxu0 0.0
        %1081 = vmatprep.subr.mxu0 0.0
        %1082 = vmatpush1.msra.mxu0 0.0
        %1083 = vmatprep.subr.mxu0 0.0
        %1084 = vmatpush1.msra.mxu0 0.0
        %1085 = vmatprep.subr.mxu0 0.0
        %1086 = vmatpush1.msra.mxu0 0.0
        %1087 = vmatprep.subr.mxu0 0.0
        %1088 = vmatpush1.msra.mxu0 0.0
        %1089 = vmatprep.subr.mxu0 0.0
        %1090 = vmatpush1.msra.mxu0 0.0
        %1091 = vmatprep.subr.mxu0 0.0
        %1092 = vmatpush1.msra.mxu0 0.0
        %1093 = vmatprep.subr.mxu0 0.0
        %1094 = vmatpush1.msra.mxu0 0.0
        %1095 = vmatprep.subr.mxu0 0.0
        %1096 = vmatpush1.msra.mxu0 0.0
        %1097 = vmatprep.subr.mxu0 0.0
        %1098 = vmatpush1.msra.mxu0 0.0
        %1099 = vmatprep.subr.mxu0 0.0
        %1100 = vmatpush1.msra.mxu0 0.0
        %1101 = vmatprep.subr.mxu0 0.0
        %1102 = vmatpush1.msra.mxu0 0.0
        %1103 = vmatprep.subr.mxu0 0.0
        %1104 = vmatpush1.msra.mxu0 0.0
        %1105 = vmatprep.subr.mxu0 0.0
        %1106 = vmatpush1.msra.mxu0 0.0
        %1107 = vmatprep.subr.mxu0 0.0
        %1108 = vmatpush1.msra.mxu0 0.0
        %1109 = vmatprep.mubr.f32.mxu0 0.0
        %1110 = vmatmul.mubr.f32.gmra.mrb[0].mxu0 %v1043
        %v1111 = vpop.f32.mrb[0].mxu0
        %v1112 = vadd.f32 0.0, %v1111
        %v1113 = vpop.f32.mrb[0].mxu0
        %1114 = vmatprep.mubr.f32.mxu0 0.0
        %1115 = vmatmul.mubr.f32.gmra.mrb[0].mxu0 %v1044
        %v1116 = vpop.f32.mrb[0].mxu0
        %v1117 = vadd.f32 0.0, %v1116
        %v1118 = vpop.f32.mrb[0].mxu0
        %1119 = vdwg.mxu0
        %v1120 = vld [vmem:[#allocation11] sm:$0xff]
        %v1121 = vld [vmem:[#allocation11 + $0x8] sm:$0xff]
        %v1122 = vld [vmem:[#allocation11 + $0x10] sm:$0xff]
        %v1123 = vld [vmem:[#allocation11 + $0x18] sm:$0xff]
        %v1124 = vld [vmem:[#allocation11 + $0x20] sm:$0xff]
        %v1125 = vld [vmem:[#allocation11 + $0x28] sm:$0xff]
        %v1126 = vld [vmem:[#allocation11 + $0x30] sm:$0xff]
        %v1127 = vld [vmem:[#allocation11 + $0x38] sm:$0xff]
        %v1128 = vld [vmem:[#allocation11 + $0x40] sm:$0xff]
        %v1129 = vld [vmem:[#allocation11 + $0x48] sm:$0xff]
        %v1130 = vld [vmem:[#allocation11 + $0x50] sm:$0xff]
        %v1131 = vld [vmem:[#allocation11 + $0x58] sm:$0xff]
        %v1132 = vld [vmem:[#allocation11 + $0x60] sm:$0xff]
        %v1133 = vld [vmem:[#allocation11 + $0x68] sm:$0xff]
        %v1134 = vld [vmem:[#allocation11 + $0x70] sm:$0xff]
        %v1135 = vld [vmem:[#allocation11 + $0x78] sm:$0xff]
        %s1136 = scalar_lea.vmem [#allocation7], 128
        %v1137 = vld [vmem:[%s1136] sm:$0xff]
        %v1138 = vld [vmem:[%s1136 + $0x8] sm:$0xff]
        %v1139 = vld [vmem:[%s1136 + $0x10] sm:$0xff]
        %v1140 = vld [vmem:[%s1136 + $0x18] sm:$0xff]
        %v1141 = vld [vmem:[%s1136 + $0x20] sm:$0xff]
        %v1142 = vld [vmem:[%s1136 + $0x28] sm:$0xff]
        %v1143 = vld [vmem:[%s1136 + $0x30] sm:$0xff]
        %v1144 = vld [vmem:[%s1136 + $0x38] sm:$0xff]
        %v1145 = vld [vmem:[%s1136 + $0x40] sm:$0xff]
        %v1146 = vld [vmem:[%s1136 + $0x48] sm:$0xff]
        %v1147 = vld [vmem:[%s1136 + $0x50] sm:$0xff]
        %v1148 = vld [vmem:[%s1136 + $0x58] sm:$0xff]
        %v1149 = vld [vmem:[%s1136 + $0x60] sm:$0xff]
        %v1150 = vld [vmem:[%s1136 + $0x68] sm:$0xff]
        %v1151 = vld [vmem:[%s1136 + $0x70] sm:$0xff]
        %v1152 = vld [vmem:[%s1136 + $0x78] sm:$0xff]
        %s1153 = scalar_lea.vmem %s3, 1
        %v1154 = vld [vmem:[%s1153] sm:$0x1]
        %v1156 = vlaneseq
        %v1157 = vshrl.u32 %v1156, 7
        %v1158 = vsub.s32 0, %v1157
        %v1159 = vrot.slane %v1154, %v1158
        %1161 = vmatprep.subr.mxu0 0.0
        %1162 = vmatpush1.msra.mxu0 %v1137
        %1163 = vmatprep.subr.mxu0 0.0
        %1164 = vmatpush1.msra.mxu0 %v1138
        %1165 = vmatprep.subr.mxu0 0.0
        %1166 = vmatpush1.msra.mxu0 %v1139
        %1167 = vmatprep.subr.mxu0 0.0
        %1168 = vmatpush1.msra.mxu0 %v1140
        %1169 = vmatprep.subr.mxu0 0.0
        %1170 = vmatpush1.msra.mxu0 %v1141
        %1171 = vmatprep.subr.mxu0 0.0
        %1172 = vmatpush1.msra.mxu0 %v1142
        %1173 = vmatprep.subr.mxu0 0.0
        %1174 = vmatpush1.msra.mxu0 %v1143
        %1175 = vmatprep.subr.mxu0 0.0
        %1176 = vmatpush1.msra.mxu0 %v1144
        %1177 = vmatprep.subr.mxu0 0.0
        %1178 = vmatpush1.msra.mxu0 %v1145
        %1179 = vmatprep.subr.mxu0 0.0
        %1180 = vmatpush1.msra.mxu0 %v1146
        %1181 = vmatprep.subr.mxu0 0.0
        %1182 = vmatpush1.msra.mxu0 %v1147
        %1183 = vmatprep.subr.mxu0 0.0
        %1184 = vmatpush1.msra.mxu0 %v1148
        %1185 = vmatprep.subr.mxu0 0.0
        %1186 = vmatpush1.msra.mxu0 %v1149
        %1187 = vmatprep.subr.mxu0 0.0
        %1188 = vmatpush1.msra.mxu0 %v1150
        %1189 = vmatprep.subr.mxu0 0.0
        %1190 = vmatpush1.msra.mxu0 %v1151
        %1191 = vmatprep.subr.mxu0 0.0
        %1192 = vmatpush1.msra.mxu0 %v1152
        %1193 = vmatprep.subr.mxu0 0.0
        %1194 = vmatpush1.msra.mxu0 0.0
        %1195 = vmatprep.subr.mxu0 0.0
        %1196 = vmatpush1.msra.mxu0 0.0
        %1197 = vmatprep.subr.mxu0 0.0
        %1198 = vmatpush1.msra.mxu0 0.0
        %1199 = vmatprep.subr.mxu0 0.0
        %1200 = vmatpush1.msra.mxu0 0.0
        %1201 = vmatprep.subr.mxu0 0.0
        %1202 = vmatpush1.msra.mxu0 0.0
        %1203 = vmatprep.subr.mxu0 0.0
        %1204 = vmatpush1.msra.mxu0 0.0
        %1205 = vmatprep.subr.mxu0 0.0
        %1206 = vmatpush1.msra.mxu0 0.0
        %1207 = vmatprep.subr.mxu0 0.0
        %1208 = vmatpush1.msra.mxu0 0.0
        %1209 = vmatprep.subr.mxu0 0.0
        %1210 = vmatpush1.msra.mxu0 0.0
        %1211 = vmatprep.subr.mxu0 0.0
        %1212 = vmatpush1.msra.mxu0 0.0
        %1213 = vmatprep.subr.mxu0 0.0
        %1214 = vmatpush1.msra.mxu0 0.0
        %1215 = vmatprep.subr.mxu0 0.0
        %1216 = vmatpush1.msra.mxu0 0.0
        %1217 = vmatprep.subr.mxu0 0.0
        %1218 = vmatpush1.msra.mxu0 0.0
        %1219 = vmatprep.subr.mxu0 0.0
        %1220 = vmatpush1.msra.mxu0 0.0
        %1221 = vmatprep.subr.mxu0 0.0
        %1222 = vmatpush1.msra.mxu0 0.0
        %1223 = vmatprep.subr.mxu0 0.0
        %1224 = vmatpush1.msra.mxu0 0.0
        %1225 = vmatprep.mubr.f32.mxu0 0.0
        %1226 = vmatmul.mubr.f32.gmra.mrb[0].mxu0 %v496
        %v1227 = vpop.f32.mrb[0].mxu0
        %v1228 = vadd.f32 %v1159, %v1227
        %v1229 = vpop.f32.mrb[0].mxu0
        %1230 = vmatprep.mubr.f32.mxu0 0.0
        %1231 = vmatmul.mubr.f32.gmra.mrb[0].mxu0 %v497
        %v1232 = vpop.f32.mrb[0].mxu0
        %v1233 = vadd.f32 %v1159, %v1232
        %v1234 = vpop.f32.mrb[0].mxu0
        %1235 = vdwg.mxu0
        %s1236 = scalar_lea.vmem [#allocation8], 128
        %v1237 = vld [vmem:[%s1236] sm:$0xff]
        %v1238 = vld [vmem:[%s1236 + $0x8] sm:$0xff]
        %v1239 = vld [vmem:[%s1236 + $0x10] sm:$0xff]
        %v1240 = vld [vmem:[%s1236 + $0x18] sm:$0xff]
        %v1241 = vld [vmem:[%s1236 + $0x20] sm:$0xff]
        %v1242 = vld [vmem:[%s1236 + $0x28] sm:$0xff]
        %v1243 = vld [vmem:[%s1236 + $0x30] sm:$0xff]
        %v1244 = vld [vmem:[%s1236 + $0x38] sm:$0xff]
        %v1245 = vld [vmem:[%s1236 + $0x40] sm:$0xff]
        %v1246 = vld [vmem:[%s1236 + $0x48] sm:$0xff]
        %v1247 = vld [vmem:[%s1236 + $0x50] sm:$0xff]
        %v1248 = vld [vmem:[%s1236 + $0x58] sm:$0xff]
        %v1249 = vld [vmem:[%s1236 + $0x60] sm:$0xff]
        %v1250 = vld [vmem:[%s1236 + $0x68] sm:$0xff]
        %v1251 = vld [vmem:[%s1236 + $0x70] sm:$0xff]
        %v1252 = vld [vmem:[%s1236 + $0x78] sm:$0xff]
        %s1253 = scalar_lea.vmem %s5, 1
        %v1254 = vld [vmem:[%s1253] sm:$0x1]
        %v1256 = vlaneseq
        %v1257 = vshrl.u32 %v1256, 7
        %v1258 = vsub.s32 0, %v1257
        %v1259 = vrot.slane %v1254, %v1258
        %1261 = vmatprep.subr.mxu0 0.0
        %1262 = vmatpush1.msra.mxu0 %v1237
        %1263 = vmatprep.subr.mxu0 0.0
        %1264 = vmatpush1.msra.mxu0 %v1238
        %1265 = vmatprep.subr.mxu0 0.0
        %1266 = vmatpush1.msra.mxu0 %v1239
        %1267 = vmatprep.subr.mxu0 0.0
        %1268 = vmatpush1.msra.mxu0 %v1240
        %1269 = vmatprep.subr.mxu0 0.0
        %1270 = vmatpush1.msra.mxu0 %v1241
        %1271 = vmatprep.subr.mxu0 0.0
        %1272 = vmatpush1.msra.mxu0 %v1242
        %1273 = vmatprep.subr.mxu0 0.0
        %1274 = vmatpush1.msra.mxu0 %v1243
        %1275 = vmatprep.subr.mxu0 0.0
        %1276 = vmatpush1.msra.mxu0 %v1244
        %1277 = vmatprep.subr.mxu0 0.0
        %1278 = vmatpush1.msra.mxu0 %v1245
        %1279 = vmatprep.subr.mxu0 0.0
        %1280 = vmatpush1.msra.mxu0 %v1246
        %1281 = vmatprep.subr.mxu0 0.0
        %1282 = vmatpush1.msra.mxu0 %v1247
        %1283 = vmatprep.subr.mxu0 0.0
        %1284 = vmatpush1.msra.mxu0 %v1248
        %1285 = vmatprep.subr.mxu0 0.0
        %1286 = vmatpush1.msra.mxu0 %v1249
        %1287 = vmatprep.subr.mxu0 0.0
        %1288 = vmatpush1.msra.mxu0 %v1250
        %1289 = vmatprep.subr.mxu0 0.0
        %1290 = vmatpush1.msra.mxu0 %v1251
        %1291 = vmatprep.subr.mxu0 0.0
        %1292 = vmatpush1.msra.mxu0 %v1252
        %1293 = vmatprep.subr.mxu0 0.0
        %1294 = vmatpush1.msra.mxu0 0.0
        %1295 = vmatprep.subr.mxu0 0.0
        %1296 = vmatpush1.msra.mxu0 0.0
        %1297 = vmatprep.subr.mxu0 0.0
        %1298 = vmatpush1.msra.mxu0 0.0
        %1299 = vmatprep.subr.mxu0 0.0
        %1300 = vmatpush1.msra.mxu0 0.0
        %1301 = vmatprep.subr.mxu0 0.0
        %1302 = vmatpush1.msra.mxu0 0.0
        %1303 = vmatprep.subr.mxu0 0.0
        %1304 = vmatpush1.msra.mxu0 0.0
        %1305 = vmatprep.subr.mxu0 0.0
        %1306 = vmatpush1.msra.mxu0 0.0
        %1307 = vmatprep.subr.mxu0 0.0
        %1308 = vmatpush1.msra.mxu0 0.0
        %1309 = vmatprep.subr.mxu0 0.0
        %1310 = vmatpush1.msra.mxu0 0.0
        %1311 = vmatprep.subr.mxu0 0.0
        %1312 = vmatpush1.msra.mxu0 0.0
        %1313 = vmatprep.subr.mxu0 0.0
        %1314 = vmatpush1.msra.mxu0 0.0
        %1315 = vmatprep.subr.mxu0 0.0
        %1316 = vmatpush1.msra.mxu0 0.0
        %1317 = vmatprep.subr.mxu0 0.0
        %1318 = vmatpush1.msra.mxu0 0.0
        %1319 = vmatprep.subr.mxu0 0.0
        %1320 = vmatpush1.msra.mxu0 0.0
        %1321 = vmatprep.subr.mxu0 0.0
        %1322 = vmatpush1.msra.mxu0 0.0
        %1323 = vmatprep.subr.mxu0 0.0
        %1324 = vmatpush1.msra.mxu0 0.0
        %1325 = vmatprep.mubr.f32.mxu0 0.0
        %1326 = vmatmul.mubr.f32.gmra.mrb[0].mxu0 %v498
        %v1327 = vpop.f32.mrb[0].mxu0
        %v1328 = vadd.f32 %v1259, %v1327
        %v1329 = vpop.f32.mrb[0].mxu0
        %1330 = vmatprep.mubr.f32.mxu0 0.0
        %1331 = vmatmul.mubr.f32.gmra.mrb[0].mxu0 %v499
        %v1332 = vpop.f32.mrb[0].mxu0
        %v1333 = vadd.f32 %v1259, %v1332
        %v1334 = vpop.f32.mrb[0].mxu0
        %1335 = vmatprep.mubr.f32.mxu0 0.0
        %1336 = vmatmul.mubr.f32.gmra.mrb[0].mxu0 %v500
        %v1337 = vpop.f32.mrb[0].mxu0
        %v1338 = vadd.f32 %v1259, %v1337
        %v1339 = vpop.f32.mrb[0].mxu0
        %1340 = vmatprep.mubr.f32.mxu0 0.0
        %1341 = vmatmul.mubr.f32.gmra.mrb[0].mxu0 %v501
        %v1342 = vpop.f32.mrb[0].mxu0
        %v1343 = vadd.f32 %v1259, %v1342
        %v1344 = vpop.f32.mrb[0].mxu0
        %1345 = vmatprep.mubr.f32.mxu0 0.0
        %1346 = vmatmul.mubr.f32.gmra.mrb[0].mxu0 %v502
        %v1347 = vpop.f32.mrb[0].mxu0
        %v1348 = vadd.f32 %v1259, %v1347
        %v1349 = vpop.f32.mrb[0].mxu0
        %1350 = vmatprep.mubr.f32.mxu0 0.0
        %1351 = vmatmul.mubr.f32.gmra.mrb[0].mxu0 %v503
        %v1352 = vpop.f32.mrb[0].mxu0
        %v1353 = vadd.f32 %v1259, %v1352
        %v1354 = vpop.f32.mrb[0].mxu0
        %1355 = vmatprep.mubr.f32.mxu0 0.0
        %1356 = vmatmul.mubr.f32.gmra.mrb[0].mxu0 %v504
        %v1357 = vpop.f32.mrb[0].mxu0
        %v1358 = vadd.f32 %v1259, %v1357
        %v1359 = vpop.f32.mrb[0].mxu0
        %1360 = vmatprep.mubr.f32.mxu0 0.0
        %1361 = vmatmul.mubr.f32.gmra.mrb[0].mxu0 %v505
        %v1362 = vpop.f32.mrb[0].mxu0
        %v1363 = vadd.f32 %v1259, %v1362
        %v1364 = vpop.f32.mrb[0].mxu0
        %1365 = vmatprep.mubr.f32.mxu0 0.0
        %1366 = vmatmul.mubr.f32.gmra.mrb[0].mxu0 %v506
        %v1367 = vpop.f32.mrb[0].mxu0
        %v1368 = vadd.f32 %v1259, %v1367
        %v1369 = vpop.f32.mrb[0].mxu0
        %1370 = vmatprep.mubr.f32.mxu0 0.0
        %1371 = vmatmul.mubr.f32.gmra.mrb[0].mxu0 %v507
        %v1372 = vpop.f32.mrb[0].mxu0
        %v1373 = vadd.f32 %v1259, %v1372
        %v1374 = vpop.f32.mrb[0].mxu0
        %1375 = vmatprep.mubr.f32.mxu0 0.0
        %1376 = vmatmul.mubr.f32.gmra.mrb[0].mxu0 %v508
        %v1377 = vpop.f32.mrb[0].mxu0
        %v1378 = vadd.f32 %v1259, %v1377
        %v1379 = vpop.f32.mrb[0].mxu0
        %1380 = vmatprep.mubr.f32.mxu0 0.0
        %1381 = vmatmul.mubr.f32.gmra.mrb[0].mxu0 %v509
        %v1382 = vpop.f32.mrb[0].mxu0
        %v1383 = vadd.f32 %v1259, %v1382
        %v1384 = vpop.f32.mrb[0].mxu0
        %1385 = vmatprep.mubr.f32.mxu0 0.0
        %1386 = vmatmul.mubr.f32.gmra.mrb[0].mxu0 %v510
        %v1387 = vpop.f32.mrb[0].mxu0
        %v1388 = vadd.f32 %v1259, %v1387
        %v1389 = vpop.f32.mrb[0].mxu0
        %1390 = vmatprep.mubr.f32.mxu0 0.0
        %1391 = vmatmul.mubr.f32.gmra.mrb[0].mxu0 %v511
        %v1392 = vpop.f32.mrb[0].mxu0
        %v1393 = vadd.f32 %v1259, %v1392
        %v1394 = vpop.f32.mrb[0].mxu0
        %1395 = vmatprep.mubr.f32.mxu0 0.0
        %1396 = vmatmul.mubr.f32.gmra.mrb[0].mxu0 %v512
        %v1397 = vpop.f32.mrb[0].mxu0
        %v1398 = vadd.f32 %v1259, %v1397
        %v1399 = vpop.f32.mrb[0].mxu0
        %1400 = vmatprep.mubr.f32.mxu0 0.0
        %1401 = vmatmul.mubr.f32.gmra.mrb[0].mxu0 %v513
        %v1402 = vpop.f32.mrb[0].mxu0
        %v1403 = vadd.f32 %v1259, %v1402
        %v1404 = vpop.f32.mrb[0].mxu0
        %1405 = vdwg.mxu0
        %s1406 = scalar_lea.vmem [#allocation10], 128
        %v1407 = vld [vmem:[%s1406] sm:$0xff]
        %v1408 = vld [vmem:[%s1406 + $0x8] sm:$0xff]
        %v1409 = vld [vmem:[%s1406 + $0x10] sm:$0xff]
        %v1410 = vld [vmem:[%s1406 + $0x18] sm:$0xff]
        %v1411 = vld [vmem:[%s1406 + $0x20] sm:$0xff]
        %v1412 = vld [vmem:[%s1406 + $0x28] sm:$0xff]
        %v1413 = vld [vmem:[%s1406 + $0x30] sm:$0xff]
        %v1414 = vld [vmem:[%s1406 + $0x38] sm:$0xff]
        %v1415 = vld [vmem:[%s1406 + $0x40] sm:$0xff]
        %v1416 = vld [vmem:[%s1406 + $0x48] sm:$0xff]
        %v1417 = vld [vmem:[%s1406 + $0x50] sm:$0xff]
        %v1418 = vld [vmem:[%s1406 + $0x58] sm:$0xff]
        %v1419 = vld [vmem:[%s1406 + $0x60] sm:$0xff]
        %v1420 = vld [vmem:[%s1406 + $0x68] sm:$0xff]
        %v1421 = vld [vmem:[%s1406 + $0x70] sm:$0xff]
        %v1422 = vld [vmem:[%s1406 + $0x78] sm:$0xff]
        %s1423 = scalar_lea.vmem %s7, 1
        %v1424 = vld [vmem:[%s1423] sm:$0x1]
        %v1426 = vlaneseq
        %v1427 = vshrl.u32 %v1426, 7
        %v1428 = vsub.s32 0, %v1427
        %v1429 = vrot.slane %v1424, %v1428
        %1431 = vmatprep.subr.mxu0 0.0
        %1432 = vmatpush1.msra.mxu0 %v1407
        %1433 = vmatprep.subr.mxu0 0.0
        %1434 = vmatpush1.msra.mxu0 %v1408
        %1435 = vmatprep.subr.mxu0 0.0
        %1436 = vmatpush1.msra.mxu0 %v1409
        %1437 = vmatprep.subr.mxu0 0.0
        %1438 = vmatpush1.msra.mxu0 %v1410
        %1439 = vmatprep.subr.mxu0 0.0
        %1440 = vmatpush1.msra.mxu0 %v1411
        %1441 = vmatprep.subr.mxu0 0.0
        %1442 = vmatpush1.msra.mxu0 %v1412
        %1443 = vmatprep.subr.mxu0 0.0
        %1444 = vmatpush1.msra.mxu0 %v1413
        %1445 = vmatprep.subr.mxu0 0.0
        %1446 = vmatpush1.msra.mxu0 %v1414
        %1447 = vmatprep.subr.mxu0 0.0
        %1448 = vmatpush1.msra.mxu0 %v1415
        %1449 = vmatprep.subr.mxu0 0.0
        %1450 = vmatpush1.msra.mxu0 %v1416
        %1451 = vmatprep.subr.mxu0 0.0
        %1452 = vmatpush1.msra.mxu0 %v1417
        %1453 = vmatprep.subr.mxu0 0.0
        %1454 = vmatpush1.msra.mxu0 %v1418
        %1455 = vmatprep.subr.mxu0 0.0
        %1456 = vmatpush1.msra.mxu0 %v1419
        %1457 = vmatprep.subr.mxu0 0.0
        %1458 = vmatpush1.msra.mxu0 %v1420
        %1459 = vmatprep.subr.mxu0 0.0
        %1460 = vmatpush1.msra.mxu0 %v1421
        %1461 = vmatprep.subr.mxu0 0.0
        %1462 = vmatpush1.msra.mxu0 %v1422
        %1463 = vmatprep.subr.mxu0 0.0
        %1464 = vmatpush1.msra.mxu0 0.0
        %1465 = vmatprep.subr.mxu0 0.0
        %1466 = vmatpush1.msra.mxu0 0.0
        %1467 = vmatprep.subr.mxu0 0.0
        %1468 = vmatpush1.msra.mxu0 0.0
        %1469 = vmatprep.subr.mxu0 0.0
        %1470 = vmatpush1.msra.mxu0 0.0
        %1471 = vmatprep.subr.mxu0 0.0
        %1472 = vmatpush1.msra.mxu0 0.0
        %1473 = vmatprep.subr.mxu0 0.0
        %1474 = vmatpush1.msra.mxu0 0.0
        %1475 = vmatprep.subr.mxu0 0.0
        %1476 = vmatpush1.msra.mxu0 0.0
        %1477 = vmatprep.subr.mxu0 0.0
        %1478 = vmatpush1.msra.mxu0 0.0
        %1479 = vmatprep.subr.mxu0 0.0
        %1480 = vmatpush1.msra.mxu0 0.0
        %1481 = vmatprep.subr.mxu0 0.0
        %1482 = vmatpush1.msra.mxu0 0.0
        %1483 = vmatprep.subr.mxu0 0.0
        %1484 = vmatpush1.msra.mxu0 0.0
        %1485 = vmatprep.subr.mxu0 0.0
        %1486 = vmatpush1.msra.mxu0 0.0
        %1487 = vmatprep.subr.mxu0 0.0
        %1488 = vmatpush1.msra.mxu0 0.0
        %1489 = vmatprep.subr.mxu0 0.0
        %1490 = vmatpush1.msra.mxu0 0.0
        %1491 = vmatprep.subr.mxu0 0.0
        %1492 = vmatpush1.msra.mxu0 0.0
        %1493 = vmatprep.subr.mxu0 0.0
        %1494 = vmatpush1.msra.mxu0 0.0
        %1495 = vmatprep.mubr.f32.mxu0 0.0
        %1496 = vmatmul.mubr.f32.gmra.mrb[0].mxu0 %v498
        %v1497 = vpop.f32.mrb[0].mxu0
        %v1498 = vadd.f32 %v1429, %v1497
        %v1499 = vpop.f32.mrb[0].mxu0
        %1500 = vmatprep.mubr.f32.mxu0 0.0
        %1501 = vmatmul.mubr.f32.gmra.mrb[0].mxu0 %v499
        %v1502 = vpop.f32.mrb[0].mxu0
        %v1503 = vadd.f32 %v1429, %v1502
        %v1504 = vpop.f32.mrb[0].mxu0
        %1505 = vmatprep.mubr.f32.mxu0 0.0
        %1506 = vmatmul.mubr.f32.gmra.mrb[0].mxu0 %v500
        %v1507 = vpop.f32.mrb[0].mxu0
        %v1508 = vadd.f32 %v1429, %v1507
        %v1509 = vpop.f32.mrb[0].mxu0
        %1510 = vmatprep.mubr.f32.mxu0 0.0
        %1511 = vmatmul.mubr.f32.gmra.mrb[0].mxu0 %v501
        %v1512 = vpop.f32.mrb[0].mxu0
        %v1513 = vadd.f32 %v1429, %v1512
        %v1514 = vpop.f32.mrb[0].mxu0
        %1515 = vmatprep.mubr.f32.mxu0 0.0
        %1516 = vmatmul.mubr.f32.gmra.mrb[0].mxu0 %v502
        %v1517 = vpop.f32.mrb[0].mxu0
        %v1518 = vadd.f32 %v1429, %v1517
        %v1519 = vpop.f32.mrb[0].mxu0
        %1520 = vmatprep.mubr.f32.mxu0 0.0
        %1521 = vmatmul.mubr.f32.gmra.mrb[0].mxu0 %v503
        %v1522 = vpop.f32.mrb[0].mxu0
        %v1523 = vadd.f32 %v1429, %v1522
        %v1524 = vpop.f32.mrb[0].mxu0
        %1525 = vmatprep.mubr.f32.mxu0 0.0
        %1526 = vmatmul.mubr.f32.gmra.mrb[0].mxu0 %v504
        %v1527 = vpop.f32.mrb[0].mxu0
        %v1528 = vadd.f32 %v1429, %v1527
        %v1529 = vpop.f32.mrb[0].mxu0
        %1530 = vmatprep.mubr.f32.mxu0 0.0
        %1531 = vmatmul.mubr.f32.gmra.mrb[0].mxu0 %v505
        %v1532 = vpop.f32.mrb[0].mxu0
        %v1533 = vadd.f32 %v1429, %v1532
        %v1534 = vpop.f32.mrb[0].mxu0
        %1535 = vmatprep.mubr.f32.mxu0 0.0
        %1536 = vmatmul.mubr.f32.gmra.mrb[0].mxu0 %v506
        %v1537 = vpop.f32.mrb[0].mxu0
        %v1538 = vadd.f32 %v1429, %v1537
        %v1539 = vpop.f32.mrb[0].mxu0
        %1540 = vmatprep.mubr.f32.mxu0 0.0
        %1541 = vmatmul.mubr.f32.gmra.mrb[0].mxu0 %v507
        %v1542 = vpop.f32.mrb[0].mxu0
        %v1543 = vadd.f32 %v1429, %v1542
        %v1544 = vpop.f32.mrb[0].mxu0
        %1545 = vmatprep.mubr.f32.mxu0 0.0
        %1546 = vmatmul.mubr.f32.gmra.mrb[0].mxu0 %v508
        %v1547 = vpop.f32.mrb[0].mxu0
        %v1548 = vadd.f32 %v1429, %v1547
        %v1549 = vpop.f32.mrb[0].mxu0
        %1550 = vmatprep.mubr.f32.mxu0 0.0
        %1551 = vmatmul.mubr.f32.gmra.mrb[0].mxu0 %v509
        %v1552 = vpop.f32.mrb[0].mxu0
        %v1553 = vadd.f32 %v1429, %v1552
        %v1554 = vpop.f32.mrb[0].mxu0
        %1555 = vmatprep.mubr.f32.mxu0 0.0
        %1556 = vmatmul.mubr.f32.gmra.mrb[0].mxu0 %v510
        %v1557 = vpop.f32.mrb[0].mxu0
        %v1558 = vadd.f32 %v1429, %v1557
        %v1559 = vpop.f32.mrb[0].mxu0
        %1560 = vmatprep.mubr.f32.mxu0 0.0
        %1561 = vmatmul.mubr.f32.gmra.mrb[0].mxu0 %v511
        %v1562 = vpop.f32.mrb[0].mxu0
        %v1563 = vadd.f32 %v1429, %v1562
        %v1564 = vpop.f32.mrb[0].mxu0
        %1565 = vmatprep.mubr.f32.mxu0 0.0
        %1566 = vmatmul.mubr.f32.gmra.mrb[0].mxu0 %v512
        %v1567 = vpop.f32.mrb[0].mxu0
        %v1568 = vadd.f32 %v1429, %v1567
        %v1569 = vpop.f32.mrb[0].mxu0
        %1570 = vmatprep.mubr.f32.mxu0 0.0
        %1571 = vmatmul.mubr.f32.gmra.mrb[0].mxu0 %v513
        %v1572 = vpop.f32.mrb[0].mxu0
        %v1573 = vadd.f32 %v1429, %v1572
        %v1574 = vpop.f32.mrb[0].mxu0
        %1575 = vdwg.mxu0
        %1576 = vmatprep.subr.mxu0 0.0
        %1577 = vmatpush1.xpose.msra.mxu0 %v1328
        %1578 = vmatprep.subr.mxu0 0.0
        %1579 = vmatpush1.xpose.msra.mxu0 %v1333
        %1580 = vmatprep.subr.mxu0 0.0
        %1581 = vmatpush1.xpose.msra.mxu0 %v1338
        %1582 = vmatprep.subr.mxu0 0.0
        %1583 = vmatpush1.xpose.msra.mxu0 %v1343
        %1584 = vmatprep.subr.mxu0 0.0
        %1585 = vmatpush1.xpose.msra.mxu0 %v1348
        %1586 = vmatprep.subr.mxu0 0.0
        %1587 = vmatpush1.xpose.msra.mxu0 %v1353
        %1588 = vmatprep.subr.mxu0 0.0
        %1589 = vmatpush1.xpose.msra.mxu0 %v1358
        %1590 = vmatprep.subr.mxu0 0.0
        %1591 = vmatpush1.xpose.msra.mxu0 %v1363
        %1592 = vmatprep.subr.mxu0 0.0
        %1593 = vmatpush1.xpose.msra.mxu0 %v1368
        %1594 = vmatprep.subr.mxu0 0.0
        %1595 = vmatpush1.xpose.msra.mxu0 %v1373
        %1596 = vmatprep.subr.mxu0 0.0
        %1597 = vmatpush1.xpose.msra.mxu0 %v1378
        %1598 = vmatprep.subr.mxu0 0.0
        %1599 = vmatpush1.xpose.msra.mxu0 %v1383
        %1600 = vmatprep.subr.mxu0 0.0
        %1601 = vmatpush1.xpose.msra.mxu0 %v1388
        %1602 = vmatprep.subr.mxu0 0.0
        %1603 = vmatpush1.xpose.msra.mxu0 %v1393
        %1604 = vmatprep.subr.mxu0 0.0
        %1605 = vmatpush1.xpose.msra.mxu0 %v1398
        %1606 = vmatprep.subr.mxu0 0.0
        %1607 = vmatpush1.xpose.msra.mxu0 %v1403
        %1608 = vmatprep.subr.mxu0 0.0
        %1609 = vmatpush1.xpose.msra.mxu0 0.0
        %1610 = vmatprep.subr.mxu0 0.0
        %1611 = vmatpush1.xpose.msra.mxu0 0.0
        %1612 = vmatprep.subr.mxu0 0.0
        %1613 = vmatpush1.xpose.msra.mxu0 0.0
        %1614 = vmatprep.subr.mxu0 0.0
        %1615 = vmatpush1.xpose.msra.mxu0 0.0
        %1616 = vmatprep.subr.mxu0 0.0
        %1617 = vmatpush1.xpose.msra.mxu0 0.0
        %1618 = vmatprep.subr.mxu0 0.0
        %1619 = vmatpush1.xpose.msra.mxu0 0.0
        %1620 = vmatprep.subr.mxu0 0.0
        %1621 = vmatpush1.xpose.msra.mxu0 0.0
        %1622 = vmatprep.subr.mxu0 0.0
        %1623 = vmatpush1.xpose.msra.mxu0 0.0
        %1624 = vmatprep.subr.mxu0 0.0
        %1625 = vmatpush1.xpose.msra.mxu0 0.0
        %1626 = vmatprep.subr.mxu0 0.0
        %1627 = vmatpush1.xpose.msra.mxu0 0.0
        %1628 = vmatprep.subr.mxu0 0.0
        %1629 = vmatpush1.xpose.msra.mxu0 0.0
        %1630 = vmatprep.subr.mxu0 0.0
        %1631 = vmatpush1.xpose.msra.mxu0 0.0
        %1632 = vmatprep.subr.mxu0 0.0
        %1633 = vmatpush1.xpose.msra.mxu0 0.0
        %1634 = vmatprep.subr.mxu0 0.0
        %1635 = vmatpush1.xpose.msra.mxu0 0.0
        %1636 = vmatprep.subr.mxu0 0.0
        %1637 = vmatpush1.xpose.msra.mxu0 0.0
        %1638 = vmatprep.subr.mxu0 0.0
        %1639 = vmatpush1.xpose.msra.mxu0 0.0
        %1640 = vmatprep.mubr.f32.mxu0 0.0
        %1641 = vmatmul.mubr.f32.gmra.mrb[0].mxu0 %v1228
        %v1642 = vpop.f32.mrb[0].mxu0
        %v1643 = vadd.f32 %v517, %v1642
        %v1644 = vpop.f32.mrb[0].mxu0
        %1645 = vmatprep.mubr.f32.mxu0 0.0
        %1646 = vmatmul.mubr.f32.gmra.mrb[0].mxu0 %v1233
        %v1647 = vpop.f32.mrb[0].mxu0
        %v1648 = vadd.f32 %v517, %v1647
        %v1649 = vpop.f32.mrb[0].mxu0
        %1650 = vdwg.mxu0
        %1651 = vmax.xlane.f32.xlu0 %v1643
        %v1652 = vpop.xlane.xlu0 %1651
        %1653 = vmax.xlane.f32.xlu0 %v1648
        %v1654 = vpop.xlane.xlu0 %1653
        %v1655 = vsub.f32 %v1643, %v1652
        %v1656 = vsub.f32 %v1648, %v1654
        %v1657 = vmul.f32 %v1655, 1.442695
        %v1658 = vpow.pop %v1657
        %v1659 = vmul.f32 %v1656, 1.442695
        %v1660 = vpow.pop %v1659
        %1661 = vadd.xlane.f32.xlu0 %v1658
        %v1662 = vpop.xlane.xlu0 %1661
        %1663 = vadd.xlane.f32.xlu0 %v1660
        %v1664 = vpop.xlane.xlu0 %1663
        %v1665 = vrcp.pop %v1662
        %v1666 = vrcp.pop %v1664
        %v1667 = vmul.f32 %v1658, %v1665
        %v1668 = vmul.f32 %v1660, %v1666
        %1669 = vmatprep.subr.mxu0 0.0
        %1670 = vmatpush1.msra.mxu0 %v1498
        %1671 = vmatprep.subr.mxu0 0.0
        %1672 = vmatpush1.msra.mxu0 %v1503
        %1673 = vmatprep.subr.mxu0 0.0
        %1674 = vmatpush1.msra.mxu0 %v1508
        %1675 = vmatprep.subr.mxu0 0.0
        %1676 = vmatpush1.msra.mxu0 %v1513
        %1677 = vmatprep.subr.mxu0 0.0
        %1678 = vmatpush1.msra.mxu0 %v1518
        %1679 = vmatprep.subr.mxu0 0.0
        %1680 = vmatpush1.msra.mxu0 %v1523
        %1681 = vmatprep.subr.mxu0 0.0
        %1682 = vmatpush1.msra.mxu0 %v1528
        %1683 = vmatprep.subr.mxu0 0.0
        %1684 = vmatpush1.msra.mxu0 %v1533
        %1685 = vmatprep.subr.mxu0 0.0
        %1686 = vmatpush1.msra.mxu0 %v1538
        %1687 = vmatprep.subr.mxu0 0.0
        %1688 = vmatpush1.msra.mxu0 %v1543
        %1689 = vmatprep.subr.mxu0 0.0
        %1690 = vmatpush1.msra.mxu0 %v1548
        %1691 = vmatprep.subr.mxu0 0.0
        %1692 = vmatpush1.msra.mxu0 %v1553
        %1693 = vmatprep.subr.mxu0 0.0
        %1694 = vmatpush1.msra.mxu0 %v1558
        %1695 = vmatprep.subr.mxu0 0.0
        %1696 = vmatpush1.msra.mxu0 %v1563
        %1697 = vmatprep.subr.mxu0 0.0
        %1698 = vmatpush1.msra.mxu0 %v1568
        %1699 = vmatprep.subr.mxu0 0.0
        %1700 = vmatpush1.msra.mxu0 %v1573
        %1701 = vmatprep.subr.mxu0 0.0
        %1702 = vmatpush1.msra.mxu0 0.0
        %1703 = vmatprep.subr.mxu0 0.0
        %1704 = vmatpush1.msra.mxu0 0.0
        %1705 = vmatprep.subr.mxu0 0.0
        %1706 = vmatpush1.msra.mxu0 0.0
        %1707 = vmatprep.subr.mxu0 0.0
        %1708 = vmatpush1.msra.mxu0 0.0
        %1709 = vmatprep.subr.mxu0 0.0
        %1710 = vmatpush1.msra.mxu0 0.0
        %1711 = vmatprep.subr.mxu0 0.0
        %1712 = vmatpush1.msra.mxu0 0.0
        %1713 = vmatprep.subr.mxu0 0.0
        %1714 = vmatpush1.msra.mxu0 0.0
        %1715 = vmatprep.subr.mxu0 0.0
        %1716 = vmatpush1.msra.mxu0 0.0
        %1717 = vmatprep.subr.mxu0 0.0
        %1718 = vmatpush1.msra.mxu0 0.0
        %1719 = vmatprep.subr.mxu0 0.0
        %1720 = vmatpush1.msra.mxu0 0.0
        %1721 = vmatprep.subr.mxu0 0.0
        %1722 = vmatpush1.msra.mxu0 0.0
        %1723 = vmatprep.subr.mxu0 0.0
        %1724 = vmatpush1.msra.mxu0 0.0
        %1725 = vmatprep.subr.mxu0 0.0
        %1726 = vmatpush1.msra.mxu0 0.0
        %1727 = vmatprep.subr.mxu0 0.0
        %1728 = vmatpush1.msra.mxu0 0.0
        %1729 = vmatprep.subr.mxu0 0.0
        %1730 = vmatpush1.msra.mxu0 0.0
        %1731 = vmatprep.subr.mxu0 0.0
        %1732 = vmatpush1.msra.mxu0 0.0
        %1733 = vmatprep.mubr.f32.mxu0 0.0
        %1734 = vmatmul.mubr.f32.gmra.mrb[0].mxu0 %v1667
        %v1735 = vpop.f32.mrb[0].mxu0
        %v1736 = vadd.f32 0.0, %v1735
        %v1737 = vpop.f32.mrb[0].mxu0
        %1738 = vmatprep.mubr.f32.mxu0 0.0
        %1739 = vmatmul.mubr.f32.gmra.mrb[0].mxu0 %v1668
        %v1740 = vpop.f32.mrb[0].mxu0
        %v1741 = vadd.f32 0.0, %v1740
        %v1742 = vpop.f32.mrb[0].mxu0
        %1743 = vdwg.mxu0
        %s1744 = scalar_lea.vmem [#allocation11], 128
        %v1745 = vld [vmem:[%s1744] sm:$0xff]
        %v1746 = vld [vmem:[%s1744 + $0x8] sm:$0xff]
        %v1747 = vld [vmem:[%s1744 + $0x10] sm:$0xff]
        %v1748 = vld [vmem:[%s1744 + $0x18] sm:$0xff]
        %v1749 = vld [vmem:[%s1744 + $0x20] sm:$0xff]
        %v1750 = vld [vmem:[%s1744 + $0x28] sm:$0xff]
        %v1751 = vld [vmem:[%s1744 + $0x30] sm:$0xff]
        %v1752 = vld [vmem:[%s1744 + $0x38] sm:$0xff]
        %v1753 = vld [vmem:[%s1744 + $0x40] sm:$0xff]
        %v1754 = vld [vmem:[%s1744 + $0x48] sm:$0xff]
        %v1755 = vld [vmem:[%s1744 + $0x50] sm:$0xff]
        %v1756 = vld [vmem:[%s1744 + $0x58] sm:$0xff]
        %v1757 = vld [vmem:[%s1744 + $0x60] sm:$0xff]
        %v1758 = vld [vmem:[%s1744 + $0x68] sm:$0xff]
        %v1759 = vld [vmem:[%s1744 + $0x70] sm:$0xff]
        %v1760 = vld [vmem:[%s1744 + $0x78] sm:$0xff]
        %1761 = vmatprep.subr.mxu0 0.0
        %1762 = vmatpush1.msra.mxu0 %v1745
        %1763 = vmatprep.subr.mxu0 0.0
        %1764 = vmatpush1.msra.mxu0 %v1746
        %1765 = vmatprep.subr.mxu0 0.0
        %1766 = vmatpush1.msra.mxu0 %v1747
        %1767 = vmatprep.subr.mxu0 0.0
        %1768 = vmatpush1.msra.mxu0 %v1748
        %1769 = vmatprep.subr.mxu0 0.0
        %1770 = vmatpush1.msra.mxu0 %v1749
        %1771 = vmatprep.subr.mxu0 0.0
        %1772 = vmatpush1.msra.mxu0 %v1750
        %1773 = vmatprep.subr.mxu0 0.0
        %1774 = vmatpush1.msra.mxu0 %v1751
        %1775 = vmatprep.subr.mxu0 0.0
        %1776 = vmatpush1.msra.mxu0 %v1752
        %1777 = vmatprep.subr.mxu0 0.0
        %1778 = vmatpush1.msra.mxu0 %v1753
        %1779 = vmatprep.subr.mxu0 0.0
        %1780 = vmatpush1.msra.mxu0 %v1754
        %1781 = vmatprep.subr.mxu0 0.0
        %1782 = vmatpush1.msra.mxu0 %v1755
        %1783 = vmatprep.subr.mxu0 0.0
        %1784 = vmatpush1.msra.mxu0 %v1756
        %1785 = vmatprep.subr.mxu0 0.0
        %1786 = vmatpush1.msra.mxu0 %v1757
        %1787 = vmatprep.subr.mxu0 0.0
        %1788 = vmatpush1.msra.mxu0 %v1758
        %1789 = vmatprep.subr.mxu0 0.0
        %1790 = vmatpush1.msra.mxu0 %v1759
        %1791 = vmatprep.subr.mxu0 0.0
        %1792 = vmatpush1.msra.mxu0 %v1760
        %1793 = vmatprep.subr.mxu0 0.0
        %1794 = vmatpush1.msra.mxu0 0.0
        %1795 = vmatprep.subr.mxu0 0.0
        %1796 = vmatpush1.msra.mxu0 0.0
        %1797 = vmatprep.subr.mxu0 0.0
        %1798 = vmatpush1.msra.mxu0 0.0
        %1799 = vmatprep.subr.mxu0 0.0
        %1800 = vmatpush1.msra.mxu0 0.0
        %1801 = vmatprep.subr.mxu0 0.0
        %1802 = vmatpush1.msra.mxu0 0.0
        %1803 = vmatprep.subr.mxu0 0.0
        %1804 = vmatpush1.msra.mxu0 0.0
        %1805 = vmatprep.subr.mxu0 0.0
        %1806 = vmatpush1.msra.mxu0 0.0
        %1807 = vmatprep.subr.mxu0 0.0
        %1808 = vmatpush1.msra.mxu0 0.0
        %1809 = vmatprep.subr.mxu0 0.0
        %1810 = vmatpush1.msra.mxu0 0.0
        %1811 = vmatprep.subr.mxu0 0.0
        %1812 = vmatpush1.msra.mxu0 0.0
        %1813 = vmatprep.subr.mxu0 0.0
        %1814 = vmatpush1.msra.mxu0 0.0
        %1815 = vmatprep.subr.mxu0 0.0
        %1816 = vmatpush1.msra.mxu0 0.0
        %1817 = vmatprep.subr.mxu0 0.0
        %1818 = vmatpush1.msra.mxu0 0.0
        %1819 = vmatprep.subr.mxu0 0.0
        %1820 = vmatpush1.msra.mxu0 0.0
        %1821 = vmatprep.subr.mxu0 0.0
        %1822 = vmatpush1.msra.mxu0 0.0
        %1823 = vmatprep.subr.mxu0 0.0
        %1824 = vmatpush1.msra.mxu0 0.0
        %1825 = vmatprep.mubr.f32.mxu0 0.0
        %1826 = vmatmul.mubr.f32.gmra.mrb[0].mxu0 %v1736
        %v1827 = vpop.f32.mrb[0].mxu0
        %v1828 = vadd.f32 0.0, %v1827
        %v1829 = vpop.f32.mrb[0].mxu0
        %1830 = vmatprep.mubr.f32.mxu0 0.0
        %1831 = vmatmul.mubr.f32.gmra.mrb[0].mxu0 %v1741
        %v1832 = vpop.f32.mrb[0].mxu0
        %v1833 = vadd.f32 0.0, %v1832
        %v1834 = vpop.f32.mrb[0].mxu0
        %1835 = vdwg.mxu0
        %1836 = vmatprep.subr.mxu0 0.0
        %1837 = vmatpush1.msra.mxu0 %v1120
        %1838 = vmatprep.subr.mxu0 0.0
        %1839 = vmatpush1.msra.mxu0 %v1121
        %1840 = vmatprep.subr.mxu0 0.0
        %1841 = vmatpush1.msra.mxu0 %v1122
        %1842 = vmatprep.subr.mxu0 0.0
        %1843 = vmatpush1.msra.mxu0 %v1123
        %1844 = vmatprep.subr.mxu0 0.0
        %1845 = vmatpush1.msra.mxu0 %v1124
        %1846 = vmatprep.subr.mxu0 0.0
        %1847 = vmatpush1.msra.mxu0 %v1125
        %1848 = vmatprep.subr.mxu0 0.0
        %1849 = vmatpush1.msra.mxu0 %v1126
        %1850 = vmatprep.subr.mxu0 0.0
        %1851 = vmatpush1.msra.mxu0 %v1127
        %1852 = vmatprep.subr.mxu0 0.0
        %1853 = vmatpush1.msra.mxu0 %v1128
        %1854 = vmatprep.subr.mxu0 0.0
        %1855 = vmatpush1.msra.mxu0 %v1129
        %1856 = vmatprep.subr.mxu0 0.0
        %1857 = vmatpush1.msra.mxu0 %v1130
        %1858 = vmatprep.subr.mxu0 0.0
        %1859 = vmatpush1.msra.mxu0 %v1131
        %1860 = vmatprep.subr.mxu0 0.0
        %1861 = vmatpush1.msra.mxu0 %v1132
        %1862 = vmatprep.subr.mxu0 0.0
        %1863 = vmatpush1.msra.mxu0 %v1133
        %1864 = vmatprep.subr.mxu0 0.0
        %1865 = vmatpush1.msra.mxu0 %v1134
        %1866 = vmatprep.subr.mxu0 0.0
        %1867 = vmatpush1.msra.mxu0 %v1135
        %1868 = vmatprep.subr.mxu0 0.0
        %1869 = vmatpush1.msra.mxu0 0.0
        %1870 = vmatprep.subr.mxu0 0.0
        %1871 = vmatpush1.msra.mxu0 0.0
        %1872 = vmatprep.subr.mxu0 0.0
        %1873 = vmatpush1.msra.mxu0 0.0
        %1874 = vmatprep.subr.mxu0 0.0
        %1875 = vmatpush1.msra.mxu0 0.0
        %1876 = vmatprep.subr.mxu0 0.0
        %1877 = vmatpush1.msra.mxu0 0.0
        %1878 = vmatprep.subr.mxu0 0.0
        %1879 = vmatpush1.msra.mxu0 0.0
        %1880 = vmatprep.subr.mxu0 0.0
        %1881 = vmatpush1.msra.mxu0 0.0
        %1882 = vmatprep.subr.mxu0 0.0
        %1883 = vmatpush1.msra.mxu0 0.0
        %1884 = vmatprep.subr.mxu0 0.0
        %1885 = vmatpush1.msra.mxu0 0.0
        %1886 = vmatprep.subr.mxu0 0.0
        %1887 = vmatpush1.msra.mxu0 0.0
        %1888 = vmatprep.subr.mxu0 0.0
        %1889 = vmatpush1.msra.mxu0 0.0
        %1890 = vmatprep.subr.mxu0 0.0
        %1891 = vmatpush1.msra.mxu0 0.0
        %1892 = vmatprep.subr.mxu0 0.0
        %1893 = vmatpush1.msra.mxu0 0.0
        %1894 = vmatprep.subr.mxu0 0.0
        %1895 = vmatpush1.msra.mxu0 0.0
        %1896 = vmatprep.subr.mxu0 0.0
        %1897 = vmatpush1.msra.mxu0 0.0
        %1898 = vmatprep.subr.mxu0 0.0
        %1899 = vmatpush1.msra.mxu0 0.0
        %1900 = vmatprep.mubr.f32.mxu0 0.0
        %1901 = vmatmul.mubr.f32.gmra.mrb[0].mxu0 %v1112
        %v1902 = vpop.f32.mrb[0].mxu0
        %v1903 = vadd.f32 %v1828, %v1902
        %v1904 = vpop.f32.mrb[0].mxu0
        %1905 = vmatprep.mubr.f32.mxu0 0.0
        %1906 = vmatmul.mubr.f32.gmra.mrb[0].mxu0 %v1117
        %v1907 = vpop.f32.mrb[0].mxu0
        %v1908 = vadd.f32 %v1833, %v1907
        %v1909 = vpop.f32.mrb[0].mxu0
        %1910 = vdwg.mxu0
        %s1911 = scalar_lea.vmem [#allocation7], 256
        %v1912 = vld [vmem:[%s1911] sm:$0xff]
        %v1913 = vld [vmem:[%s1911 + $0x8] sm:$0xff]
        %v1914 = vld [vmem:[%s1911 + $0x10] sm:$0xff]
        %v1915 = vld [vmem:[%s1911 + $0x18] sm:$0xff]
        %v1916 = vld [vmem:[%s1911 + $0x20] sm:$0xff]
        %v1917 = vld [vmem:[%s1911 + $0x28] sm:$0xff]
        %v1918 = vld [vmem:[%s1911 + $0x30] sm:$0xff]
        %v1919 = vld [vmem:[%s1911 + $0x38] sm:$0xff]
        %v1920 = vld [vmem:[%s1911 + $0x40] sm:$0xff]
        %v1921 = vld [vmem:[%s1911 + $0x48] sm:$0xff]
        %v1922 = vld [vmem:[%s1911 + $0x50] sm:$0xff]
        %v1923 = vld [vmem:[%s1911 + $0x58] sm:$0xff]
        %v1924 = vld [vmem:[%s1911 + $0x60] sm:$0xff]
        %v1925 = vld [vmem:[%s1911 + $0x68] sm:$0xff]
        %v1926 = vld [vmem:[%s1911 + $0x70] sm:$0xff]
        %v1927 = vld [vmem:[%s1911 + $0x78] sm:$0xff]
        %s1928 = scalar_lea.vmem %s3, 2
        %v1929 = vld [vmem:[%s1928] sm:$0x1]
        %v1931 = vlaneseq
        %v1932 = vshrl.u32 %v1931, 7
        %v1933 = vsub.s32 0, %v1932
        %v1934 = vrot.slane %v1929, %v1933
        %1936 = vmatprep.subr.mxu0 0.0
        %1937 = vmatpush1.msra.mxu0 %v1912
        %1938 = vmatprep.subr.mxu0 0.0
        %1939 = vmatpush1.msra.mxu0 %v1913
        %1940 = vmatprep.subr.mxu0 0.0
        %1941 = vmatpush1.msra.mxu0 %v1914
        %1942 = vmatprep.subr.mxu0 0.0
        %1943 = vmatpush1.msra.mxu0 %v1915
        %1944 = vmatprep.subr.mxu0 0.0
        %1945 = vmatpush1.msra.mxu0 %v1916
        %1946 = vmatprep.subr.mxu0 0.0
        %1947 = vmatpush1.msra.mxu0 %v1917
        %1948 = vmatprep.subr.mxu0 0.0
        %1949 = vmatpush1.msra.mxu0 %v1918
        %1950 = vmatprep.subr.mxu0 0.0
        %1951 = vmatpush1.msra.mxu0 %v1919
        %1952 = vmatprep.subr.mxu0 0.0
        %1953 = vmatpush1.msra.mxu0 %v1920
        %1954 = vmatprep.subr.mxu0 0.0
        %1955 = vmatpush1.msra.mxu0 %v1921
        %1956 = vmatprep.subr.mxu0 0.0
        %1957 = vmatpush1.msra.mxu0 %v1922
        %1958 = vmatprep.subr.mxu0 0.0
        %1959 = vmatpush1.msra.mxu0 %v1923
        %1960 = vmatprep.subr.mxu0 0.0
        %1961 = vmatpush1.msra.mxu0 %v1924
        %1962 = vmatprep.subr.mxu0 0.0
        %1963 = vmatpush1.msra.mxu0 %v1925
        %1964 = vmatprep.subr.mxu0 0.0
        %1965 = vmatpush1.msra.mxu0 %v1926
        %1966 = vmatprep.subr.mxu0 0.0
        %1967 = vmatpush1.msra.mxu0 %v1927
        %1968 = vmatprep.subr.mxu0 0.0
        %1969 = vmatpush1.msra.mxu0 0.0
        %1970 = vmatprep.subr.mxu0 0.0
        %1971 = vmatpush1.msra.mxu0 0.0
        %1972 = vmatprep.subr.mxu0 0.0
        %1973 = vmatpush1.msra.mxu0 0.0
        %1974 = vmatprep.subr.mxu0 0.0
        %1975 = vmatpush1.msra.mxu0 0.0
        %1976 = vmatprep.subr.mxu0 0.0
        %1977 = vmatpush1.msra.mxu0 0.0
        %1978 = vmatprep.subr.mxu0 0.0
        %1979 = vmatpush1.msra.mxu0 0.0
        %1980 = vmatprep.subr.mxu0 0.0
        %1981 = vmatpush1.msra.mxu0 0.0
        %1982 = vmatprep.subr.mxu0 0.0
        %1983 = vmatpush1.msra.mxu0 0.0
        %1984 = vmatprep.subr.mxu0 0.0
        %1985 = vmatpush1.msra.mxu0 0.0
        %1986 = vmatprep.subr.mxu0 0.0
        %1987 = vmatpush1.msra.mxu0 0.0
        %1988 = vmatprep.subr.mxu0 0.0
        %1989 = vmatpush1.msra.mxu0 0.0
        %1990 = vmatprep.subr.mxu0 0.0
        %1991 = vmatpush1.msra.mxu0 0.0
        %1992 = vmatprep.subr.mxu0 0.0
        %1993 = vmatpush1.msra.mxu0 0.0
        %1994 = vmatprep.subr.mxu0 0.0
        %1995 = vmatpush1.msra.mxu0 0.0
        %1996 = vmatprep.subr.mxu0 0.0
        %1997 = vmatpush1.msra.mxu0 0.0
        %1998 = vmatprep.subr.mxu0 0.0
        %1999 = vmatpush1.msra.mxu0 0.0
        %2000 = vmatprep.mubr.f32.mxu0 0.0
        %2001 = vmatmul.mubr.f32.gmra.mrb[0].mxu0 %v496
        %v2002 = vpop.f32.mrb[0].mxu0
        %v2003 = vadd.f32 %v1934, %v2002
        %v2004 = vpop.f32.mrb[0].mxu0
        %2005 = vmatprep.mubr.f32.mxu0 0.0
        %2006 = vmatmul.mubr.f32.gmra.mrb[0].mxu0 %v497
        %v2007 = vpop.f32.mrb[0].mxu0
        %v2008 = vadd.f32 %v1934, %v2007
        %v2009 = vpop.f32.mrb[0].mxu0
        %2010 = vdwg.mxu0
        %s2011 = scalar_lea.vmem [#allocation8], 256
        %v2012 = vld [vmem:[%s2011] sm:$0xff]
        %v2013 = vld [vmem:[%s2011 + $0x8] sm:$0xff]
        %v2014 = vld [vmem:[%s2011 + $0x10] sm:$0xff]
        %v2015 = vld [vmem:[%s2011 + $0x18] sm:$0xff]
        %v2016 = vld [vmem:[%s2011 + $0x20] sm:$0xff]
        %v2017 = vld [vmem:[%s2011 + $0x28] sm:$0xff]
        %v2018 = vld [vmem:[%s2011 + $0x30] sm:$0xff]
        %v2019 = vld [vmem:[%s2011 + $0x38] sm:$0xff]
        %v2020 = vld [vmem:[%s2011 + $0x40] sm:$0xff]
        %v2021 = vld [vmem:[%s2011 + $0x48] sm:$0xff]
        %v2022 = vld [vmem:[%s2011 + $0x50] sm:$0xff]
        %v2023 = vld [vmem:[%s2011 + $0x58] sm:$0xff]
        %v2024 = vld [vmem:[%s2011 + $0x60] sm:$0xff]
        %v2025 = vld [vmem:[%s2011 + $0x68] sm:$0xff]
        %v2026 = vld [vmem:[%s2011 + $0x70] sm:$0xff]
        %v2027 = vld [vmem:[%s2011 + $0x78] sm:$0xff]
        %s2028 = scalar_lea.vmem %s5, 2
        %v2029 = vld [vmem:[%s2028] sm:$0x1]
        %v2031 = vlaneseq
        %v2032 = vshrl.u32 %v2031, 7
        %v2033 = vsub.s32 0, %v2032
        %v2034 = vrot.slane %v2029, %v2033
        %2036 = vmatprep.subr.mxu0 0.0
        %2037 = vmatpush1.msra.mxu0 %v2012
        %2038 = vmatprep.subr.mxu0 0.0
        %2039 = vmatpush1.msra.mxu0 %v2013
        %2040 = vmatprep.subr.mxu0 0.0
        %2041 = vmatpush1.msra.mxu0 %v2014
        %2042 = vmatprep.subr.mxu0 0.0
        %2043 = vmatpush1.msra.mxu0 %v2015
        %2044 = vmatprep.subr.mxu0 0.0
        %2045 = vmatpush1.msra.mxu0 %v2016
        %2046 = vmatprep.subr.mxu0 0.0
        %2047 = vmatpush1.msra.mxu0 %v2017
        %2048 = vmatprep.subr.mxu0 0.0
        %2049 = vmatpush1.msra.mxu0 %v2018
        %2050 = vmatprep.subr.mxu0 0.0
        %2051 = vmatpush1.msra.mxu0 %v2019
        %2052 = vmatprep.subr.mxu0 0.0
        %2053 = vmatpush1.msra.mxu0 %v2020
        %2054 = vmatprep.subr.mxu0 0.0
        %2055 = vmatpush1.msra.mxu0 %v2021
        %2056 = vmatprep.subr.mxu0 0.0
        %2057 = vmatpush1.msra.mxu0 %v2022
        %2058 = vmatprep.subr.mxu0 0.0
        %2059 = vmatpush1.msra.mxu0 %v2023
        %2060 = vmatprep.subr.mxu0 0.0
        %2061 = vmatpush1.msra.mxu0 %v2024
        %2062 = vmatprep.subr.mxu0 0.0
        %2063 = vmatpush1.msra.mxu0 %v2025
        %2064 = vmatprep.subr.mxu0 0.0
        %2065 = vmatpush1.msra.mxu0 %v2026
        %2066 = vmatprep.subr.mxu0 0.0
        %2067 = vmatpush1.msra.mxu0 %v2027
        %2068 = vmatprep.subr.mxu0 0.0
        %2069 = vmatpush1.msra.mxu0 0.0
        %2070 = vmatprep.subr.mxu0 0.0
        %2071 = vmatpush1.msra.mxu0 0.0
        %2072 = vmatprep.subr.mxu0 0.0
        %2073 = vmatpush1.msra.mxu0 0.0
        %2074 = vmatprep.subr.mxu0 0.0
        %2075 = vmatpush1.msra.mxu0 0.0
        %2076 = vmatprep.subr.mxu0 0.0
        %2077 = vmatpush1.msra.mxu0 0.0
        %2078 = vmatprep.subr.mxu0 0.0
        %2079 = vmatpush1.msra.mxu0 0.0
        %2080 = vmatprep.subr.mxu0 0.0
        %2081 = vmatpush1.msra.mxu0 0.0
        %2082 = vmatprep.subr.mxu0 0.0
        %2083 = vmatpush1.msra.mxu0 0.0
        %2084 = vmatprep.subr.mxu0 0.0
        %2085 = vmatpush1.msra.mxu0 0.0
        %2086 = vmatprep.subr.mxu0 0.0
        %2087 = vmatpush1.msra.mxu0 0.0
        %2088 = vmatprep.subr.mxu0 0.0
        %2089 = vmatpush1.msra.mxu0 0.0
        %2090 = vmatprep.subr.mxu0 0.0
        %2091 = vmatpush1.msra.mxu0 0.0
        %2092 = vmatprep.subr.mxu0 0.0
        %2093 = vmatpush1.msra.mxu0 0.0
        %2094 = vmatprep.subr.mxu0 0.0
        %2095 = vmatpush1.msra.mxu0 0.0
        %2096 = vmatprep.subr.mxu0 0.0
        %2097 = vmatpush1.msra.mxu0 0.0
        %2098 = vmatprep.subr.mxu0 0.0
        %2099 = vmatpush1.msra.mxu0 0.0
        %2100 = vmatprep.mubr.f32.mxu0 0.0
        %2101 = vmatmul.mubr.f32.gmra.mrb[0].mxu0 %v498
        %v2102 = vpop.f32.mrb[0].mxu0
        %v2103 = vadd.f32 %v2034, %v2102
        %v2104 = vpop.f32.mrb[0].mxu0
        %2105 = vmatprep.mubr.f32.mxu0 0.0
        %2106 = vmatmul.mubr.f32.gmra.mrb[0].mxu0 %v499
        %v2107 = vpop.f32.mrb[0].mxu0
        %v2108 = vadd.f32 %v2034, %v2107
        %v2109 = vpop.f32.mrb[0].mxu0
        %2110 = vmatprep.mubr.f32.mxu0 0.0
        %2111 = vmatmul.mubr.f32.gmra.mrb[0].mxu0 %v500
        %v2112 = vpop.f32.mrb[0].mxu0
        %v2113 = vadd.f32 %v2034, %v2112
        %v2114 = vpop.f32.mrb[0].mxu0
        %2115 = vmatprep.mubr.f32.mxu0 0.0
        %2116 = vmatmul.mubr.f32.gmra.mrb[0].mxu0 %v501
        %v2117 = vpop.f32.mrb[0].mxu0
        %v2118 = vadd.f32 %v2034, %v2117
        %v2119 = vpop.f32.mrb[0].mxu0
        %2120 = vmatprep.mubr.f32.mxu0 0.0
        %2121 = vmatmul.mubr.f32.gmra.mrb[0].mxu0 %v502
        %v2122 = vpop.f32.mrb[0].mxu0
        %v2123 = vadd.f32 %v2034, %v2122
        %v2124 = vpop.f32.mrb[0].mxu0
        %2125 = vmatprep.mubr.f32.mxu0 0.0
        %2126 = vmatmul.mubr.f32.gmra.mrb[0].mxu0 %v503
        %v2127 = vpop.f32.mrb[0].mxu0
        %v2128 = vadd.f32 %v2034, %v2127
        %v2129 = vpop.f32.mrb[0].mxu0
        %2130 = vmatprep.mubr.f32.mxu0 0.0
        %2131 = vmatmul.mubr.f32.gmra.mrb[0].mxu0 %v504
        %v2132 = vpop.f32.mrb[0].mxu0
        %v2133 = vadd.f32 %v2034, %v2132
        %v2134 = vpop.f32.mrb[0].mxu0
        %2135 = vmatprep.mubr.f32.mxu0 0.0
        %2136 = vmatmul.mubr.f32.gmra.mrb[0].mxu0 %v505
        %v2137 = vpop.f32.mrb[0].mxu0
        %v2138 = vadd.f32 %v2034, %v2137
        %v2139 = vpop.f32.mrb[0].mxu0
        %2140 = vmatprep.mubr.f32.mxu0 0.0
        %2141 = vmatmul.mubr.f32.gmra.mrb[0].mxu0 %v506
        %v2142 = vpop.f32.mrb[0].mxu0
        %v2143 = vadd.f32 %v2034, %v2142
        %v2144 = vpop.f32.mrb[0].mxu0
        %2145 = vmatprep.mubr.f32.mxu0 0.0
        %2146 = vmatmul.mubr.f32.gmra.mrb[0].mxu0 %v507
        %v2147 = vpop.f32.mrb[0].mxu0
        %v2148 = vadd.f32 %v2034, %v2147
        %v2149 = vpop.f32.mrb[0].mxu0
        %2150 = vmatprep.mubr.f32.mxu0 0.0
        %2151 = vmatmul.mubr.f32.gmra.mrb[0].mxu0 %v508
        %v2152 = vpop.f32.mrb[0].mxu0
        %v2153 = vadd.f32 %v2034, %v2152
        %v2154 = vpop.f32.mrb[0].mxu0
        %2155 = vmatprep.mubr.f32.mxu0 0.0
        %2156 = vmatmul.mubr.f32.gmra.mrb[0].mxu0 %v509
        %v2157 = vpop.f32.mrb[0].mxu0
        %v2158 = vadd.f32 %v2034, %v2157
        %v2159 = vpop.f32.mrb[0].mxu0
        %2160 = vmatprep.mubr.f32.mxu0 0.0
        %2161 = vmatmul.mubr.f32.gmra.mrb[0].mxu0 %v510
        %v2162 = vpop.f32.mrb[0].mxu0
        %v2163 = vadd.f32 %v2034, %v2162
        %v2164 = vpop.f32.mrb[0].mxu0
        %2165 = vmatprep.mubr.f32.mxu0 0.0
        %2166 = vmatmul.mubr.f32.gmra.mrb[0].mxu0 %v511
        %v2167 = vpop.f32.mrb[0].mxu0
        %v2168 = vadd.f32 %v2034, %v2167
        %v2169 = vpop.f32.mrb[0].mxu0
        %2170 = vmatprep.mubr.f32.mxu0 0.0
        %2171 = vmatmul.mubr.f32.gmra.mrb[0].mxu0 %v512
        %v2172 = vpop.f32.mrb[0].mxu0
        %v2173 = vadd.f32 %v2034, %v2172
        %v2174 = vpop.f32.mrb[0].mxu0
        %2175 = vmatprep.mubr.f32.mxu0 0.0
        %2176 = vmatmul.mubr.f32.gmra.mrb[0].mxu0 %v513
        %v2177 = vpop.f32.mrb[0].mxu0
        %v2178 = vadd.f32 %v2034, %v2177
        %v2179 = vpop.f32.mrb[0].mxu0
        %2180 = vdwg.mxu0
        %s2181 = scalar_lea.vmem [#allocation10], 256
        %v2182 = vld [vmem:[%s2181] sm:$0xff]
        %v2183 = vld [vmem:[%s2181 + $0x8] sm:$0xff]
        %v2184 = vld [vmem:[%s2181 + $0x10] sm:$0xff]
        %v2185 = vld [vmem:[%s2181 + $0x18] sm:$0xff]
        %v2186 = vld [vmem:[%s2181 + $0x20] sm:$0xff]
        %v2187 = vld [vmem:[%s2181 + $0x28] sm:$0xff]
        %v2188 = vld [vmem:[%s2181 + $0x30] sm:$0xff]
        %v2189 = vld [vmem:[%s2181 + $0x38] sm:$0xff]
        %v2190 = vld [vmem:[%s2181 + $0x40] sm:$0xff]
        %v2191 = vld [vmem:[%s2181 + $0x48] sm:$0xff]
        %v2192 = vld [vmem:[%s2181 + $0x50] sm:$0xff]
        %v2193 = vld [vmem:[%s2181 + $0x58] sm:$0xff]
        %v2194 = vld [vmem:[%s2181 + $0x60] sm:$0xff]
        %v2195 = vld [vmem:[%s2181 + $0x68] sm:$0xff]
        %v2196 = vld [vmem:[%s2181 + $0x70] sm:$0xff]
        %v2197 = vld [vmem:[%s2181 + $0x78] sm:$0xff]
        %s2198 = scalar_lea.vmem %s7, 2
        %v2199 = vld [vmem:[%s2198] sm:$0x1]
        %v2201 = vlaneseq
        %v2202 = vshrl.u32 %v2201, 7
        %v2203 = vsub.s32 0, %v2202
        %v2204 = vrot.slane %v2199, %v2203
        %2206 = vmatprep.subr.mxu0 0.0
        %2207 = vmatpush1.msra.mxu0 %v2182
        %2208 = vmatprep.subr.mxu0 0.0
        %2209 = vmatpush1.msra.mxu0 %v2183
        %2210 = vmatprep.subr.mxu0 0.0
        %2211 = vmatpush1.msra.mxu0 %v2184
        %2212 = vmatprep.subr.mxu0 0.0
        %2213 = vmatpush1.msra.mxu0 %v2185
        %2214 = vmatprep.subr.mxu0 0.0
        %2215 = vmatpush1.msra.mxu0 %v2186
        %2216 = vmatprep.subr.mxu0 0.0
        %2217 = vmatpush1.msra.mxu0 %v2187
        %2218 = vmatprep.subr.mxu0 0.0
        %2219 = vmatpush1.msra.mxu0 %v2188
        %2220 = vmatprep.subr.mxu0 0.0
        %2221 = vmatpush1.msra.mxu0 %v2189
        %2222 = vmatprep.subr.mxu0 0.0
        %2223 = vmatpush1.msra.mxu0 %v2190
        %2224 = vmatprep.subr.mxu0 0.0
        %2225 = vmatpush1.msra.mxu0 %v2191
        %2226 = vmatprep.subr.mxu0 0.0
        %2227 = vmatpush1.msra.mxu0 %v2192
        %2228 = vmatprep.subr.mxu0 0.0
        %2229 = vmatpush1.msra.mxu0 %v2193
        %2230 = vmatprep.subr.mxu0 0.0
        %2231 = vmatpush1.msra.mxu0 %v2194
        %2232 = vmatprep.subr.mxu0 0.0
        %2233 = vmatpush1.msra.mxu0 %v2195
        %2234 = vmatprep.subr.mxu0 0.0
        %2235 = vmatpush1.msra.mxu0 %v2196
        %2236 = vmatprep.subr.mxu0 0.0
        %2237 = vmatpush1.msra.mxu0 %v2197
        %2238 = vmatprep.subr.mxu0 0.0
        %2239 = vmatpush1.msra.mxu0 0.0
        %2240 = vmatprep.subr.mxu0 0.0
        %2241 = vmatpush1.msra.mxu0 0.0
        %2242 = vmatprep.subr.mxu0 0.0
        %2243 = vmatpush1.msra.mxu0 0.0
        %2244 = vmatprep.subr.mxu0 0.0
        %2245 = vmatpush1.msra.mxu0 0.0
        %2246 = vmatprep.subr.mxu0 0.0
        %2247 = vmatpush1.msra.mxu0 0.0
        %2248 = vmatprep.subr.mxu0 0.0
        %2249 = vmatpush1.msra.mxu0 0.0
        %2250 = vmatprep.subr.mxu0 0.0
        %2251 = vmatpush1.msra.mxu0 0.0
        %2252 = vmatprep.subr.mxu0 0.0
        %2253 = vmatpush1.msra.mxu0 0.0
        %2254 = vmatprep.subr.mxu0 0.0
        %2255 = vmatpush1.msra.mxu0 0.0
        %2256 = vmatprep.subr.mxu0 0.0
        %2257 = vmatpush1.msra.mxu0 0.0
        %2258 = vmatprep.subr.mxu0 0.0
        %2259 = vmatpush1.msra.mxu0 0.0
        %2260 = vmatprep.subr.mxu0 0.0
        %2261 = vmatpush1.msra.mxu0 0.0
        %2262 = vmatprep.subr.mxu0 0.0
        %2263 = vmatpush1.msra.mxu0 0.0
        %2264 = vmatprep.subr.mxu0 0.0
        %2265 = vmatpush1.msra.mxu0 0.0
        %2266 = vmatprep.subr.mxu0 0.0
        %2267 = vmatpush1.msra.mxu0 0.0
        %2268 = vmatprep.subr.mxu0 0.0
        %2269 = vmatpush1.msra.mxu0 0.0
        %2270 = vmatprep.mubr.f32.mxu0 0.0
        %2271 = vmatmul.mubr.f32.gmra.mrb[0].mxu0 %v498
        %v2272 = vpop.f32.mrb[0].mxu0
        %v2273 = vadd.f32 %v2204, %v2272
        %v2274 = vpop.f32.mrb[0].mxu0
        %2275 = vmatprep.mubr.f32.mxu0 0.0
        %2276 = vmatmul.mubr.f32.gmra.mrb[0].mxu0 %v499
        %v2277 = vpop.f32.mrb[0].mxu0
        %v2278 = vadd.f32 %v2204, %v2277
        %v2279 = vpop.f32.mrb[0].mxu0
        %2280 = vmatprep.mubr.f32.mxu0 0.0
        %2281 = vmatmul.mubr.f32.gmra.mrb[0].mxu0 %v500
        %v2282 = vpop.f32.mrb[0].mxu0
        %v2283 = vadd.f32 %v2204, %v2282
        %v2284 = vpop.f32.mrb[0].mxu0
        %2285 = vmatprep.mubr.f32.mxu0 0.0
        %2286 = vmatmul.mubr.f32.gmra.mrb[0].mxu0 %v501
        %v2287 = vpop.f32.mrb[0].mxu0
        %v2288 = vadd.f32 %v2204, %v2287
        %v2289 = vpop.f32.mrb[0].mxu0
        %2290 = vmatprep.mubr.f32.mxu0 0.0
        %2291 = vmatmul.mubr.f32.gmra.mrb[0].mxu0 %v502
        %v2292 = vpop.f32.mrb[0].mxu0
        %v2293 = vadd.f32 %v2204, %v2292
        %v2294 = vpop.f32.mrb[0].mxu0
        %2295 = vmatprep.mubr.f32.mxu0 0.0
        %2296 = vmatmul.mubr.f32.gmra.mrb[0].mxu0 %v503
        %v2297 = vpop.f32.mrb[0].mxu0
        %v2298 = vadd.f32 %v2204, %v2297
        %v2299 = vpop.f32.mrb[0].mxu0
        %2300 = vmatprep.mubr.f32.mxu0 0.0
        %2301 = vmatmul.mubr.f32.gmra.mrb[0].mxu0 %v504
        %v2302 = vpop.f32.mrb[0].mxu0
        %v2303 = vadd.f32 %v2204, %v2302
        %v2304 = vpop.f32.mrb[0].mxu0
        %2305 = vmatprep.mubr.f32.mxu0 0.0
        %2306 = vmatmul.mubr.f32.gmra.mrb[0].mxu0 %v505
        %v2307 = vpop.f32.mrb[0].mxu0
        %v2308 = vadd.f32 %v2204, %v2307
        %v2309 = vpop.f32.mrb[0].mxu0
        %2310 = vmatprep.mubr.f32.mxu0 0.0
        %2311 = vmatmul.mubr.f32.gmra.mrb[0].mxu0 %v506
        %v2312 = vpop.f32.mrb[0].mxu0
        %v2313 = vadd.f32 %v2204, %v2312
        %v2314 = vpop.f32.mrb[0].mxu0
        %2315 = vmatprep.mubr.f32.mxu0 0.0
        %2316 = vmatmul.mubr.f32.gmra.mrb[0].mxu0 %v507
        %v2317 = vpop.f32.mrb[0].mxu0
        %v2318 = vadd.f32 %v2204, %v2317
        %v2319 = vpop.f32.mrb[0].mxu0
        %2320 = vmatprep.mubr.f32.mxu0 0.0
        %2321 = vmatmul.mubr.f32.gmra.mrb[0].mxu0 %v508
        %v2322 = vpop.f32.mrb[0].mxu0
        %v2323 = vadd.f32 %v2204, %v2322
        %v2324 = vpop.f32.mrb[0].mxu0
        %2325 = vmatprep.mubr.f32.mxu0 0.0
        %2326 = vmatmul.mubr.f32.gmra.mrb[0].mxu0 %v509
        %v2327 = vpop.f32.mrb[0].mxu0
        %v2328 = vadd.f32 %v2204, %v2327
        %v2329 = vpop.f32.mrb[0].mxu0
        %2330 = vmatprep.mubr.f32.mxu0 0.0
        %2331 = vmatmul.mubr.f32.gmra.mrb[0].mxu0 %v510
        %v2332 = vpop.f32.mrb[0].mxu0
        %v2333 = vadd.f32 %v2204, %v2332
        %v2334 = vpop.f32.mrb[0].mxu0
        %2335 = vmatprep.mubr.f32.mxu0 0.0
        %2336 = vmatmul.mubr.f32.gmra.mrb[0].mxu0 %v511
        %v2337 = vpop.f32.mrb[0].mxu0
        %v2338 = vadd.f32 %v2204, %v2337
        %v2339 = vpop.f32.mrb[0].mxu0
        %2340 = vmatprep.mubr.f32.mxu0 0.0
        %2341 = vmatmul.mubr.f32.gmra.mrb[0].mxu0 %v512
        %v2342 = vpop.f32.mrb[0].mxu0
        %v2343 = vadd.f32 %v2204, %v2342
        %v2344 = vpop.f32.mrb[0].mxu0
        %2345 = vmatprep.mubr.f32.mxu0 0.0
        %2346 = vmatmul.mubr.f32.gmra.mrb[0].mxu0 %v513
        %v2347 = vpop.f32.mrb[0].mxu0
        %v2348 = vadd.f32 %v2204, %v2347
        %v2349 = vpop.f32.mrb[0].mxu0
        %2350 = vdwg.mxu0
        %2351 = vmatprep.subr.mxu0 0.0
        %2352 = vmatpush1.xpose.msra.mxu0 %v2103
        %2353 = vmatprep.subr.mxu0 0.0
        %2354 = vmatpush1.xpose.msra.mxu0 %v2108
        %2355 = vmatprep.subr.mxu0 0.0
        %2356 = vmatpush1.xpose.msra.mxu0 %v2113
        %2357 = vmatprep.subr.mxu0 0.0
        %2358 = vmatpush1.xpose.msra.mxu0 %v2118
        %2359 = vmatprep.subr.mxu0 0.0
        %2360 = vmatpush1.xpose.msra.mxu0 %v2123
        %2361 = vmatprep.subr.mxu0 0.0
        %2362 = vmatpush1.xpose.msra.mxu0 %v2128
        %2363 = vmatprep.subr.mxu0 0.0
        %2364 = vmatpush1.xpose.msra.mxu0 %v2133
        %2365 = vmatprep.subr.mxu0 0.0
        %2366 = vmatpush1.xpose.msra.mxu0 %v2138
        %2367 = vmatprep.subr.mxu0 0.0
        %2368 = vmatpush1.xpose.msra.mxu0 %v2143
        %2369 = vmatprep.subr.mxu0 0.0
        %2370 = vmatpush1.xpose.msra.mxu0 %v2148
        %2371 = vmatprep.subr.mxu0 0.0
        %2372 = vmatpush1.xpose.msra.mxu0 %v2153
        %2373 = vmatprep.subr.mxu0 0.0
        %2374 = vmatpush1.xpose.msra.mxu0 %v2158
        %2375 = vmatprep.subr.mxu0 0.0
        %2376 = vmatpush1.xpose.msra.mxu0 %v2163
        %2377 = vmatprep.subr.mxu0 0.0
        %2378 = vmatpush1.xpose.msra.mxu0 %v2168
        %2379 = vmatprep.subr.mxu0 0.0
        %2380 = vmatpush1.xpose.msra.mxu0 %v2173
        %2381 = vmatprep.subr.mxu0 0.0
        %2382 = vmatpush1.xpose.msra.mxu0 %v2178
        %2383 = vmatprep.subr.mxu0 0.0
        %2384 = vmatpush1.xpose.msra.mxu0 0.0
        %2385 = vmatprep.subr.mxu0 0.0
        %2386 = vmatpush1.xpose.msra.mxu0 0.0
        %2387 = vmatprep.subr.mxu0 0.0
        %2388 = vmatpush1.xpose.msra.mxu0 0.0
        %2389 = vmatprep.subr.mxu0 0.0
        %2390 = vmatpush1.xpose.msra.mxu0 0.0
        %2391 = vmatprep.subr.mxu0 0.0
        %2392 = vmatpush1.xpose.msra.mxu0 0.0
        %2393 = vmatprep.subr.mxu0 0.0
        %2394 = vmatpush1.xpose.msra.mxu0 0.0
        %2395 = vmatprep.subr.mxu0 0.0
        %2396 = vmatpush1.xpose.msra.mxu0 0.0
        %2397 = vmatprep.subr.mxu0 0.0
        %2398 = vmatpush1.xpose.msra.mxu0 0.0
        %2399 = vmatprep.subr.mxu0 0.0
        %2400 = vmatpush1.xpose.msra.mxu0 0.0
        %2401 = vmatprep.subr.mxu0 0.0
        %2402 = vmatpush1.xpose.msra.mxu0 0.0
        %2403 = vmatprep.subr.mxu0 0.0
        %2404 = vmatpush1.xpose.msra.mxu0 0.0
        %2405 = vmatprep.subr.mxu0 0.0
        %2406 = vmatpush1.xpose.msra.mxu0 0.0
        %2407 = vmatprep.subr.mxu0 0.0
        %2408 = vmatpush1.xpose.msra.mxu0 0.0
        %2409 = vmatprep.subr.mxu0 0.0
        %2410 = vmatpush1.xpose.msra.mxu0 0.0
        %2411 = vmatprep.subr.mxu0 0.0
        %2412 = vmatpush1.xpose.msra.mxu0 0.0
        %2413 = vmatprep.subr.mxu0 0.0
        %2414 = vmatpush1.xpose.msra.mxu0 0.0
        %2415 = vmatprep.mubr.f32.mxu0 0.0
        %2416 = vmatmul.mubr.f32.gmra.mrb[0].mxu0 %v2003
        %v2417 = vpop.f32.mrb[0].mxu0
        %v2418 = vadd.f32 %v517, %v2417
        %v2419 = vpop.f32.mrb[0].mxu0
        %2420 = vmatprep.mubr.f32.mxu0 0.0
        %2421 = vmatmul.mubr.f32.gmra.mrb[0].mxu0 %v2008
        %v2422 = vpop.f32.mrb[0].mxu0
        %v2423 = vadd.f32 %v517, %v2422
        %v2424 = vpop.f32.mrb[0].mxu0
        %2425 = vdwg.mxu0
        %2426 = vmax.xlane.f32.xlu0 %v2418
        %v2427 = vpop.xlane.xlu0 %2426
        %2428 = vmax.xlane.f32.xlu0 %v2423
        %v2429 = vpop.xlane.xlu0 %2428
        %v2430 = vsub.f32 %v2418, %v2427
        %v2431 = vsub.f32 %v2423, %v2429
        %v2432 = vmul.f32 %v2430, 1.442695
        %v2433 = vpow.pop %v2432
        %v2434 = vmul.f32 %v2431, 1.442695
        %v2435 = vpow.pop %v2434
        %2436 = vadd.xlane.f32.xlu0 %v2433
        %v2437 = vpop.xlane.xlu0 %2436
        %2438 = vadd.xlane.f32.xlu0 %v2435
        %v2439 = vpop.xlane.xlu0 %2438
        %v2440 = vrcp.pop %v2437
        %v2441 = vrcp.pop %v2439
        %v2442 = vmul.f32 %v2433, %v2440
        %v2443 = vmul.f32 %v2435, %v2441
        %2444 = vmatprep.subr.mxu0 0.0
        %2445 = vmatpush1.msra.mxu0 %v2273
        %2446 = vmatprep.subr.mxu0 0.0
        %2447 = vmatpush1.msra.mxu0 %v2278
        %2448 = vmatprep.subr.mxu0 0.0
        %2449 = vmatpush1.msra.mxu0 %v2283
        %2450 = vmatprep.subr.mxu0 0.0
        %2451 = vmatpush1.msra.mxu0 %v2288
        %2452 = vmatprep.subr.mxu0 0.0
        %2453 = vmatpush1.msra.mxu0 %v2293
        %2454 = vmatprep.subr.mxu0 0.0
        %2455 = vmatpush1.msra.mxu0 %v2298
        %2456 = vmatprep.subr.mxu0 0.0
        %2457 = vmatpush1.msra.mxu0 %v2303
        %2458 = vmatprep.subr.mxu0 0.0
        %2459 = vmatpush1.msra.mxu0 %v2308
        %2460 = vmatprep.subr.mxu0 0.0
        %2461 = vmatpush1.msra.mxu0 %v2313
        %2462 = vmatprep.subr.mxu0 0.0
        %2463 = vmatpush1.msra.mxu0 %v2318
        %2464 = vmatprep.subr.mxu0 0.0
        %2465 = vmatpush1.msra.mxu0 %v2323
        %2466 = vmatprep.subr.mxu0 0.0
        %2467 = vmatpush1.msra.mxu0 %v2328
        %2468 = vmatprep.subr.mxu0 0.0
        %2469 = vmatpush1.msra.mxu0 %v2333
        %2470 = vmatprep.subr.mxu0 0.0
        %2471 = vmatpush1.msra.mxu0 %v2338
        %2472 = vmatprep.subr.mxu0 0.0
        %2473 = vmatpush1.msra.mxu0 %v2343
        %2474 = vmatprep.subr.mxu0 0.0
        %2475 = vmatpush1.msra.mxu0 %v2348
        %2476 = vmatprep.subr.mxu0 0.0
        %2477 = vmatpush1.msra.mxu0 0.0
        %2478 = vmatprep.subr.mxu0 0.0
        %2479 = vmatpush1.msra.mxu0 0.0
        %2480 = vmatprep.subr.mxu0 0.0
        %2481 = vmatpush1.msra.mxu0 0.0
        %2482 = vmatprep.subr.mxu0 0.0
        %2483 = vmatpush1.msra.mxu0 0.0
        %2484 = vmatprep.subr.mxu0 0.0
        %2485 = vmatpush1.msra.mxu0 0.0
        %2486 = vmatprep.subr.mxu0 0.0
        %2487 = vmatpush1.msra.mxu0 0.0
        %2488 = vmatprep.subr.mxu0 0.0
        %2489 = vmatpush1.msra.mxu0 0.0
        %2490 = vmatprep.subr.mxu0 0.0
        %2491 = vmatpush1.msra.mxu0 0.0
        %2492 = vmatprep.subr.mxu0 0.0
        %2493 = vmatpush1.msra.mxu0 0.0
        %2494 = vmatprep.subr.mxu0 0.0
        %2495 = vmatpush1.msra.mxu0 0.0
        %2496 = vmatprep.subr.mxu0 0.0
        %2497 = vmatpush1.msra.mxu0 0.0
        %2498 = vmatprep.subr.mxu0 0.0
        %2499 = vmatpush1.msra.mxu0 0.0
        %2500 = vmatprep.subr.mxu0 0.0
        %2501 = vmatpush1.msra.mxu0 0.0
        %2502 = vmatprep.subr.mxu0 0.0
        %2503 = vmatpush1.msra.mxu0 0.0
        %2504 = vmatprep.subr.mxu0 0.0
        %2505 = vmatpush1.msra.mxu0 0.0
        %2506 = vmatprep.subr.mxu0 0.0
        %2507 = vmatpush1.msra.mxu0 0.0
        %2508 = vmatprep.mubr.f32.mxu0 0.0
        %2509 = vmatmul.mubr.f32.gmra.mrb[0].mxu0 %v2442
        %v2510 = vpop.f32.mrb[0].mxu0
        %v2511 = vadd.f32 0.0, %v2510
        %v2512 = vpop.f32.mrb[0].mxu0
        %2513 = vmatprep.mubr.f32.mxu0 0.0
        %2514 = vmatmul.mubr.f32.gmra.mrb[0].mxu0 %v2443
        %v2515 = vpop.f32.mrb[0].mxu0
        %v2516 = vadd.f32 0.0, %v2515
        %v2517 = vpop.f32.mrb[0].mxu0
        %2518 = vdwg.mxu0
        %s2519 = scalar_lea.vmem [#allocation11], 256
        %v2520 = vld [vmem:[%s2519] sm:$0xff]
        %v2521 = vld [vmem:[%s2519 + $0x8] sm:$0xff]
        %v2522 = vld [vmem:[%s2519 + $0x10] sm:$0xff]
        %v2523 = vld [vmem:[%s2519 + $0x18] sm:$0xff]
        %v2524 = vld [vmem:[%s2519 + $0x20] sm:$0xff]
        %v2525 = vld [vmem:[%s2519 + $0x28] sm:$0xff]
        %v2526 = vld [vmem:[%s2519 + $0x30] sm:$0xff]
        %v2527 = vld [vmem:[%s2519 + $0x38] sm:$0xff]
        %v2528 = vld [vmem:[%s2519 + $0x40] sm:$0xff]
        %v2529 = vld [vmem:[%s2519 + $0x48] sm:$0xff]
        %v2530 = vld [vmem:[%s2519 + $0x50] sm:$0xff]
        %v2531 = vld [vmem:[%s2519 + $0x58] sm:$0xff]
        %v2532 = vld [vmem:[%s2519 + $0x60] sm:$0xff]
        %v2533 = vld [vmem:[%s2519 + $0x68] sm:$0xff]
        %v2534 = vld [vmem:[%s2519 + $0x70] sm:$0xff]
        %v2535 = vld [vmem:[%s2519 + $0x78] sm:$0xff]
        %2536 = vmatprep.subr.mxu0 0.0
        %2537 = vmatpush1.msra.mxu0 %v2520
        %2538 = vmatprep.subr.mxu0 0.0
        %2539 = vmatpush1.msra.mxu0 %v2521
        %2540 = vmatprep.subr.mxu0 0.0
        %2541 = vmatpush1.msra.mxu0 %v2522
        %2542 = vmatprep.subr.mxu0 0.0
        %2543 = vmatpush1.msra.mxu0 %v2523
        %2544 = vmatprep.subr.mxu0 0.0
        %2545 = vmatpush1.msra.mxu0 %v2524
        %2546 = vmatprep.subr.mxu0 0.0
        %2547 = vmatpush1.msra.mxu0 %v2525
        %2548 = vmatprep.subr.mxu0 0.0
        %2549 = vmatpush1.msra.mxu0 %v2526
        %2550 = vmatprep.subr.mxu0 0.0
        %2551 = vmatpush1.msra.mxu0 %v2527
        %2552 = vmatprep.subr.mxu0 0.0
        %2553 = vmatpush1.msra.mxu0 %v2528
        %2554 = vmatprep.subr.mxu0 0.0
        %2555 = vmatpush1.msra.mxu0 %v2529
        %2556 = vmatprep.subr.mxu0 0.0
        %2557 = vmatpush1.msra.mxu0 %v2530
        %2558 = vmatprep.subr.mxu0 0.0
        %2559 = vmatpush1.msra.mxu0 %v2531
        %2560 = vmatprep.subr.mxu0 0.0
        %2561 = vmatpush1.msra.mxu0 %v2532
        %2562 = vmatprep.subr.mxu0 0.0
        %2563 = vmatpush1.msra.mxu0 %v2533
        %2564 = vmatprep.subr.mxu0 0.0
        %2565 = vmatpush1.msra.mxu0 %v2534
        %2566 = vmatprep.subr.mxu0 0.0
        %2567 = vmatpush1.msra.mxu0 %v2535
        %2568 = vmatprep.subr.mxu0 0.0
        %2569 = vmatpush1.msra.mxu0 0.0
        %2570 = vmatprep.subr.mxu0 0.0
        %2571 = vmatpush1.msra.mxu0 0.0
        %2572 = vmatprep.subr.mxu0 0.0
        %2573 = vmatpush1.msra.mxu0 0.0
        %2574 = vmatprep.subr.mxu0 0.0
        %2575 = vmatpush1.msra.mxu0 0.0
        %2576 = vmatprep.subr.mxu0 0.0
        %2577 = vmatpush1.msra.mxu0 0.0
        %2578 = vmatprep.subr.mxu0 0.0
        %2579 = vmatpush1.msra.mxu0 0.0
        %2580 = vmatprep.subr.mxu0 0.0
        %2581 = vmatpush1.msra.mxu0 0.0
        %2582 = vmatprep.subr.mxu0 0.0
        %2583 = vmatpush1.msra.mxu0 0.0
        %2584 = vmatprep.subr.mxu0 0.0
        %2585 = vmatpush1.msra.mxu0 0.0
        %2586 = vmatprep.subr.mxu0 0.0
        %2587 = vmatpush1.msra.mxu0 0.0
        %2588 = vmatprep.subr.mxu0 0.0
        %2589 = vmatpush1.msra.mxu0 0.0
        %2590 = vmatprep.subr.mxu0 0.0
        %2591 = vmatpush1.msra.mxu0 0.0
        %2592 = vmatprep.subr.mxu0 0.0
        %2593 = vmatpush1.msra.mxu0 0.0
        %2594 = vmatprep.subr.mxu0 0.0
        %2595 = vmatpush1.msra.mxu0 0.0
        %2596 = vmatprep.subr.mxu0 0.0
        %2597 = vmatpush1.msra.mxu0 0.0
        %2598 = vmatprep.subr.mxu0 0.0
        %2599 = vmatpush1.msra.mxu0 0.0
        %2600 = vmatprep.mubr.f32.mxu0 0.0
        %2601 = vmatmul.mubr.f32.gmra.mrb[0].mxu0 %v2511
        %v2602 = vpop.f32.mrb[0].mxu0
        %v2603 = vadd.f32 0.0, %v2602
        %v2604 = vpop.f32.mrb[0].mxu0
        %2605 = vmatprep.mubr.f32.mxu0 0.0
        %2606 = vmatmul.mubr.f32.gmra.mrb[0].mxu0 %v2516
        %v2607 = vpop.f32.mrb[0].mxu0
        %v2608 = vadd.f32 0.0, %v2607
        %v2609 = vpop.f32.mrb[0].mxu0
        %2610 = vdwg.mxu0
        %v2611 = vadd.f32 %v1903, %v2603
        %v2612 = vadd.f32 %v1908, %v2608
        %s2613 = scalar_lea.vmem [#allocation7], 384
        %v2614 = vld [vmem:[%s2613] sm:$0xff]
        %v2615 = vld [vmem:[%s2613 + $0x8] sm:$0xff]
        %v2616 = vld [vmem:[%s2613 + $0x10] sm:$0xff]
        %v2617 = vld [vmem:[%s2613 + $0x18] sm:$0xff]
        %v2618 = vld [vmem:[%s2613 + $0x20] sm:$0xff]
        %v2619 = vld [vmem:[%s2613 + $0x28] sm:$0xff]
        %v2620 = vld [vmem:[%s2613 + $0x30] sm:$0xff]
        %v2621 = vld [vmem:[%s2613 + $0x38] sm:$0xff]
        %v2622 = vld [vmem:[%s2613 + $0x40] sm:$0xff]
        %v2623 = vld [vmem:[%s2613 + $0x48] sm:$0xff]
        %v2624 = vld [vmem:[%s2613 + $0x50] sm:$0xff]
        %v2625 = vld [vmem:[%s2613 + $0x58] sm:$0xff]
        %v2626 = vld [vmem:[%s2613 + $0x60] sm:$0xff]
        %v2627 = vld [vmem:[%s2613 + $0x68] sm:$0xff]
        %v2628 = vld [vmem:[%s2613 + $0x70] sm:$0xff]
        %v2629 = vld [vmem:[%s2613 + $0x78] sm:$0xff]
        %s2630 = scalar_lea.vmem %s3, 3
        %v2631 = vld [vmem:[%s2630] sm:$0x1]
        %v2633 = vlaneseq
        %v2634 = vshrl.u32 %v2633, 7
        %v2635 = vsub.s32 0, %v2634
        %v2636 = vrot.slane %v2631, %v2635
        %2638 = vmatprep.subr.mxu0 0.0
        %2639 = vmatpush1.msra.mxu0 %v2614
        %2640 = vmatprep.subr.mxu0 0.0
        %2641 = vmatpush1.msra.mxu0 %v2615
        %2642 = vmatprep.subr.mxu0 0.0
        %2643 = vmatpush1.msra.mxu0 %v2616
        %2644 = vmatprep.subr.mxu0 0.0
        %2645 = vmatpush1.msra.mxu0 %v2617
        %2646 = vmatprep.subr.mxu0 0.0
        %2647 = vmatpush1.msra.mxu0 %v2618
        %2648 = vmatprep.subr.mxu0 0.0
        %2649 = vmatpush1.msra.mxu0 %v2619
        %2650 = vmatprep.subr.mxu0 0.0
        %2651 = vmatpush1.msra.mxu0 %v2620
        %2652 = vmatprep.subr.mxu0 0.0
        %2653 = vmatpush1.msra.mxu0 %v2621
        %2654 = vmatprep.subr.mxu0 0.0
        %2655 = vmatpush1.msra.mxu0 %v2622
        %2656 = vmatprep.subr.mxu0 0.0
        %2657 = vmatpush1.msra.mxu0 %v2623
        %2658 = vmatprep.subr.mxu0 0.0
        %2659 = vmatpush1.msra.mxu0 %v2624
        %2660 = vmatprep.subr.mxu0 0.0
        %2661 = vmatpush1.msra.mxu0 %v2625
        %2662 = vmatprep.subr.mxu0 0.0
        %2663 = vmatpush1.msra.mxu0 %v2626
        %2664 = vmatprep.subr.mxu0 0.0
        %2665 = vmatpush1.msra.mxu0 %v2627
        %2666 = vmatprep.subr.mxu0 0.0
        %2667 = vmatpush1.msra.mxu0 %v2628
        %2668 = vmatprep.subr.mxu0 0.0
        %2669 = vmatpush1.msra.mxu0 %v2629
        %2670 = vmatprep.subr.mxu0 0.0
        %2671 = vmatpush1.msra.mxu0 0.0
        %2672 = vmatprep.subr.mxu0 0.0
        %2673 = vmatpush1.msra.mxu0 0.0
        %2674 = vmatprep.subr.mxu0 0.0
        %2675 = vmatpush1.msra.mxu0 0.0
        %2676 = vmatprep.subr.mxu0 0.0
        %2677 = vmatpush1.msra.mxu0 0.0
        %2678 = vmatprep.subr.mxu0 0.0
        %2679 = vmatpush1.msra.mxu0 0.0
        %2680 = vmatprep.subr.mxu0 0.0
        %2681 = vmatpush1.msra.mxu0 0.0
        %2682 = vmatprep.subr.mxu0 0.0
        %2683 = vmatpush1.msra.mxu0 0.0
        %2684 = vmatprep.subr.mxu0 0.0
        %2685 = vmatpush1.msra.mxu0 0.0
        %2686 = vmatprep.subr.mxu0 0.0
        %2687 = vmatpush1.msra.mxu0 0.0
        %2688 = vmatprep.subr.mxu0 0.0
        %2689 = vmatpush1.msra.mxu0 0.0
        %2690 = vmatprep.subr.mxu0 0.0
        %2691 = vmatpush1.msra.mxu0 0.0
        %2692 = vmatprep.subr.mxu0 0.0
        %2693 = vmatpush1.msra.mxu0 0.0
        %2694 = vmatprep.subr.mxu0 0.0
        %2695 = vmatpush1.msra.mxu0 0.0
        %2696 = vmatprep.subr.mxu0 0.0
        %2697 = vmatpush1.msra.mxu0 0.0
        %2698 = vmatprep.subr.mxu0 0.0
        %2699 = vmatpush1.msra.mxu0 0.0
        %2700 = vmatprep.subr.mxu0 0.0
        %2701 = vmatpush1.msra.mxu0 0.0
        %2702 = vmatprep.mubr.f32.mxu0 0.0
        %2703 = vmatmul.mubr.f32.gmra.mrb[0].mxu0 %v496
        %v2704 = vpop.f32.mrb[0].mxu0
        %v2705 = vadd.f32 %v2636, %v2704
        %v2706 = vpop.f32.mrb[0].mxu0
        %2707 = vmatprep.mubr.f32.mxu0 0.0
        %2708 = vmatmul.mubr.f32.gmra.mrb[0].mxu0 %v497
        %v2709 = vpop.f32.mrb[0].mxu0
        %v2710 = vadd.f32 %v2636, %v2709
        %v2711 = vpop.f32.mrb[0].mxu0
        %2712 = vdwg.mxu0
        %s2713 = scalar_lea.vmem [#allocation8], 384
        %v2714 = vld [vmem:[%s2713] sm:$0xff]
        %v2715 = vld [vmem:[%s2713 + $0x8] sm:$0xff]
        %v2716 = vld [vmem:[%s2713 + $0x10] sm:$0xff]
        %v2717 = vld [vmem:[%s2713 + $0x18] sm:$0xff]
        %v2718 = vld [vmem:[%s2713 + $0x20] sm:$0xff]
        %v2719 = vld [vmem:[%s2713 + $0x28] sm:$0xff]
        %v2720 = vld [vmem:[%s2713 + $0x30] sm:$0xff]
        %v2721 = vld [vmem:[%s2713 + $0x38] sm:$0xff]
        %v2722 = vld [vmem:[%s2713 + $0x40] sm:$0xff]
        %v2723 = vld [vmem:[%s2713 + $0x48] sm:$0xff]
        %v2724 = vld [vmem:[%s2713 + $0x50] sm:$0xff]
        %v2725 = vld [vmem:[%s2713 + $0x58] sm:$0xff]
        %v2726 = vld [vmem:[%s2713 + $0x60] sm:$0xff]
        %v2727 = vld [vmem:[%s2713 + $0x68] sm:$0xff]
        %v2728 = vld [vmem:[%s2713 + $0x70] sm:$0xff]
        %v2729 = vld [vmem:[%s2713 + $0x78] sm:$0xff]
        %s2730 = scalar_lea.vmem %s5, 3
        %v2731 = vld [vmem:[%s2730] sm:$0x1]
        %v2733 = vlaneseq
        %v2734 = vshrl.u32 %v2733, 7
        %v2735 = vsub.s32 0, %v2734
        %v2736 = vrot.slane %v2731, %v2735
        %2738 = vmatprep.subr.mxu0 0.0
        %2739 = vmatpush1.msra.mxu0 %v2714
        %2740 = vmatprep.subr.mxu0 0.0
        %2741 = vmatpush1.msra.mxu0 %v2715
        %2742 = vmatprep.subr.mxu0 0.0
        %2743 = vmatpush1.msra.mxu0 %v2716
        %2744 = vmatprep.subr.mxu0 0.0
        %2745 = vmatpush1.msra.mxu0 %v2717
        %2746 = vmatprep.subr.mxu0 0.0
        %2747 = vmatpush1.msra.mxu0 %v2718
        %2748 = vmatprep.subr.mxu0 0.0
        %2749 = vmatpush1.msra.mxu0 %v2719
        %2750 = vmatprep.subr.mxu0 0.0
        %2751 = vmatpush1.msra.mxu0 %v2720
        %2752 = vmatprep.subr.mxu0 0.0
        %2753 = vmatpush1.msra.mxu0 %v2721
        %2754 = vmatprep.subr.mxu0 0.0
        %2755 = vmatpush1.msra.mxu0 %v2722
        %2756 = vmatprep.subr.mxu0 0.0
        %2757 = vmatpush1.msra.mxu0 %v2723
        %2758 = vmatprep.subr.mxu0 0.0
        %2759 = vmatpush1.msra.mxu0 %v2724
        %2760 = vmatprep.subr.mxu0 0.0
        %2761 = vmatpush1.msra.mxu0 %v2725
        %2762 = vmatprep.subr.mxu0 0.0
        %2763 = vmatpush1.msra.mxu0 %v2726
        %2764 = vmatprep.subr.mxu0 0.0
        %2765 = vmatpush1.msra.mxu0 %v2727
        %2766 = vmatprep.subr.mxu0 0.0
        %2767 = vmatpush1.msra.mxu0 %v2728
        %2768 = vmatprep.subr.mxu0 0.0
        %2769 = vmatpush1.msra.mxu0 %v2729
        %2770 = vmatprep.subr.mxu0 0.0
        %2771 = vmatpush1.msra.mxu0 0.0
        %2772 = vmatprep.subr.mxu0 0.0
        %2773 = vmatpush1.msra.mxu0 0.0
        %2774 = vmatprep.subr.mxu0 0.0
        %2775 = vmatpush1.msra.mxu0 0.0
        %2776 = vmatprep.subr.mxu0 0.0
        %2777 = vmatpush1.msra.mxu0 0.0
        %2778 = vmatprep.subr.mxu0 0.0
        %2779 = vmatpush1.msra.mxu0 0.0
        %2780 = vmatprep.subr.mxu0 0.0
        %2781 = vmatpush1.msra.mxu0 0.0
        %2782 = vmatprep.subr.mxu0 0.0
        %2783 = vmatpush1.msra.mxu0 0.0
        %2784 = vmatprep.subr.mxu0 0.0
        %2785 = vmatpush1.msra.mxu0 0.0
        %2786 = vmatprep.subr.mxu0 0.0
        %2787 = vmatpush1.msra.mxu0 0.0
        %2788 = vmatprep.subr.mxu0 0.0
        %2789 = vmatpush1.msra.mxu0 0.0
        %2790 = vmatprep.subr.mxu0 0.0
        %2791 = vmatpush1.msra.mxu0 0.0
        %2792 = vmatprep.subr.mxu0 0.0
        %2793 = vmatpush1.msra.mxu0 0.0
        %2794 = vmatprep.subr.mxu0 0.0
        %2795 = vmatpush1.msra.mxu0 0.0
        %2796 = vmatprep.subr.mxu0 0.0
        %2797 = vmatpush1.msra.mxu0 0.0
        %2798 = vmatprep.subr.mxu0 0.0
        %2799 = vmatpush1.msra.mxu0 0.0
        %2800 = vmatprep.subr.mxu0 0.0
        %2801 = vmatpush1.msra.mxu0 0.0
        %2802 = vmatprep.mubr.f32.mxu0 0.0
        %2803 = vmatmul.mubr.f32.gmra.mrb[0].mxu0 %v498
        %v2804 = vpop.f32.mrb[0].mxu0
        %v2805 = vadd.f32 %v2736, %v2804
        %v2806 = vpop.f32.mrb[0].mxu0
        %2807 = vmatprep.mubr.f32.mxu0 0.0
        %2808 = vmatmul.mubr.f32.gmra.mrb[0].mxu0 %v499
        %v2809 = vpop.f32.mrb[0].mxu0
        %v2810 = vadd.f32 %v2736, %v2809
        %v2811 = vpop.f32.mrb[0].mxu0
        %2812 = vmatprep.mubr.f32.mxu0 0.0
        %2813 = vmatmul.mubr.f32.gmra.mrb[0].mxu0 %v500
        %v2814 = vpop.f32.mrb[0].mxu0
        %v2815 = vadd.f32 %v2736, %v2814
        %v2816 = vpop.f32.mrb[0].mxu0
        %2817 = vmatprep.mubr.f32.mxu0 0.0
        %2818 = vmatmul.mubr.f32.gmra.mrb[0].mxu0 %v501
        %v2819 = vpop.f32.mrb[0].mxu0
        %v2820 = vadd.f32 %v2736, %v2819
        %v2821 = vpop.f32.mrb[0].mxu0
        %2822 = vmatprep.mubr.f32.mxu0 0.0
        %2823 = vmatmul.mubr.f32.gmra.mrb[0].mxu0 %v502
        %v2824 = vpop.f32.mrb[0].mxu0
        %v2825 = vadd.f32 %v2736, %v2824
        %v2826 = vpop.f32.mrb[0].mxu0
        %2827 = vmatprep.mubr.f32.mxu0 0.0
        %2828 = vmatmul.mubr.f32.gmra.mrb[0].mxu0 %v503
        %v2829 = vpop.f32.mrb[0].mxu0
        %v2830 = vadd.f32 %v2736, %v2829
        %v2831 = vpop.f32.mrb[0].mxu0
        %2832 = vmatprep.mubr.f32.mxu0 0.0
        %2833 = vmatmul.mubr.f32.gmra.mrb[0].mxu0 %v504
        %v2834 = vpop.f32.mrb[0].mxu0
        %v2835 = vadd.f32 %v2736, %v2834
        %v2836 = vpop.f32.mrb[0].mxu0
        %2837 = vmatprep.mubr.f32.mxu0 0.0
        %2838 = vmatmul.mubr.f32.gmra.mrb[0].mxu0 %v505
        %v2839 = vpop.f32.mrb[0].mxu0
        %v2840 = vadd.f32 %v2736, %v2839
        %v2841 = vpop.f32.mrb[0].mxu0
        %2842 = vmatprep.mubr.f32.mxu0 0.0
        %2843 = vmatmul.mubr.f32.gmra.mrb[0].mxu0 %v506
        %v2844 = vpop.f32.mrb[0].mxu0
        %v2845 = vadd.f32 %v2736, %v2844
        %v2846 = vpop.f32.mrb[0].mxu0
        %2847 = vmatprep.mubr.f32.mxu0 0.0
        %2848 = vmatmul.mubr.f32.gmra.mrb[0].mxu0 %v507
        %v2849 = vpop.f32.mrb[0].mxu0
        %v2850 = vadd.f32 %v2736, %v2849
        %v2851 = vpop.f32.mrb[0].mxu0
        %2852 = vmatprep.mubr.f32.mxu0 0.0
        %2853 = vmatmul.mubr.f32.gmra.mrb[0].mxu0 %v508
        %v2854 = vpop.f32.mrb[0].mxu0
        %v2855 = vadd.f32 %v2736, %v2854
        %v2856 = vpop.f32.mrb[0].mxu0
        %2857 = vmatprep.mubr.f32.mxu0 0.0
        %2858 = vmatmul.mubr.f32.gmra.mrb[0].mxu0 %v509
        %v2859 = vpop.f32.mrb[0].mxu0
        %v2860 = vadd.f32 %v2736, %v2859
        %v2861 = vpop.f32.mrb[0].mxu0
        %2862 = vmatprep.mubr.f32.mxu0 0.0
        %2863 = vmatmul.mubr.f32.gmra.mrb[0].mxu0 %v510
        %v2864 = vpop.f32.mrb[0].mxu0
        %v2865 = vadd.f32 %v2736, %v2864
        %v2866 = vpop.f32.mrb[0].mxu0
        %2867 = vmatprep.mubr.f32.mxu0 0.0
        %2868 = vmatmul.mubr.f32.gmra.mrb[0].mxu0 %v511
        %v2869 = vpop.f32.mrb[0].mxu0
        %v2870 = vadd.f32 %v2736, %v2869
        %v2871 = vpop.f32.mrb[0].mxu0
        %2872 = vmatprep.mubr.f32.mxu0 0.0
        %2873 = vmatmul.mubr.f32.gmra.mrb[0].mxu0 %v512
        %v2874 = vpop.f32.mrb[0].mxu0
        %v2875 = vadd.f32 %v2736, %v2874
        %v2876 = vpop.f32.mrb[0].mxu0
        %2877 = vmatprep.mubr.f32.mxu0 0.0
        %2878 = vmatmul.mubr.f32.gmra.mrb[0].mxu0 %v513
        %v2879 = vpop.f32.mrb[0].mxu0
        %v2880 = vadd.f32 %v2736, %v2879
        %v2881 = vpop.f32.mrb[0].mxu0
        %2882 = vdwg.mxu0
        %s2883 = scalar_lea.vmem [#allocation10], 384
        %v2884 = vld [vmem:[%s2883] sm:$0xff]
        %v2885 = vld [vmem:[%s2883 + $0x8] sm:$0xff]
        %v2886 = vld [vmem:[%s2883 + $0x10] sm:$0xff]
        %v2887 = vld [vmem:[%s2883 + $0x18] sm:$0xff]
        %v2888 = vld [vmem:[%s2883 + $0x20] sm:$0xff]
        %v2889 = vld [vmem:[%s2883 + $0x28] sm:$0xff]
        %v2890 = vld [vmem:[%s2883 + $0x30] sm:$0xff]
        %v2891 = vld [vmem:[%s2883 + $0x38] sm:$0xff]
        %v2892 = vld [vmem:[%s2883 + $0x40] sm:$0xff]
        %v2893 = vld [vmem:[%s2883 + $0x48] sm:$0xff]
        %v2894 = vld [vmem:[%s2883 + $0x50] sm:$0xff]
        %v2895 = vld [vmem:[%s2883 + $0x58] sm:$0xff]
        %v2896 = vld [vmem:[%s2883 + $0x60] sm:$0xff]
        %v2897 = vld [vmem:[%s2883 + $0x68] sm:$0xff]
        %v2898 = vld [vmem:[%s2883 + $0x70] sm:$0xff]
        %v2899 = vld [vmem:[%s2883 + $0x78] sm:$0xff]
        %s2900 = scalar_lea.vmem %s7, 3
        %v2901 = vld [vmem:[%s2900] sm:$0x1]
        %v2903 = vlaneseq
        %v2904 = vshrl.u32 %v2903, 7
        %v2905 = vsub.s32 0, %v2904
        %v2906 = vrot.slane %v2901, %v2905
        %2908 = vmatprep.subr.mxu0 0.0
        %2909 = vmatpush1.msra.mxu0 %v2884
        %2910 = vmatprep.subr.mxu0 0.0
        %2911 = vmatpush1.msra.mxu0 %v2885
        %2912 = vmatprep.subr.mxu0 0.0
        %2913 = vmatpush1.msra.mxu0 %v2886
        %2914 = vmatprep.subr.mxu0 0.0
        %2915 = vmatpush1.msra.mxu0 %v2887
        %2916 = vmatprep.subr.mxu0 0.0
        %2917 = vmatpush1.msra.mxu0 %v2888
        %2918 = vmatprep.subr.mxu0 0.0
        %2919 = vmatpush1.msra.mxu0 %v2889
        %2920 = vmatprep.subr.mxu0 0.0
        %2921 = vmatpush1.msra.mxu0 %v2890
        %2922 = vmatprep.subr.mxu0 0.0
        %2923 = vmatpush1.msra.mxu0 %v2891
        %2924 = vmatprep.subr.mxu0 0.0
        %2925 = vmatpush1.msra.mxu0 %v2892
        %2926 = vmatprep.subr.mxu0 0.0
        %2927 = vmatpush1.msra.mxu0 %v2893
        %2928 = vmatprep.subr.mxu0 0.0
        %2929 = vmatpush1.msra.mxu0 %v2894
        %2930 = vmatprep.subr.mxu0 0.0
        %2931 = vmatpush1.msra.mxu0 %v2895
        %2932 = vmatprep.subr.mxu0 0.0
        %2933 = vmatpush1.msra.mxu0 %v2896
        %2934 = vmatprep.subr.mxu0 0.0
        %2935 = vmatpush1.msra.mxu0 %v2897
        %2936 = vmatprep.subr.mxu0 0.0
        %2937 = vmatpush1.msra.mxu0 %v2898
        %2938 = vmatprep.subr.mxu0 0.0
        %2939 = vmatpush1.msra.mxu0 %v2899
        %2940 = vmatprep.subr.mxu0 0.0
        %2941 = vmatpush1.msra.mxu0 0.0
        %2942 = vmatprep.subr.mxu0 0.0
        %2943 = vmatpush1.msra.mxu0 0.0
        %2944 = vmatprep.subr.mxu0 0.0
        %2945 = vmatpush1.msra.mxu0 0.0
        %2946 = vmatprep.subr.mxu0 0.0
        %2947 = vmatpush1.msra.mxu0 0.0
        %2948 = vmatprep.subr.mxu0 0.0
        %2949 = vmatpush1.msra.mxu0 0.0
        %2950 = vmatprep.subr.mxu0 0.0
        %2951 = vmatpush1.msra.mxu0 0.0
        %2952 = vmatprep.subr.mxu0 0.0
        %2953 = vmatpush1.msra.mxu0 0.0
        %2954 = vmatprep.subr.mxu0 0.0
        %2955 = vmatpush1.msra.mxu0 0.0
        %2956 = vmatprep.subr.mxu0 0.0
        %2957 = vmatpush1.msra.mxu0 0.0
        %2958 = vmatprep.subr.mxu0 0.0
        %2959 = vmatpush1.msra.mxu0 0.0
        %2960 = vmatprep.subr.mxu0 0.0
        %2961 = vmatpush1.msra.mxu0 0.0
        %2962 = vmatprep.subr.mxu0 0.0
        %2963 = vmatpush1.msra.mxu0 0.0
        %2964 = vmatprep.subr.mxu0 0.0
        %2965 = vmatpush1.msra.mxu0 0.0
        %2966 = vmatprep.subr.mxu0 0.0
        %2967 = vmatpush1.msra.mxu0 0.0
        %2968 = vmatprep.subr.mxu0 0.0
        %2969 = vmatpush1.msra.mxu0 0.0
        %2970 = vmatprep.subr.mxu0 0.0
        %2971 = vmatpush1.msra.mxu0 0.0
        %2972 = vmatprep.mubr.f32.mxu0 0.0
        %2973 = vmatmul.mubr.f32.gmra.mrb[0].mxu0 %v498
        %v2974 = vpop.f32.mrb[0].mxu0
        %v2975 = vadd.f32 %v2906, %v2974
        %v2976 = vpop.f32.mrb[0].mxu0
        %2977 = vmatprep.mubr.f32.mxu0 0.0
        %2978 = vmatmul.mubr.f32.gmra.mrb[0].mxu0 %v499
        %v2979 = vpop.f32.mrb[0].mxu0
        %v2980 = vadd.f32 %v2906, %v2979
        %v2981 = vpop.f32.mrb[0].mxu0
        %2982 = vmatprep.mubr.f32.mxu0 0.0
        %2983 = vmatmul.mubr.f32.gmra.mrb[0].mxu0 %v500
        %v2984 = vpop.f32.mrb[0].mxu0
        %v2985 = vadd.f32 %v2906, %v2984
        %v2986 = vpop.f32.mrb[0].mxu0
        %2987 = vmatprep.mubr.f32.mxu0 0.0
        %2988 = vmatmul.mubr.f32.gmra.mrb[0].mxu0 %v501
        %v2989 = vpop.f32.mrb[0].mxu0
        %v2990 = vadd.f32 %v2906, %v2989
        %v2991 = vpop.f32.mrb[0].mxu0
        %2992 = vmatprep.mubr.f32.mxu0 0.0
        %2993 = vmatmul.mubr.f32.gmra.mrb[0].mxu0 %v502
        %v2994 = vpop.f32.mrb[0].mxu0
        %v2995 = vadd.f32 %v2906, %v2994
        %v2996 = vpop.f32.mrb[0].mxu0
        %2997 = vmatprep.mubr.f32.mxu0 0.0
        %2998 = vmatmul.mubr.f32.gmra.mrb[0].mxu0 %v503
        %v2999 = vpop.f32.mrb[0].mxu0
        %v3000 = vadd.f32 %v2906, %v2999
        %v3001 = vpop.f32.mrb[0].mxu0
        %3002 = vmatprep.mubr.f32.mxu0 0.0
        %3003 = vmatmul.mubr.f32.gmra.mrb[0].mxu0 %v504
        %v3004 = vpop.f32.mrb[0].mxu0
        %v3005 = vadd.f32 %v2906, %v3004
        %v3006 = vpop.f32.mrb[0].mxu0
        %3007 = vmatprep.mubr.f32.mxu0 0.0
        %3008 = vmatmul.mubr.f32.gmra.mrb[0].mxu0 %v505
        %v3009 = vpop.f32.mrb[0].mxu0
        %v3010 = vadd.f32 %v2906, %v3009
        %v3011 = vpop.f32.mrb[0].mxu0
        %3012 = vmatprep.mubr.f32.mxu0 0.0
        %3013 = vmatmul.mubr.f32.gmra.mrb[0].mxu0 %v506
        %v3014 = vpop.f32.mrb[0].mxu0
        %v3015 = vadd.f32 %v2906, %v3014
        %v3016 = vpop.f32.mrb[0].mxu0
        %3017 = vmatprep.mubr.f32.mxu0 0.0
        %3018 = vmatmul.mubr.f32.gmra.mrb[0].mxu0 %v507
        %v3019 = vpop.f32.mrb[0].mxu0
        %v3020 = vadd.f32 %v2906, %v3019
        %v3021 = vpop.f32.mrb[0].mxu0
        %3022 = vmatprep.mubr.f32.mxu0 0.0
        %3023 = vmatmul.mubr.f32.gmra.mrb[0].mxu0 %v508
        %v3024 = vpop.f32.mrb[0].mxu0
        %v3025 = vadd.f32 %v2906, %v3024
        %v3026 = vpop.f32.mrb[0].mxu0
        %3027 = vmatprep.mubr.f32.mxu0 0.0
        %3028 = vmatmul.mubr.f32.gmra.mrb[0].mxu0 %v509
        %v3029 = vpop.f32.mrb[0].mxu0
        %v3030 = vadd.f32 %v2906, %v3029
        %v3031 = vpop.f32.mrb[0].mxu0
        %3032 = vmatprep.mubr.f32.mxu0 0.0
        %3033 = vmatmul.mubr.f32.gmra.mrb[0].mxu0 %v510
        %v3034 = vpop.f32.mrb[0].mxu0
        %v3035 = vadd.f32 %v2906, %v3034
        %v3036 = vpop.f32.mrb[0].mxu0
        %3037 = vmatprep.mubr.f32.mxu0 0.0
        %3038 = vmatmul.mubr.f32.gmra.mrb[0].mxu0 %v511
        %v3039 = vpop.f32.mrb[0].mxu0
        %v3040 = vadd.f32 %v2906, %v3039
        %v3041 = vpop.f32.mrb[0].mxu0
        %3042 = vmatprep.mubr.f32.mxu0 0.0
        %3043 = vmatmul.mubr.f32.gmra.mrb[0].mxu0 %v512
        %v3044 = vpop.f32.mrb[0].mxu0
        %v3045 = vadd.f32 %v2906, %v3044
        %v3046 = vpop.f32.mrb[0].mxu0
        %3047 = vmatprep.mubr.f32.mxu0 0.0
        %3048 = vmatmul.mubr.f32.gmra.mrb[0].mxu0 %v513
        %v3049 = vpop.f32.mrb[0].mxu0
        %v3050 = vadd.f32 %v2906, %v3049
        %v3051 = vpop.f32.mrb[0].mxu0
        %3052 = vdwg.mxu0
        %3053 = vmatprep.subr.mxu0 0.0
        %3054 = vmatpush1.xpose.msra.mxu0 %v2805
        %3055 = vmatprep.subr.mxu0 0.0
        %3056 = vmatpush1.xpose.msra.mxu0 %v2810
        %3057 = vmatprep.subr.mxu0 0.0
        %3058 = vmatpush1.xpose.msra.mxu0 %v2815
        %3059 = vmatprep.subr.mxu0 0.0
        %3060 = vmatpush1.xpose.msra.mxu0 %v2820
        %3061 = vmatprep.subr.mxu0 0.0
        %3062 = vmatpush1.xpose.msra.mxu0 %v2825
        %3063 = vmatprep.subr.mxu0 0.0
        %3064 = vmatpush1.xpose.msra.mxu0 %v2830
        %3065 = vmatprep.subr.mxu0 0.0
        %3066 = vmatpush1.xpose.msra.mxu0 %v2835
        %3067 = vmatprep.subr.mxu0 0.0
        %3068 = vmatpush1.xpose.msra.mxu0 %v2840
        %3069 = vmatprep.subr.mxu0 0.0
        %3070 = vmatpush1.xpose.msra.mxu0 %v2845
        %3071 = vmatprep.subr.mxu0 0.0
        %3072 = vmatpush1.xpose.msra.mxu0 %v2850
        %3073 = vmatprep.subr.mxu0 0.0
        %3074 = vmatpush1.xpose.msra.mxu0 %v2855
        %3075 = vmatprep.subr.mxu0 0.0
        %3076 = vmatpush1.xpose.msra.mxu0 %v2860
        %3077 = vmatprep.subr.mxu0 0.0
        %3078 = vmatpush1.xpose.msra.mxu0 %v2865
        %3079 = vmatprep.subr.mxu0 0.0
        %3080 = vmatpush1.xpose.msra.mxu0 %v2870
        %3081 = vmatprep.subr.mxu0 0.0
        %3082 = vmatpush1.xpose.msra.mxu0 %v2875
        %3083 = vmatprep.subr.mxu0 0.0
        %3084 = vmatpush1.xpose.msra.mxu0 %v2880
        %3085 = vmatprep.subr.mxu0 0.0
        %3086 = vmatpush1.xpose.msra.mxu0 0.0
        %3087 = vmatprep.subr.mxu0 0.0
        %3088 = vmatpush1.xpose.msra.mxu0 0.0
        %3089 = vmatprep.subr.mxu0 0.0
        %3090 = vmatpush1.xpose.msra.mxu0 0.0
        %3091 = vmatprep.subr.mxu0 0.0
        %3092 = vmatpush1.xpose.msra.mxu0 0.0
        %3093 = vmatprep.subr.mxu0 0.0
        %3094 = vmatpush1.xpose.msra.mxu0 0.0
        %3095 = vmatprep.subr.mxu0 0.0
        %3096 = vmatpush1.xpose.msra.mxu0 0.0
        %3097 = vmatprep.subr.mxu0 0.0
        %3098 = vmatpush1.xpose.msra.mxu0 0.0
        %3099 = vmatprep.subr.mxu0 0.0
        %3100 = vmatpush1.xpose.msra.mxu0 0.0
        %3101 = vmatprep.subr.mxu0 0.0
        %3102 = vmatpush1.xpose.msra.mxu0 0.0
        %3103 = vmatprep.subr.mxu0 0.0
        %3104 = vmatpush1.xpose.msra.mxu0 0.0
        %3105 = vmatprep.subr.mxu0 0.0
        %3106 = vmatpush1.xpose.msra.mxu0 0.0
        %3107 = vmatprep.subr.mxu0 0.0
        %3108 = vmatpush1.xpose.msra.mxu0 0.0
        %3109 = vmatprep.subr.mxu0 0.0
        %3110 = vmatpush1.xpose.msra.mxu0 0.0
        %3111 = vmatprep.subr.mxu0 0.0
        %3112 = vmatpush1.xpose.msra.mxu0 0.0
        %3113 = vmatprep.subr.mxu0 0.0
        %3114 = vmatpush1.xpose.msra.mxu0 0.0
        %3115 = vmatprep.subr.mxu0 0.0
        %3116 = vmatpush1.xpose.msra.mxu0 0.0
        %3117 = vmatprep.mubr.f32.mxu0 0.0
        %3118 = vmatmul.mubr.f32.gmra.mrb[0].mxu0 %v2705
        %v3119 = vpop.f32.mrb[0].mxu0
        %v3120 = vadd.f32 %v517, %v3119
        %v3121 = vpop.f32.mrb[0].mxu0
        %3122 = vmatprep.mubr.f32.mxu0 0.0
        %3123 = vmatmul.mubr.f32.gmra.mrb[0].mxu0 %v2710
        %v3124 = vpop.f32.mrb[0].mxu0
        %v3125 = vadd.f32 %v517, %v3124
        %v3126 = vpop.f32.mrb[0].mxu0
        %3127 = vdwg.mxu0
        %3128 = vmax.xlane.f32.xlu0 %v3120
        %v3129 = vpop.xlane.xlu0 %3128
        %3130 = vmax.xlane.f32.xlu0 %v3125
        %v3131 = vpop.xlane.xlu0 %3130
        %v3132 = vsub.f32 %v3120, %v3129
        %v3133 = vsub.f32 %v3125, %v3131
        %v3134 = vmul.f32 %v3132, 1.442695
        %v3135 = vpow.pop %v3134
        %v3136 = vmul.f32 %v3133, 1.442695
        %v3137 = vpow.pop %v3136
        %3138 = vadd.xlane.f32.xlu0 %v3135
        %v3139 = vpop.xlane.xlu0 %3138
        %3140 = vadd.xlane.f32.xlu0 %v3137
        %v3141 = vpop.xlane.xlu0 %3140
        %v3142 = vrcp.pop %v3139
        %v3143 = vrcp.pop %v3141
        %v3144 = vmul.f32 %v3135, %v3142
        %v3145 = vmul.f32 %v3137, %v3143
        %3146 = vmatprep.subr.mxu0 0.0
        %3147 = vmatpush1.msra.mxu0 %v2975
        %3148 = vmatprep.subr.mxu0 0.0
        %3149 = vmatpush1.msra.mxu0 %v2980
        %3150 = vmatprep.subr.mxu0 0.0
        %3151 = vmatpush1.msra.mxu0 %v2985
        %3152 = vmatprep.subr.mxu0 0.0
        %3153 = vmatpush1.msra.mxu0 %v2990
        %3154 = vmatprep.subr.mxu0 0.0
        %3155 = vmatpush1.msra.mxu0 %v2995
        %3156 = vmatprep.subr.mxu0 0.0
        %3157 = vmatpush1.msra.mxu0 %v3000
        %3158 = vmatprep.subr.mxu0 0.0
        %3159 = vmatpush1.msra.mxu0 %v3005
        %3160 = vmatprep.subr.mxu0 0.0
        %3161 = vmatpush1.msra.mxu0 %v3010
        %3162 = vmatprep.subr.mxu0 0.0
        %3163 = vmatpush1.msra.mxu0 %v3015
        %3164 = vmatprep.subr.mxu0 0.0
        %3165 = vmatpush1.msra.mxu0 %v3020
        %3166 = vmatprep.subr.mxu0 0.0
        %3167 = vmatpush1.msra.mxu0 %v3025
        %3168 = vmatprep.subr.mxu0 0.0
        %3169 = vmatpush1.msra.mxu0 %v3030
        %3170 = vmatprep.subr.mxu0 0.0
        %3171 = vmatpush1.msra.mxu0 %v3035
        %3172 = vmatprep.subr.mxu0 0.0
        %3173 = vmatpush1.msra.mxu0 %v3040
        %3174 = vmatprep.subr.mxu0 0.0
        %3175 = vmatpush1.msra.mxu0 %v3045
        %3176 = vmatprep.subr.mxu0 0.0
        %3177 = vmatpush1.msra.mxu0 %v3050
        %3178 = vmatprep.subr.mxu0 0.0
        %3179 = vmatpush1.msra.mxu0 0.0
        %3180 = vmatprep.subr.mxu0 0.0
        %3181 = vmatpush1.msra.mxu0 0.0
        %3182 = vmatprep.subr.mxu0 0.0
        %3183 = vmatpush1.msra.mxu0 0.0
        %3184 = vmatprep.subr.mxu0 0.0
        %3185 = vmatpush1.msra.mxu0 0.0
        %3186 = vmatprep.subr.mxu0 0.0
        %3187 = vmatpush1.msra.mxu0 0.0
        %3188 = vmatprep.subr.mxu0 0.0
        %3189 = vmatpush1.msra.mxu0 0.0
        %3190 = vmatprep.subr.mxu0 0.0
        %3191 = vmatpush1.msra.mxu0 0.0
        %3192 = vmatprep.subr.mxu0 0.0
        %3193 = vmatpush1.msra.mxu0 0.0
        %3194 = vmatprep.subr.mxu0 0.0
        %3195 = vmatpush1.msra.mxu0 0.0
        %3196 = vmatprep.subr.mxu0 0.0
        %3197 = vmatpush1.msra.mxu0 0.0
        %3198 = vmatprep.subr.mxu0 0.0
        %3199 = vmatpush1.msra.mxu0 0.0
        %3200 = vmatprep.subr.mxu0 0.0
        %3201 = vmatpush1.msra.mxu0 0.0
        %3202 = vmatprep.subr.mxu0 0.0
        %3203 = vmatpush1.msra.mxu0 0.0
        %3204 = vmatprep.subr.mxu0 0.0
        %3205 = vmatpush1.msra.mxu0 0.0
        %3206 = vmatprep.subr.mxu0 0.0
        %3207 = vmatpush1.msra.mxu0 0.0
        %3208 = vmatprep.subr.mxu0 0.0
        %3209 = vmatpush1.msra.mxu0 0.0
        %3210 = vmatprep.mubr.f32.mxu0 0.0
        %3211 = vmatmul.mubr.f32.gmra.mrb[0].mxu0 %v3144
        %v3212 = vpop.f32.mrb[0].mxu0
        %v3213 = vadd.f32 0.0, %v3212
        %v3214 = vpop.f32.mrb[0].mxu0
        %3215 = vmatprep.mubr.f32.mxu0 0.0
        %3216 = vmatmul.mubr.f32.gmra.mrb[0].mxu0 %v3145
        %v3217 = vpop.f32.mrb[0].mxu0
        %v3218 = vadd.f32 0.0, %v3217
        %v3219 = vpop.f32.mrb[0].mxu0
        %3220 = vdwg.mxu0
        %s3221 = scalar_lea.vmem [#allocation11], 384
        %v3222 = vld [vmem:[%s3221] sm:$0xff]
        %v3223 = vld [vmem:[%s3221 + $0x8] sm:$0xff]
        %v3224 = vld [vmem:[%s3221 + $0x10] sm:$0xff]
        %v3225 = vld [vmem:[%s3221 + $0x18] sm:$0xff]
        %v3226 = vld [vmem:[%s3221 + $0x20] sm:$0xff]
        %v3227 = vld [vmem:[%s3221 + $0x28] sm:$0xff]
        %v3228 = vld [vmem:[%s3221 + $0x30] sm:$0xff]
        %v3229 = vld [vmem:[%s3221 + $0x38] sm:$0xff]
        %v3230 = vld [vmem:[%s3221 + $0x40] sm:$0xff]
        %v3231 = vld [vmem:[%s3221 + $0x48] sm:$0xff]
        %v3232 = vld [vmem:[%s3221 + $0x50] sm:$0xff]
        %v3233 = vld [vmem:[%s3221 + $0x58] sm:$0xff]
        %v3234 = vld [vmem:[%s3221 + $0x60] sm:$0xff]
        %v3235 = vld [vmem:[%s3221 + $0x68] sm:$0xff]
        %v3236 = vld [vmem:[%s3221 + $0x70] sm:$0xff]
        %v3237 = vld [vmem:[%s3221 + $0x78] sm:$0xff]
        %3238 = vmatprep.subr.mxu0 0.0
        %3239 = vmatpush1.msra.mxu0 %v3222
        %3240 = vmatprep.subr.mxu0 0.0
        %3241 = vmatpush1.msra.mxu0 %v3223
        %3242 = vmatprep.subr.mxu0 0.0
        %3243 = vmatpush1.msra.mxu0 %v3224
        %3244 = vmatprep.subr.mxu0 0.0
        %3245 = vmatpush1.msra.mxu0 %v3225
        %3246 = vmatprep.subr.mxu0 0.0
        %3247 = vmatpush1.msra.mxu0 %v3226
        %3248 = vmatprep.subr.mxu0 0.0
        %3249 = vmatpush1.msra.mxu0 %v3227
        %3250 = vmatprep.subr.mxu0 0.0
        %3251 = vmatpush1.msra.mxu0 %v3228
        %3252 = vmatprep.subr.mxu0 0.0
        %3253 = vmatpush1.msra.mxu0 %v3229
        %3254 = vmatprep.subr.mxu0 0.0
        %3255 = vmatpush1.msra.mxu0 %v3230
        %3256 = vmatprep.subr.mxu0 0.0
        %3257 = vmatpush1.msra.mxu0 %v3231
        %3258 = vmatprep.subr.mxu0 0.0
        %3259 = vmatpush1.msra.mxu0 %v3232
        %3260 = vmatprep.subr.mxu0 0.0
        %3261 = vmatpush1.msra.mxu0 %v3233
        %3262 = vmatprep.subr.mxu0 0.0
        %3263 = vmatpush1.msra.mxu0 %v3234
        %3264 = vmatprep.subr.mxu0 0.0
        %3265 = vmatpush1.msra.mxu0 %v3235
        %3266 = vmatprep.subr.mxu0 0.0
        %3267 = vmatpush1.msra.mxu0 %v3236
        %3268 = vmatprep.subr.mxu0 0.0
        %3269 = vmatpush1.msra.mxu0 %v3237
        %3270 = vmatprep.subr.mxu0 0.0
        %3271 = vmatpush1.msra.mxu0 0.0
        %3272 = vmatprep.subr.mxu0 0.0
        %3273 = vmatpush1.msra.mxu0 0.0
        %3274 = vmatprep.subr.mxu0 0.0
        %3275 = vmatpush1.msra.mxu0 0.0
        %3276 = vmatprep.subr.mxu0 0.0
        %3277 = vmatpush1.msra.mxu0 0.0
        %3278 = vmatprep.subr.mxu0 0.0
        %3279 = vmatpush1.msra.mxu0 0.0
        %3280 = vmatprep.subr.mxu0 0.0
        %3281 = vmatpush1.msra.mxu0 0.0
        %3282 = vmatprep.subr.mxu0 0.0
        %3283 = vmatpush1.msra.mxu0 0.0
        %3284 = vmatprep.subr.mxu0 0.0
        %3285 = vmatpush1.msra.mxu0 0.0
        %3286 = vmatprep.subr.mxu0 0.0
        %3287 = vmatpush1.msra.mxu0 0.0
        %3288 = vmatprep.subr.mxu0 0.0
        %3289 = vmatpush1.msra.mxu0 0.0
        %3290 = vmatprep.subr.mxu0 0.0
        %3291 = vmatpush1.msra.mxu0 0.0
        %3292 = vmatprep.subr.mxu0 0.0
        %3293 = vmatpush1.msra.mxu0 0.0
        %3294 = vmatprep.subr.mxu0 0.0
        %3295 = vmatpush1.msra.mxu0 0.0
        %3296 = vmatprep.subr.mxu0 0.0
        %3297 = vmatpush1.msra.mxu0 0.0
        %3298 = vmatprep.subr.mxu0 0.0
        %3299 = vmatpush1.msra.mxu0 0.0
        %3300 = vmatprep.subr.mxu0 0.0
        %3301 = vmatpush1.msra.mxu0 0.0
        %3302 = vmatprep.mubr.f32.mxu0 0.0
        %3303 = vmatmul.mubr.f32.gmra.mrb[0].mxu0 %v3213
        %v3304 = vpop.f32.mrb[0].mxu0
        %v3305 = vadd.f32 0.0, %v3304
        %v3306 = vpop.f32.mrb[0].mxu0
        %3307 = vmatprep.mubr.f32.mxu0 0.0
        %3308 = vmatmul.mubr.f32.gmra.mrb[0].mxu0 %v3218
        %v3309 = vpop.f32.mrb[0].mxu0
        %v3310 = vadd.f32 0.0, %v3309
        %v3311 = vpop.f32.mrb[0].mxu0
        %3312 = vdwg.mxu0
        %v3313 = vadd.f32 %v2611, %v3305
        %v3314 = vadd.f32 %v2612, %v3310
        %v3315 = vld [vmem:[%s9] sm:$0x1]
        %v3317 = vlaneseq
        %v3318 = vshrl.u32 %v3317, 7
        %v3319 = vsub.s32 0, %v3318
        %v3320 = vrot.slane %v3315, %v3319
        %v3322 = vadd.f32 %v3313, %v3320
        %v3323 = vadd.f32 %v3314, %v3320
        %3324 = vst [vmem:[%s493] sm:$0xff] %v3322
        %3325 = vst [vmem:[%s493 + $0x8] sm:$0xff] %v3323
        %s3326 = sand.u32 %s276, 1
        %s3327 = scalar_lea.sflag [#allocation4], %s3326
        %s3328 = sand.u32 %s276, 1
        %s3329 = smul.addr %s3328, 16
        %s3330 = scalar_lea.vmem [#allocation13], %s3329
        // Predicated region
        $region85: #{tpu_custom_call.1} parent=59 // pred_check
          %p3331 = pneg %p286
        $region86: #{tpu_custom_call.1} parent=59 // pred_check_branch
          %3333 = sbr.rel (%p3331) target = $region88
        $region87: #{tpu_custom_call.1} parent=59 // pred_region
          %s3334 = smul.u32 2, %s37
          %s3336 = ssub.s32 256, 256
          %3337 = vsyncadd %s3327, %s3336
          %s3338 = smul.addr %s36, 2
          %s3339 = sadd.s32 %s3334, %s3338
          %s3340 = smul.addr %s3339, 128
          %s3341 = scalar_lea.hbm %s10, %s3340
          %s3342 = sshll.u32 %s3330, 4
          %s3343 = int_to_ptr.vmem [resolvable:$true] %s3342
          %3348 = dma.vmem_to_hbm [thread:$0]  %s3343, 256, %s3341, %s3327, 128, 128, 8
        $region88: #{tpu_custom_call.1} parent=59 // pred_fallthru
          _
      $region60: #{tpu_custom_call.1} parent=5 // pred_fallthru
        _
      %p3349 = scmp.le.s32.totalorder 2, %s27
      // Predicated region
      $region89: #{tpu_custom_call.1} parent=5 // pred_check
        %p3350 = pneg %p3349
      $region90: #{tpu_custom_call.1} parent=5 // pred_check_branch
        %3352 = sbr.rel (%p3350) target = $region92
      $region91: #{tpu_custom_call.1} parent=5 // pred_region
        %s3353 = ssub.s32 %s27, 2
        // Predicated region
        $region93: #{tpu_custom_call.1} parent=91 // pred_check
          %p3354 = pneg %p292
        $region94: #{tpu_custom_call.1} parent=91 // pred_check_branch
          %3356 = sbr.rel (%p3354) target = $region96
        $region95: #{tpu_custom_call.1} parent=91 // pred_region
          %s3357 = sand.u32 %s277, 1
          %s3358 = scalar_lea.sflag [#allocation4], %s3357
          %s3359 = sand.u32 %s277, 1
          %s3360 = smul.addr %s3359, 16
          %s3361 = scalar_lea.vmem [#allocation13], %s3360
          %3362 = dma.done %s3358, 256
        $region96: #{tpu_custom_call.1} parent=91 // pred_fallthru
          _
      $region92: #{tpu_custom_call.1} parent=5 // pred_fallthru
        _
    $region6: #{tpu_custom_call.1} parent=1 // loop_footer
      %s31 = sadd.s32 1, %s27
    $region7: #{tpu_custom_call.1} parent=1 // loop_footer_branch
      %26 = sbr.rel target = $region3
    $region8: #{tpu_custom_call.1} parent=1 // loop_exit
      _
    %3363 = vsyncpa [#allocation3], 1
    %s3364 = scalar_lea.sflag [#allocation3], 1
    %3365 = vsyncpa %s3364, 1
    %3366 = vsyncpa [#allocation6], 1
    %s3367 = scalar_lea.sflag [#allocation6], 1
    %3368 = vsyncpa %s3367, 1
    %3369 = vsyncpa [#allocation9], 1
    %3370 = vsyncpa [#allocation12], 1
    %3371 = vsyncpa [#allocation4], 1
    %s3372 = scalar_lea.sflag [#allocation4], 1
    %3373 = vsyncpa %s3372, 1

</llo_original>
